<compile_context>
chip_gen: v5e
topology: v5e:2x2
jax: 0.10.0
libtpu: 0.0.40
codegen_flags: <defaults>
</compile_context>

<pallas_src>
import functools

import jax
import jax.numpy as jnp
from jax.experimental import pallas as pl
from jax.experimental.pallas import tpu as pltpu


_PARAM_ORDER = (
    "wq1", "bq1", "wk1", "bk1", "wv1", "bv1", "wo1", "bo1",
    "wq2", "bq2", "wk2", "bk2", "wv2", "bv2", "wo2", "bo2",
    "wf1", "bf1", "wf2", "bf2",
    "g1", "be1", "g2", "be2", "g3", "be3",
)


# ---------------------------------------------------------------------------
# Pallas kernel: one (batch element, layer) step of the fused decoder stack.
# The activation for this batch element lives in out_ref across the layer axis.
# ---------------------------------------------------------------------------
def decoder_stack_kernel(
    x_ref, y_ref,
    # self-attention (mha1): per-head-major weights, bf16
    wq1_ref, bq1_ref, wk1_ref, bk1_ref, wv1_ref, bv1_ref, wo1_ref, bo1_ref,
    # cross-attention (mha2)
    wq2_ref, bq2_ref, wk2_ref, bk2_ref, wv2_ref, bv2_ref, wo2_ref, bo2_ref,
    # feed-forward
    wf1_ref, bf1_ref, wf2_ref, bf2_ref,
    # layernorm affine params, shape (S, D) each, f32
    g1_ref, be1_ref, g2_ref, be2_ref, g3_ref, be3_ref,
    out_ref,
    *, num_heads,
):
    layer = pl.program_id(1)

    # Initialize the resident activation from the input at the first layer.
    @pl.when(layer == 0)
    def _():
        out_ref[...] = x_ref[...]

    x = out_ref[0]          # (S, D) f32 — resident activation for this batch
    y = y_ref[0]            # (S, D) f32 — encoder output (constant over layers)

    def mha(q_in, kv_in, wq, bq, wk, bk, wv, bv, wo, bo):
        # wq/wk: (H, D, d_k) bf16, wv: (H, D, d_v) bf16, wo: (H, d_v, D) bf16
        # bq/bk: (H, 1, d_k) f32, bv: (H, 1, d_v) f32, bo: (1, D) f32
        # 1/sqrt(d_k) is already folded into wq/bq.
        H = num_heads
        qb = jnp.broadcast_to(q_in.astype(jnp.bfloat16)[None], (H,) + q_in.shape)
        kb = jnp.broadcast_to(kv_in.astype(jnp.bfloat16)[None], (H,) + kv_in.shape)

        q = jnp.einsum("hsd,hdk->hsk", qb, wq,
                       preferred_element_type=jnp.float32) + bq        # (H,S,dk)
        k = jnp.einsum("hsd,hdk->hsk", kb, wk,
                       preferred_element_type=jnp.float32) + bk        # (H,S,dk)
        v = jnp.einsum("hsd,hdk->hsk", kb, wv,
                       preferred_element_type=jnp.float32) + bv        # (H,S,dv)

        s = jnp.einsum("hqd,hkd->hqk", q.astype(jnp.bfloat16), k.astype(jnp.bfloat16),
                       preferred_element_type=jnp.float32)             # (H,S,S)
        s = s - jnp.max(s, axis=-1, keepdims=True)
        e = jnp.exp(s)
        p = e * pl.reciprocal(jnp.sum(e, axis=-1, keepdims=True), approx=True)

        ctx = jnp.einsum("hqk,hkd->hqd", p.astype(jnp.bfloat16), v.astype(jnp.bfloat16),
                         preferred_element_type=jnp.float32)           # (H,S,dv)
        o = jnp.einsum("hsd,hdm->hsm", ctx.astype(jnp.bfloat16), wo,
                       preferred_element_type=jnp.float32)             # (H,S,D)
        # Sum over heads == concat(heads) @ wo (wo pre-split per head).
        return jnp.sum(o, axis=0) + bo                                 # (S, D)

    def layernorm(z, g, b, eps=1e-6):
        # nn.LayerNorm([S, D]): normalize jointly over both axes (biased var).
        mu = jnp.mean(z)
        var = jnp.mean((z - mu) * (z - mu))
        return (z - mu) * jax.lax.rsqrt(var + eps) * g + b

    # --- sub-layer 1: self-attention (mask=None) + add & norm ---
    h1 = mha(x, x, wq1_ref[0], bq1_ref[0], wk1_ref[0], bk1_ref[0],
             wv1_ref[0], bv1_ref[0], wo1_ref[0], bo1_ref[0])
    x1 = layernorm(x + h1, g1_ref[0], be1_ref[0])

    # --- sub-layer 2: cross-attention over encoder output y ---
    h2 = mha(x1, y, wq2_ref[0], bq2_ref[0], wk2_ref[0], bk2_ref[0],
             wv2_ref[0], bv2_ref[0], wo2_ref[0], bo2_ref[0])
    x2 = layernorm(x1 + h2, g2_ref[0], be2_ref[0])

    # --- sub-layer 3: position-wise feed-forward ---
    ff = jnp.dot(x2.astype(jnp.bfloat16), wf1_ref[0],
                 preferred_element_type=jnp.float32) + bf1_ref[0]
    ff = jnp.maximum(ff, 0.0)
    ff = jnp.dot(ff.astype(jnp.bfloat16), wf2_ref[0],
                 preferred_element_type=jnp.float32) + bf2_ref[0]
    x3 = layernorm(x2 + ff, g3_ref[0], be3_ref[0])

    out_ref[0] = x3          # stays in VMEM; written back to HBM after last layer


# ---------------------------------------------------------------------------
# Parameter prep: PyTorch-layout f32 params -> head-major, scale-folded,
# bf16 matmul weights, stacked along a leading layer axis.
# ---------------------------------------------------------------------------
def prepare_stacked_params(layer_params, *, num_heads, d_k, d_v):
    H = num_heads
    q_scale = 1.0 / (float(d_k) ** 0.5)
    per_layer = []
    for p in layer_params:
        lp = {}
        for tag in ("1", "2"):
            wq, bq = p[f"wq{tag}"], p[f"bq{tag}"]
            wk, bk = p[f"wk{tag}"], p[f"bk{tag}"]
            wv, bv = p[f"wv{tag}"], p[f"bv{tag}"]
            wo, bo = p[f"wo{tag}"], p[f"bo{tag}"]
            D = wq.shape[0]
            # (D, H*d) -> (H, D, d); fold 1/sqrt(d_k) into the Q projection.
            lp[f"wq{tag}"] = (jnp.transpose(wq.reshape(D, H, d_k), (1, 0, 2))
                              * q_scale).astype(jnp.bfloat16)
            lp[f"bq{tag}"] = (bq.reshape(H, d_k) * q_scale)[:, None, :]
            lp[f"wk{tag}"] = jnp.transpose(wk.reshape(D, H, d_k),
                                           (1, 0, 2)).astype(jnp.bfloat16)
            lp[f"bk{tag}"] = bk.reshape(H, d_k)[:, None, :]
            lp[f"wv{tag}"] = jnp.transpose(wv.reshape(D, H, d_v),
                                           (1, 0, 2)).astype(jnp.bfloat16)
            lp[f"bv{tag}"] = bv.reshape(H, d_v)[:, None, :]
            lp[f"wo{tag}"] = wo.reshape(H, d_v, D).astype(jnp.bfloat16)
            lp[f"bo{tag}"] = bo                              # (1, D) f32
        lp["wf1"] = p["wf1"].astype(jnp.bfloat16); lp["bf1"] = p["bf1"]
        lp["wf2"] = p["wf2"].astype(jnp.bfloat16); lp["bf2"] = p["bf2"]
        for i in (1, 2, 3):
            lp[f"g{i}"] = p[f"g{i}"]
            lp[f"be{i}"] = p[f"be{i}"]
        per_layer.append(lp)
    return {name: jnp.stack([lp[name] for lp in per_layer], axis=0)
            for name in _PARAM_ORDER}


# ---------------------------------------------------------------------------
# Wrapper: whole decoder stack in ONE pallas_call. Grid = (batch, layer).
# ---------------------------------------------------------------------------
def decoder_forward(x, y, stacked, *, num_heads, d_k, d_v, d_ff):
    # Decoder.forward: x = dropout(x) is identity in eval mode.
    B, S, D = x.shape
    L = stacked["wq1"].shape[0]
    H = num_heads
    weights = [stacked[name] for name in _PARAM_ORDER]

    def stacked_spec(a):
        nd = a.ndim
        return pl.BlockSpec((1,) + tuple(a.shape[1:]),
                            lambda b, l, _n=nd: (l,) + (0,) * (_n - 1))

    act_spec = pl.BlockSpec((1, S, D), lambda b, l: (b, 0, 0))
    in_specs = [act_spec, act_spec] + [stacked_spec(w) for w in weights]

    kernel = functools.partial(decoder_stack_kernel, num_heads=num_heads)

    flops_mha = (2 * 3 * S * D * H * d_k        # Q/K/V projections
                 + 2 * H * S * S * d_k          # scores
                 + 2 * H * S * S * d_v          # p @ V
                 + 2 * S * H * d_v * D)         # output projection
    flops_ffn = 2 * S * D * d_ff + 2 * S * d_ff * D
    flops = int(B * L * (2 * flops_mha + flops_ffn))
    bytes_accessed = int(sum(int(w.size) * w.dtype.itemsize for w in weights)
                         + 3 * x.size * 4)      # x in, y in, out
    cost = pl.CostEstimate(flops=flops,
                           transcendentals=int(B * L * 2 * H * S * S),
                           bytes_accessed=bytes_accessed)

    return pl.pallas_call(
        kernel,
        out_shape=jax.ShapeDtypeStruct((B, S, D), jnp.float32),
        grid_spec=pltpu.PrefetchScalarGridSpec(
            num_scalar_prefetch=0,
            grid=(B, L),
            in_specs=in_specs,
            out_specs=act_spec,
        ),
        compiler_params=pltpu.CompilerParams(
            dimension_semantics=("parallel", "arbitrary")),
        cost_estimate=cost,
    )(x, y, *weights)


# ---------------------------------------------------------------------------
# Deterministic parameter init (synthetic, PyTorch-Linear-style uniform).
# ---------------------------------------------------------------------------
def _linear(key, fan_in, fan_out):
    kw, kb = jax.random.split(key)
    bound = 1.0 / (fan_in ** 0.5)
    w = jax.random.uniform(kw, (fan_in, fan_out), jnp.float32, -bound, bound)
    b = jax.random.uniform(kb, (1, fan_out), jnp.float32, -bound, bound)
    return w, b


def make_layer_params(key, S, D, H, d_k, d_v, d_ff):
    keys = jax.random.split(key, 10)
    p = {}
    for tag, (k0, k1, k2, k3) in (("1", keys[0:4]), ("2", keys[4:8])):
        p[f"wq{tag}"], p[f"bq{tag}"] = _linear(k0, D, H * d_k)
        p[f"wk{tag}"], p[f"bk{tag}"] = _linear(k1, D, H * d_k)
        p[f"wv{tag}"], p[f"bv{tag}"] = _linear(k2, D, H * d_v)
        p[f"wo{tag}"], p[f"bo{tag}"] = _linear(k3, H * d_v, D)
    p["wf1"], p["bf1"] = _linear(keys[8], D, d_ff)
    p["wf2"], p["bf2"] = _linear(keys[9], d_ff, D)
    for i in (1, 2, 3):
        p[f"g{i}"] = jnp.ones((S, D), jnp.float32)
        p[f"be{i}"] = jnp.zeros((S, D), jnp.float32)
    return p


# ---------------------------------------------------------------------------
# Pure-JAX f32 reference (mirrors the PyTorch forward exactly) for validation.
# ---------------------------------------------------------------------------
def _mha_ref(q_in, kv_in, wq, bq, wk, bk, wv, bv, wo, bo, H, d_k, d_v):
    B, S, _ = q_in.shape
    Q = (q_in @ wq + bq).reshape(B, S, H, d_k)
    K = (kv_in @ wk + bk).reshape(B, S, H, d_k)
    V = (kv_in @ wv + bv).reshape(B, S, H, d_v)
    scores = jnp.einsum("bqhd,bkhd->bhqk", Q, K) / (d_k ** 0.5)
    p = jax.nn.softmax(scores, axis=-1)
    out = jnp.einsum("bhqk,bkhd->bqhd", p, V).reshape(B, S, H * d_v)
    return out @ wo + bo


def _ln_ref(z, g, b, eps=1e-6):
    mu = jnp.mean(z, axis=(1, 2), keepdims=True)
    var = jnp.mean((z - mu) ** 2, axis=(1, 2), keepdims=True)
    return (z - mu) / jnp.sqrt(var + eps) * g + b


def decoder_forward_ref(x, y, layer_params, *, num_heads, d_k, d_v):
    for p in layer_params:
        h1 = _mha_ref(x, x, p["wq1"], p["bq1"], p["wk1"], p["bk1"],
                      p["wv1"], p["bv1"], p["wo1"], p["bo1"], num_heads, d_k, d_v)
        x = _ln_ref(x + h1, p["g1"], p["be1"])
        h2 = _mha_ref(x, y, p["wq2"], p["bq2"], p["wk2"], p["bk2"],
                      p["wv2"], p["bv2"], p["wo2"], p["bo2"], num_heads, d_k, d_v)
        x = _ln_ref(x + h2, p["g2"], p["be2"])
        ff = jnp.maximum(x @ p["wf1"] + p["bf1"], 0.0) @ p["wf2"] + p["bf2"]
        x = _ln_ref(x + ff, p["g3"], p["be3"])
    return x


# ---------------------------------------------------------------------------
if __name__ == "__main__":
    # Small shapes consistent with the module's forward.
    B, S, D = 2, 8, 32          # batch, input_seq_len, d_model
    H, d_k, d_v = 4, 8, 8       # num_heads, d_k, d_v
    d_ff = 64
    num_layers = 2

    root = jax.random.PRNGKey(0)
    kx, ky, kp = jax.random.split(root, 3)
    x = jax.random.normal(kx, (B, S, D), jnp.float32)
    y = jax.random.normal(ky, (B, S, D), jnp.float32)

    layer_keys = jax.random.split(kp, num_layers)
    layer_params = [make_layer_params(k, S, D, H, d_k, d_v, d_ff)
                    for k in layer_keys]
    stacked = prepare_stacked_params(layer_params, num_heads=H, d_k=d_k, d_v=d_v)

    out = decoder_forward(x, y, stacked, num_heads=H, d_k=d_k, d_v=d_v, d_ff=d_ff)
    out = jax.block_until_ready(out)

    ref = decoder_forward_ref(x, y, layer_params, num_heads=H, d_k=d_k, d_v=d_v)
    ref = jax.block_until_ready(ref)

    assert out.shape == (B, S, D)
    max_err = float(jnp.max(jnp.abs(out - ref)))
    # Kernel runs matmuls in bf16 (f32 accumulation) per the perf review, so
    # compare against the f32 reference with a bf16-appropriate tolerance.
    assert jnp.allclose(out, ref, atol=5e-2, rtol=5e-2), f"max abs err = {max_err}"

    print("KERNEL_OK")
</pallas_src>

<mosaic_0001>
module attributes {stable_mosaic.version = 11 : i64} {
  func.func @decoder_stack_kernel(%arg0: i32, %arg1: i32, %arg2: memref<1x8x32xf32, #tpu.memory_space<vmem>>, %arg3: memref<1x8x32xf32, #tpu.memory_space<vmem>>, %arg4: memref<1x4x32x8xbf16, #tpu.memory_space<vmem>>, %arg5: memref<1x4x1x8xf32, #tpu.memory_space<vmem>>, %arg6: memref<1x4x32x8xbf16, #tpu.memory_space<vmem>>, %arg7: memref<1x4x1x8xf32, #tpu.memory_space<vmem>>, %arg8: memref<1x4x32x8xbf16, #tpu.memory_space<vmem>>, %arg9: memref<1x4x1x8xf32, #tpu.memory_space<vmem>>, %arg10: memref<1x4x8x32xbf16, #tpu.memory_space<vmem>>, %arg11: memref<1x1x32xf32, #tpu.memory_space<vmem>>, %arg12: memref<1x4x32x8xbf16, #tpu.memory_space<vmem>>, %arg13: memref<1x4x1x8xf32, #tpu.memory_space<vmem>>, %arg14: memref<1x4x32x8xbf16, #tpu.memory_space<vmem>>, %arg15: memref<1x4x1x8xf32, #tpu.memory_space<vmem>>, %arg16: memref<1x4x32x8xbf16, #tpu.memory_space<vmem>>, %arg17: memref<1x4x1x8xf32, #tpu.memory_space<vmem>>, %arg18: memref<1x4x8x32xbf16, #tpu.memory_space<vmem>>, %arg19: memref<1x1x32xf32, #tpu.memory_space<vmem>>, %arg20: memref<1x32x64xbf16, #tpu.memory_space<vmem>>, %arg21: memref<1x1x64xf32, #tpu.memory_space<vmem>>, %arg22: memref<1x64x32xbf16, #tpu.memory_space<vmem>>, %arg23: memref<1x1x32xf32, #tpu.memory_space<vmem>>, %arg24: memref<1x8x32xf32, #tpu.memory_space<vmem>>, %arg25: memref<1x8x32xf32, #tpu.memory_space<vmem>>, %arg26: memref<1x8x32xf32, #tpu.memory_space<vmem>>, %arg27: memref<1x8x32xf32, #tpu.memory_space<vmem>>, %arg28: memref<1x8x32xf32, #tpu.memory_space<vmem>>, %arg29: memref<1x8x32xf32, #tpu.memory_space<vmem>>, %arg30: memref<1x8x32xf32, #tpu.memory_space<vmem>>) attributes {dimension_semantics = [#tpu.dimension_semantics<parallel>, #tpu.dimension_semantics<arbitrary>], iteration_bounds = array<i64: 2, 2>, scalar_prefetch = 0 : i64, scratch_operands = 0 : i64, tpu.core_type = #tpu.core_type<tc>, window_params = [{transform_indices = @transform_0, window_bounds = array<i64: 1, 8, 32>}, {transform_indices = @transform_1, window_bounds = array<i64: 1, 8, 32>}, {transform_indices = @transform_2, window_bounds = array<i64: 1, 4, 32, 8>}, {transform_indices = @transform_3, window_bounds = array<i64: 1, 4, 1, 8>}, {transform_indices = @transform_4, window_bounds = array<i64: 1, 4, 32, 8>}, {transform_indices = @transform_5, window_bounds = array<i64: 1, 4, 1, 8>}, {transform_indices = @transform_6, window_bounds = array<i64: 1, 4, 32, 8>}, {transform_indices = @transform_7, window_bounds = array<i64: 1, 4, 1, 8>}, {transform_indices = @transform_8, window_bounds = array<i64: 1, 4, 8, 32>}, {transform_indices = @transform_9, window_bounds = array<i64: 1, 1, 32>}, {transform_indices = @transform_10, window_bounds = array<i64: 1, 4, 32, 8>}, {transform_indices = @transform_11, window_bounds = array<i64: 1, 4, 1, 8>}, {transform_indices = @transform_12, window_bounds = array<i64: 1, 4, 32, 8>}, {transform_indices = @transform_13, window_bounds = array<i64: 1, 4, 1, 8>}, {transform_indices = @transform_14, window_bounds = array<i64: 1, 4, 32, 8>}, {transform_indices = @transform_15, window_bounds = array<i64: 1, 4, 1, 8>}, {transform_indices = @transform_16, window_bounds = array<i64: 1, 4, 8, 32>}, {transform_indices = @transform_17, window_bounds = array<i64: 1, 1, 32>}, {transform_indices = @transform_18, window_bounds = array<i64: 1, 32, 64>}, {transform_indices = @transform_19, window_bounds = array<i64: 1, 1, 64>}, {transform_indices = @transform_20, window_bounds = array<i64: 1, 64, 32>}, {transform_indices = @transform_21, window_bounds = array<i64: 1, 1, 32>}, {transform_indices = @transform_22, window_bounds = array<i64: 1, 8, 32>}, {transform_indices = @transform_23, window_bounds = array<i64: 1, 8, 32>}, {transform_indices = @transform_24, window_bounds = array<i64: 1, 8, 32>}, {transform_indices = @transform_25, window_bounds = array<i64: 1, 8, 32>}, {transform_indices = @transform_26, window_bounds = array<i64: 1, 8, 32>}, {transform_indices = @transform_27, window_bounds = array<i64: 1, 8, 32>}, {transform_indices = @transform_28, window_bounds = array<i64: 1, 8, 32>}]} {
    %c0_i32 = arith.constant 0 : i32
    %0 = arith.cmpi eq, %arg1, %c0_i32 : i32
    %1 = arith.extui %0 : i1 to i32
    %c0_i32_0 = arith.constant 0 : i32
    %2 = arith.cmpi ne, %1, %c0_i32_0 : i32
    scf.if %2 {
      %c0_136 = arith.constant 0 : index
      %c0_137 = arith.constant 0 : index
      %c0_138 = arith.constant 0 : index
      %220 = vector.load %arg2[%c0_136, %c0_137, %c0_138] : memref<1x8x32xf32, #tpu.memory_space<vmem>>, vector<1x8x32xf32>
      %c0_139 = arith.constant 0 : index
      %c0_140 = arith.constant 0 : index
      %c0_141 = arith.constant 0 : index
      %221 = vector.load %arg30[%c0_139, %c0_140, %c0_141] : memref<1x8x32xf32, #tpu.memory_space<vmem>>, vector<1x8x32xf32>
      tpu.vector_store %arg30[%c0_139, %c0_140, %c0_141], %220 {strides = array<i32>} : memref<1x8x32xf32, #tpu.memory_space<vmem>>, vector<1x8x32xf32>,
    } else {
    }
    %c0 = arith.constant 0 : index
    %c0_1 = arith.constant 0 : index
    %c0_2 = arith.constant 0 : index
    %3 = vector.load %arg30[%c0, %c0_1, %c0_2] : memref<1x8x32xf32, #tpu.memory_space<vmem>>, vector<1x8x32xf32>
    %4 = vector.shape_cast %3 : vector<1x8x32xf32> to vector<8x32xf32>
    %c0_3 = arith.constant 0 : index
    %c0_4 = arith.constant 0 : index
    %c0_5 = arith.constant 0 : index
    %5 = vector.load %arg3[%c0_3, %c0_4, %c0_5] : memref<1x8x32xf32, #tpu.memory_space<vmem>>, vector<1x8x32xf32>
    %6 = vector.shape_cast %5 : vector<1x8x32xf32> to vector<8x32xf32>
    %c0_6 = arith.constant 0 : index
    %c0_7 = arith.constant 0 : index
    %c0_8 = arith.constant 0 : index
    %c0_9 = arith.constant 0 : index
    %7 = vector.load %arg4[%c0_6, %c0_7, %c0_8, %c0_9] : memref<1x4x32x8xbf16, #tpu.memory_space<vmem>>, vector<1x4x32x8xbf16>
    %8 = vector.shape_cast %7 : vector<1x4x32x8xbf16> to vector<4x32x8xbf16>
    %c0_10 = arith.constant 0 : index
    %c0_11 = arith.constant 0 : index
    %c0_12 = arith.constant 0 : index
    %c0_13 = arith.constant 0 : index
    %9 = vector.load %arg5[%c0_10, %c0_11, %c0_12, %c0_13] : memref<1x4x1x8xf32, #tpu.memory_space<vmem>>, vector<1x4x1x8xf32>
    %10 = vector.shape_cast %9 : vector<1x4x1x8xf32> to vector<4x1x8xf32>
    %c0_14 = arith.constant 0 : index
    %c0_15 = arith.constant 0 : index
    %c0_16 = arith.constant 0 : index
    %c0_17 = arith.constant 0 : index
    %11 = vector.load %arg6[%c0_14, %c0_15, %c0_16, %c0_17] : memref<1x4x32x8xbf16, #tpu.memory_space<vmem>>, vector<1x4x32x8xbf16>
    %12 = vector.shape_cast %11 : vector<1x4x32x8xbf16> to vector<4x32x8xbf16>
    %c0_18 = arith.constant 0 : index
    %c0_19 = arith.constant 0 : index
    %c0_20 = arith.constant 0 : index
    %c0_21 = arith.constant 0 : index
    %13 = vector.load %arg7[%c0_18, %c0_19, %c0_20, %c0_21] : memref<1x4x1x8xf32, #tpu.memory_space<vmem>>, vector<1x4x1x8xf32>
    %14 = vector.shape_cast %13 : vector<1x4x1x8xf32> to vector<4x1x8xf32>
    %c0_22 = arith.constant 0 : index
    %c0_23 = arith.constant 0 : index
    %c0_24 = arith.constant 0 : index
    %c0_25 = arith.constant 0 : index
    %15 = vector.load %arg8[%c0_22, %c0_23, %c0_24, %c0_25] : memref<1x4x32x8xbf16, #tpu.memory_space<vmem>>, vector<1x4x32x8xbf16>
    %16 = vector.shape_cast %15 : vector<1x4x32x8xbf16> to vector<4x32x8xbf16>
    %c0_26 = arith.constant 0 : index
    %c0_27 = arith.constant 0 : index
    %c0_28 = arith.constant 0 : index
    %c0_29 = arith.constant 0 : index
    %17 = vector.load %arg9[%c0_26, %c0_27, %c0_28, %c0_29] : memref<1x4x1x8xf32, #tpu.memory_space<vmem>>, vector<1x4x1x8xf32>
    %18 = vector.shape_cast %17 : vector<1x4x1x8xf32> to vector<4x1x8xf32>
    %c0_30 = arith.constant 0 : index
    %c0_31 = arith.constant 0 : index
    %c0_32 = arith.constant 0 : index
    %c0_33 = arith.constant 0 : index
    %19 = vector.load %arg10[%c0_30, %c0_31, %c0_32, %c0_33] : memref<1x4x8x32xbf16, #tpu.memory_space<vmem>>, vector<1x4x8x32xbf16>
    %20 = vector.shape_cast %19 : vector<1x4x8x32xbf16> to vector<4x8x32xbf16>
    %c0_34 = arith.constant 0 : index
    %c0_35 = arith.constant 0 : index
    %c0_36 = arith.constant 0 : index
    %21 = vector.load %arg11[%c0_34, %c0_35, %c0_36] : memref<1x1x32xf32, #tpu.memory_space<vmem>>, vector<1x1x32xf32>
    %22 = vector.shape_cast %21 : vector<1x1x32xf32> to vector<1x32xf32>
    %23 = arith.truncf %4 : vector<8x32xf32> to vector<8x32xbf16>
    %24 = vector.shape_cast %23 : vector<8x32xbf16> to vector<1x8x32xbf16>
    %25 = vector.shape_cast %24 : vector<1x8x32xbf16> to vector<1x8x32xbf16>
    %26 = vector.broadcast %25 : vector<1x8x32xbf16> to vector<4x8x32xbf16>
    %27 = arith.truncf %4 : vector<8x32xf32> to vector<8x32xbf16>
    %28 = vector.shape_cast %27 : vector<8x32xbf16> to vector<1x8x32xbf16>
    %29 = vector.shape_cast %28 : vector<1x8x32xbf16> to vector<1x8x32xbf16>
    %30 = vector.broadcast %29 : vector<1x8x32xbf16> to vector<4x8x32xbf16>
    "tpu.trace_start"() <{level = 10 : i32, message = "hsd,hdk->hsk"}> : () -> ()
    %cst = arith.constant dense<0.000000e+00> : vector<4x8x8xf32>
    %31 = tpu.matmul %26, %8, %cst {dimension_numbers = #tpu.dot_dimension_numbers<[2], [1], [1], [2], [0, 0, 0, 1, 1, 2], [0], [0]>} : vector<4x8x32xbf16>, vector<4x32x8xbf16>, vector<4x8x8xf32> -> vector<4x8x8xf32>
    "tpu.trace_stop"() : () -> ()
    %32 = vector.broadcast %10 : vector<4x1x8xf32> to vector<4x8x8xf32>
    %33 = arith.addf %31, %32 : vector<4x8x8xf32>
    "tpu.trace_start"() <{level = 10 : i32, message = "hsd,hdk->hsk"}> : () -> ()
    %cst_37 = arith.constant dense<0.000000e+00> : vector<4x8x8xf32>
    %34 = tpu.matmul %30, %12, %cst_37 {dimension_numbers = #tpu.dot_dimension_numbers<[2], [1], [1], [2], [0, 0, 0, 1, 1, 2], [0], [0]>} : vector<4x8x32xbf16>, vector<4x32x8xbf16>, vector<4x8x8xf32> -> vector<4x8x8xf32>
    "tpu.trace_stop"() : () -> ()
    %35 = vector.broadcast %14 : vector<4x1x8xf32> to vector<4x8x8xf32>
    %36 = arith.addf %34, %35 : vector<4x8x8xf32>
    "tpu.trace_start"() <{level = 10 : i32, message = "hsd,hdk->hsk"}> : () -> ()
    %cst_38 = arith.constant dense<0.000000e+00> : vector<4x8x8xf32>
    %37 = tpu.matmul %30, %16, %cst_38 {dimension_numbers = #tpu.dot_dimension_numbers<[2], [1], [1], [2], [0, 0, 0, 1, 1, 2], [0], [0]>} : vector<4x8x32xbf16>, vector<4x32x8xbf16>, vector<4x8x8xf32> -> vector<4x8x8xf32>
    "tpu.trace_stop"() : () -> ()
    %38 = vector.broadcast %18 : vector<4x1x8xf32> to vector<4x8x8xf32>
    %39 = arith.addf %37, %38 : vector<4x8x8xf32>
    %40 = arith.truncf %33 : vector<4x8x8xf32> to vector<4x8x8xbf16>
    %41 = arith.truncf %36 : vector<4x8x8xf32> to vector<4x8x8xbf16>
    "tpu.trace_start"() <{level = 10 : i32, message = "hqd,hkd->hqk"}> : () -> ()
    %cst_39 = arith.constant dense<0.000000e+00> : vector<4x8x8xf32>
    %42 = tpu.matmul %40, %41, %cst_39 {dimension_numbers = #tpu.dot_dimension_numbers<[2], [2], [1], [1], [0, 0, 0, 1, 1, 1], [0], [0]>} : vector<4x8x8xbf16>, vector<4x8x8xbf16>, vector<4x8x8xf32> -> vector<4x8x8xf32>
    "tpu.trace_stop"() : () -> ()
    %cst_40 = arith.constant dense<0xFF800000> : vector<4x8xf32>
    %43 = vector.multi_reduction <maximumf>, %42, %cst_40 [2] : vector<4x8x8xf32> to vector<4x8xf32>
    %44 = vector.shape_cast %43 : vector<4x8xf32> to vector<4x8x1xf32>
    %45 = vector.broadcast %44 : vector<4x8x1xf32> to vector<4x8x8xf32>
    %46 = arith.subf %42, %45 : vector<4x8x8xf32>
    %47 = math.exp %46 : vector<4x8x8xf32>
    %cst_41 = arith.constant dense<0.000000e+00> : vector<4x8xf32>
    %48 = vector.multi_reduction <add>, %47, %cst_41 [2] : vector<4x8x8xf32> to vector<4x8xf32>
    %49 = vector.shape_cast %48 : vector<4x8xf32> to vector<4x8x1xf32>
    %50 = tpu.reciprocal %49 {approx = true} : vector<4x8x1xf32> -> vector<4x8x1xf32>
    %51 = vector.broadcast %50 : vector<4x8x1xf32> to vector<4x8x8xf32>
    %52 = arith.mulf %47, %51 : vector<4x8x8xf32>
    %53 = arith.truncf %52 : vector<4x8x8xf32> to vector<4x8x8xbf16>
    %54 = arith.truncf %39 : vector<4x8x8xf32> to vector<4x8x8xbf16>
    "tpu.trace_start"() <{level = 10 : i32, message = "hqk,hkd->hqd"}> : () -> ()
    %cst_42 = arith.constant dense<0.000000e+00> : vector<4x8x8xf32>
    %55 = tpu.matmul %53, %54, %cst_42 {dimension_numbers = #tpu.dot_dimension_numbers<[2], [1], [1], [2], [0, 0, 0, 1, 1, 2], [0], [0]>} : vector<4x8x8xbf16>, vector<4x8x8xbf16>, vector<4x8x8xf32> -> vector<4x8x8xf32>
    "tpu.trace_stop"() : () -> ()
    %56 = arith.truncf %55 : vector<4x8x8xf32> to vector<4x8x8xbf16>
    "tpu.trace_start"() <{level = 10 : i32, message = "hsd,hdm->hsm"}> : () -> ()
    %cst_43 = arith.constant dense<0.000000e+00> : vector<4x8x32xf32>
    %57 = tpu.matmul %56, %20, %cst_43 {dimension_numbers = #tpu.dot_dimension_numbers<[2], [1], [1], [2], [0, 0, 0, 1, 1, 2], [0], [0]>} : vector<4x8x8xbf16>, vector<4x8x32xbf16>, vector<4x8x32xf32> -> vector<4x8x32xf32>
    "tpu.trace_stop"() : () -> ()
    %cst_44 = arith.constant dense<0.000000e+00> : vector<8x32xf32>
    %58 = vector.multi_reduction <add>, %57, %cst_44 [0] : vector<4x8x32xf32> to vector<8x32xf32>
    %59 = vector.broadcast %22 : vector<1x32xf32> to vector<8x32xf32>
    %60 = arith.addf %58, %59 : vector<8x32xf32>
    %61 = arith.addf %4, %60 : vector<8x32xf32>
    %c0_45 = arith.constant 0 : index
    %c0_46 = arith.constant 0 : index
    %c0_47 = arith.constant 0 : index
    %62 = vector.load %arg24[%c0_45, %c0_46, %c0_47] : memref<1x8x32xf32, #tpu.memory_space<vmem>>, vector<1x8x32xf32>
    %63 = vector.shape_cast %62 : vector<1x8x32xf32> to vector<8x32xf32>
    %c0_48 = arith.constant 0 : index
    %c0_49 = arith.constant 0 : index
    %c0_50 = arith.constant 0 : index
    %64 = vector.load %arg25[%c0_48, %c0_49, %c0_50] : memref<1x8x32xf32, #tpu.memory_space<vmem>>, vector<1x8x32xf32>
    %65 = vector.shape_cast %64 : vector<1x8x32xf32> to vector<8x32xf32>
    %66 = vector.shape_cast %61 : vector<8x32xf32> to vector<1x8x32xf32>
    %cst_51 = arith.constant dense<0.000000e+00> : vector<1xf32>
    %67 = vector.multi_reduction <add>, %66, %cst_51 [1, 2] : vector<1x8x32xf32> to vector<1xf32>
    %68 = vector.shape_cast %67 : vector<1xf32> to vector<1x1x1xf32>
    %69 = vector.extract %68[0, 0, 0] : f32 from vector<1x1x1xf32>
    %cst_52 = arith.constant 2.560000e+02 : f32
    %70 = arith.divf %69, %cst_52 : f32
    %71 = vector.broadcast %70 : f32 to vector<8x32xf32>
    %72 = arith.subf %61, %71 : vector<8x32xf32>
    %73 = vector.broadcast %70 : f32 to vector<8x32xf32>
    %74 = arith.subf %61, %73 : vector<8x32xf32>
    %75 = arith.mulf %72, %74 : vector<8x32xf32>
    %76 = vector.shape_cast %75 : vector<8x32xf32> to vector<1x8x32xf32>
    %cst_53 = arith.constant dense<0.000000e+00> : vector<1xf32>
    %77 = vector.multi_reduction <add>, %76, %cst_53 [1, 2] : vector<1x8x32xf32> to vector<1xf32>
    %78 = vector.shape_cast %77 : vector<1xf32> to vector<1x1x1xf32>
    %79 = vector.extract %78[0, 0, 0] : f32 from vector<1x1x1xf32>
    %cst_54 = arith.constant 2.560000e+02 : f32
    %80 = arith.divf %79, %cst_54 : f32
    %81 = vector.broadcast %70 : f32 to vector<8x32xf32>
    %82 = arith.subf %61, %81 : vector<8x32xf32>
    %cst_55 = arith.constant 9.99999997E-7 : f32
    %83 = arith.addf %80, %cst_55 : f32
    %84 = math.rsqrt %83 : f32
    %85 = vector.broadcast %84 : f32 to vector<8x32xf32>
    %86 = arith.mulf %82, %85 : vector<8x32xf32>
    %87 = arith.mulf %86, %63 : vector<8x32xf32>
    %88 = arith.addf %87, %65 : vector<8x32xf32>
    %c0_56 = arith.constant 0 : index
    %c0_57 = arith.constant 0 : index
    %c0_58 = arith.constant 0 : index
    %c0_59 = arith.constant 0 : index
    %89 = vector.load %arg12[%c0_56, %c0_57, %c0_58, %c0_59] : memref<1x4x32x8xbf16, #tpu.memory_space<vmem>>, vector<1x4x32x8xbf16>
    %90 = vector.shape_cast %89 : vector<1x4x32x8xbf16> to vector<4x32x8xbf16>
    %c0_60 = arith.constant 0 : index
    %c0_61 = arith.constant 0 : index
    %c0_62 = arith.constant 0 : index
    %c0_63 = arith.constant 0 : index
    %91 = vector.load %arg13[%c0_60, %c0_61, %c0_62, %c0_63] : memref<1x4x1x8xf32, #tpu.memory_space<vmem>>, vector<1x4x1x8xf32>
    %92 = vector.shape_cast %91 : vector<1x4x1x8xf32> to vector<4x1x8xf32>
    %c0_64 = arith.constant 0 : index
    %c0_65 = arith.constant 0 : index
    %c0_66 = arith.constant 0 : index
    %c0_67 = arith.constant 0 : index
    %93 = vector.load %arg14[%c0_64, %c0_65, %c0_66, %c0_67] : memref<1x4x32x8xbf16, #tpu.memory_space<vmem>>, vector<1x4x32x8xbf16>
    %94 = vector.shape_cast %93 : vector<1x4x32x8xbf16> to vector<4x32x8xbf16>
    %c0_68 = arith.constant 0 : index
    %c0_69 = arith.constant 0 : index
    %c0_70 = arith.constant 0 : index
    %c0_71 = arith.constant 0 : index
    %95 = vector.load %arg15[%c0_68, %c0_69, %c0_70, %c0_71] : memref<1x4x1x8xf32, #tpu.memory_space<vmem>>, vector<1x4x1x8xf32>
    %96 = vector.shape_cast %95 : vector<1x4x1x8xf32> to vector<4x1x8xf32>
    %c0_72 = arith.constant 0 : index
    %c0_73 = arith.constant 0 : index
    %c0_74 = arith.constant 0 : index
    %c0_75 = arith.constant 0 : index
    %97 = vector.load %arg16[%c0_72, %c0_73, %c0_74, %c0_75] : memref<1x4x32x8xbf16, #tpu.memory_space<vmem>>, vector<1x4x32x8xbf16>
    %98 = vector.shape_cast %97 : vector<1x4x32x8xbf16> to vector<4x32x8xbf16>
    %c0_76 = arith.constant 0 : index
    %c0_77 = arith.constant 0 : index
    %c0_78 = arith.constant 0 : index
    %c0_79 = arith.constant 0 : index
    %99 = vector.load %arg17[%c0_76, %c0_77, %c0_78, %c0_79] : memref<1x4x1x8xf32, #tpu.memory_space<vmem>>, vector<1x4x1x8xf32>
    %100 = vector.shape_cast %99 : vector<1x4x1x8xf32> to vector<4x1x8xf32>
    %c0_80 = arith.constant 0 : index
    %c0_81 = arith.constant 0 : index
    %c0_82 = arith.constant 0 : index
    %c0_83 = arith.constant 0 : index
    %101 = vector.load %arg18[%c0_80, %c0_81, %c0_82, %c0_83] : memref<1x4x8x32xbf16, #tpu.memory_space<vmem>>, vector<1x4x8x32xbf16>
    %102 = vector.shape_cast %101 : vector<1x4x8x32xbf16> to vector<4x8x32xbf16>
    %c0_84 = arith.constant 0 : index
    %c0_85 = arith.constant 0 : index
    %c0_86 = arith.constant 0 : index
    %103 = vector.load %arg19[%c0_84, %c0_85, %c0_86] : memref<1x1x32xf32, #tpu.memory_space<vmem>>, vector<1x1x32xf32>
    %104 = vector.shape_cast %103 : vector<1x1x32xf32> to vector<1x32xf32>
    %105 = arith.truncf %88 : vector<8x32xf32> to vector<8x32xbf16>
    %106 = vector.shape_cast %105 : vector<8x32xbf16> to vector<1x8x32xbf16>
    %107 = vector.shape_cast %106 : vector<1x8x32xbf16> to vector<1x8x32xbf16>
    %108 = vector.broadcast %107 : vector<1x8x32xbf16> to vector<4x8x32xbf16>
    %109 = arith.truncf %6 : vector<8x32xf32> to vector<8x32xbf16>
    %110 = vector.shape_cast %109 : vector<8x32xbf16> to vector<1x8x32xbf16>
    %111 = vector.shape_cast %110 : vector<1x8x32xbf16> to vector<1x8x32xbf16>
    %112 = vector.broadcast %111 : vector<1x8x32xbf16> to vector<4x8x32xbf16>
    "tpu.trace_start"() <{level = 10 : i32, message = "hsd,hdk->hsk"}> : () -> ()
    %cst_87 = arith.constant dense<0.000000e+00> : vector<4x8x8xf32>
    %113 = tpu.matmul %108, %90, %cst_87 {dimension_numbers = #tpu.dot_dimension_numbers<[2], [1], [1], [2], [0, 0, 0, 1, 1, 2], [0], [0]>} : vector<4x8x32xbf16>, vector<4x32x8xbf16>, vector<4x8x8xf32> -> vector<4x8x8xf32>
    "tpu.trace_stop"() : () -> ()
    %114 = vector.broadcast %92 : vector<4x1x8xf32> to vector<4x8x8xf32>
    %115 = arith.addf %113, %114 : vector<4x8x8xf32>
    "tpu.trace_start"() <{level = 10 : i32, message = "hsd,hdk->hsk"}> : () -> ()
    %cst_88 = arith.constant dense<0.000000e+00> : vector<4x8x8xf32>
    %116 = tpu.matmul %112, %94, %cst_88 {dimension_numbers = #tpu.dot_dimension_numbers<[2], [1], [1], [2], [0, 0, 0, 1, 1, 2], [0], [0]>} : vector<4x8x32xbf16>, vector<4x32x8xbf16>, vector<4x8x8xf32> -> vector<4x8x8xf32>
    "tpu.trace_stop"() : () -> ()
    %117 = vector.broadcast %96 : vector<4x1x8xf32> to vector<4x8x8xf32>
    %118 = arith.addf %116, %117 : vector<4x8x8xf32>
    "tpu.trace_start"() <{level = 10 : i32, message = "hsd,hdk->hsk"}> : () -> ()
    %cst_89 = arith.constant dense<0.000000e+00> : vector<4x8x8xf32>
    %119 = tpu.matmul %112, %98, %cst_89 {dimension_numbers = #tpu.dot_dimension_numbers<[2], [1], [1], [2], [0, 0, 0, 1, 1, 2], [0], [0]>} : vector<4x8x32xbf16>, vector<4x32x8xbf16>, vector<4x8x8xf32> -> vector<4x8x8xf32>
    "tpu.trace_stop"() : () -> ()
    %120 = vector.broadcast %100 : vector<4x1x8xf32> to vector<4x8x8xf32>
    %121 = arith.addf %119, %120 : vector<4x8x8xf32>
    %122 = arith.truncf %115 : vector<4x8x8xf32> to vector<4x8x8xbf16>
    %123 = arith.truncf %118 : vector<4x8x8xf32> to vector<4x8x8xbf16>
    "tpu.trace_start"() <{level = 10 : i32, message = "hqd,hkd->hqk"}> : () -> ()
    %cst_90 = arith.constant dense<0.000000e+00> : vector<4x8x8xf32>
    %124 = tpu.matmul %122, %123, %cst_90 {dimension_numbers = #tpu.dot_dimension_numbers<[2], [2], [1], [1], [0, 0, 0, 1, 1, 1], [0], [0]>} : vector<4x8x8xbf16>, vector<4x8x8xbf16>, vector<4x8x8xf32> -> vector<4x8x8xf32>
    "tpu.trace_stop"() : () -> ()
    %cst_91 = arith.constant dense<0xFF800000> : vector<4x8xf32>
    %125 = vector.multi_reduction <maximumf>, %124, %cst_91 [2] : vector<4x8x8xf32> to vector<4x8xf32>
    %126 = vector.shape_cast %125 : vector<4x8xf32> to vector<4x8x1xf32>
    %127 = vector.broadcast %126 : vector<4x8x1xf32> to vector<4x8x8xf32>
    %128 = arith.subf %124, %127 : vector<4x8x8xf32>
    %129 = math.exp %128 : vector<4x8x8xf32>
    %cst_92 = arith.constant dense<0.000000e+00> : vector<4x8xf32>
    %130 = vector.multi_reduction <add>, %129, %cst_92 [2] : vector<4x8x8xf32> to vector<4x8xf32>
    %131 = vector.shape_cast %130 : vector<4x8xf32> to vector<4x8x1xf32>
    %132 = tpu.reciprocal %131 {approx = true} : vector<4x8x1xf32> -> vector<4x8x1xf32>
    %133 = vector.broadcast %132 : vector<4x8x1xf32> to vector<4x8x8xf32>
    %134 = arith.mulf %129, %133 : vector<4x8x8xf32>
    %135 = arith.truncf %134 : vector<4x8x8xf32> to vector<4x8x8xbf16>
    %136 = arith.truncf %121 : vector<4x8x8xf32> to vector<4x8x8xbf16>
    "tpu.trace_start"() <{level = 10 : i32, message = "hqk,hkd->hqd"}> : () -> ()
    %cst_93 = arith.constant dense<0.000000e+00> : vector<4x8x8xf32>
    %137 = tpu.matmul %135, %136, %cst_93 {dimension_numbers = #tpu.dot_dimension_numbers<[2], [1], [1], [2], [0, 0, 0, 1, 1, 2], [0], [0]>} : vector<4x8x8xbf16>, vector<4x8x8xbf16>, vector<4x8x8xf32> -> vector<4x8x8xf32>
    "tpu.trace_stop"() : () -> ()
    %138 = arith.truncf %137 : vector<4x8x8xf32> to vector<4x8x8xbf16>
    "tpu.trace_start"() <{level = 10 : i32, message = "hsd,hdm->hsm"}> : () -> ()
    %cst_94 = arith.constant dense<0.000000e+00> : vector<4x8x32xf32>
    %139 = tpu.matmul %138, %102, %cst_94 {dimension_numbers = #tpu.dot_dimension_numbers<[2], [1], [1], [2], [0, 0, 0, 1, 1, 2], [0], [0]>} : vector<4x8x8xbf16>, vector<4x8x32xbf16>, vector<4x8x32xf32> -> vector<4x8x32xf32>
    "tpu.trace_stop"() : () -> ()
    %cst_95 = arith.constant dense<0.000000e+00> : vector<8x32xf32>
    %140 = vector.multi_reduction <add>, %139, %cst_95 [0] : vector<4x8x32xf32> to vector<8x32xf32>
    %141 = vector.broadcast %104 : vector<1x32xf32> to vector<8x32xf32>
    %142 = arith.addf %140, %141 : vector<8x32xf32>
    %143 = arith.addf %88, %142 : vector<8x32xf32>
    %c0_96 = arith.constant 0 : index
    %c0_97 = arith.constant 0 : index
    %c0_98 = arith.constant 0 : index
    %144 = vector.load %arg26[%c0_96, %c0_97, %c0_98] : memref<1x8x32xf32, #tpu.memory_space<vmem>>, vector<1x8x32xf32>
    %145 = vector.shape_cast %144 : vector<1x8x32xf32> to vector<8x32xf32>
    %c0_99 = arith.constant 0 : index
    %c0_100 = arith.constant 0 : index
    %c0_101 = arith.constant 0 : index
    %146 = vector.load %arg27[%c0_99, %c0_100, %c0_101] : memref<1x8x32xf32, #tpu.memory_space<vmem>>, vector<1x8x32xf32>
    %147 = vector.shape_cast %146 : vector<1x8x32xf32> to vector<8x32xf32>
    %148 = vector.shape_cast %143 : vector<8x32xf32> to vector<1x8x32xf32>
    %cst_102 = arith.constant dense<0.000000e+00> : vector<1xf32>
    %149 = vector.multi_reduction <add>, %148, %cst_102 [1, 2] : vector<1x8x32xf32> to vector<1xf32>
    %150 = vector.shape_cast %149 : vector<1xf32> to vector<1x1x1xf32>
    %151 = vector.extract %150[0, 0, 0] : f32 from vector<1x1x1xf32>
    %cst_103 = arith.constant 2.560000e+02 : f32
    %152 = arith.divf %151, %cst_103 : f32
    %153 = vector.broadcast %152 : f32 to vector<8x32xf32>
    %154 = arith.subf %143, %153 : vector<8x32xf32>
    %155 = vector.broadcast %152 : f32 to vector<8x32xf32>
    %156 = arith.subf %143, %155 : vector<8x32xf32>
    %157 = arith.mulf %154, %156 : vector<8x32xf32>
    %158 = vector.shape_cast %157 : vector<8x32xf32> to vector<1x8x32xf32>
    %cst_104 = arith.constant dense<0.000000e+00> : vector<1xf32>
    %159 = vector.multi_reduction <add>, %158, %cst_104 [1, 2] : vector<1x8x32xf32> to vector<1xf32>
    %160 = vector.shape_cast %159 : vector<1xf32> to vector<1x1x1xf32>
    %161 = vector.extract %160[0, 0, 0] : f32 from vector<1x1x1xf32>
    %cst_105 = arith.constant 2.560000e+02 : f32
    %162 = arith.divf %161, %cst_105 : f32
    %163 = vector.broadcast %152 : f32 to vector<8x32xf32>
    %164 = arith.subf %143, %163 : vector<8x32xf32>
    %cst_106 = arith.constant 9.99999997E-7 : f32
    %165 = arith.addf %162, %cst_106 : f32
    %166 = math.rsqrt %165 : f32
    %167 = vector.broadcast %166 : f32 to vector<8x32xf32>
    %168 = arith.mulf %164, %167 : vector<8x32xf32>
    %169 = arith.mulf %168, %145 : vector<8x32xf32>
    %170 = arith.addf %169, %147 : vector<8x32xf32>
    %171 = arith.truncf %170 : vector<8x32xf32> to vector<8x32xbf16>
    %c0_107 = arith.constant 0 : index
    %c0_108 = arith.constant 0 : index
    %c0_109 = arith.constant 0 : index
    %172 = vector.load %arg20[%c0_107, %c0_108, %c0_109] : memref<1x32x64xbf16, #tpu.memory_space<vmem>>, vector<1x32x64xbf16>
    %173 = vector.shape_cast %172 : vector<1x32x64xbf16> to vector<32x64xbf16>
    %cst_110 = arith.constant dense<0.000000e+00> : vector<8x64xf32>
    %174 = tpu.matmul %171, %173, %cst_110 {dimension_numbers = #tpu.dot_dimension_numbers<[1], [0], [0], [1], [0, 0, 1, 1], [], []>} : vector<8x32xbf16>, vector<32x64xbf16>, vector<8x64xf32> -> vector<8x64xf32>
    %c0_111 = arith.constant 0 : index
    %c0_112 = arith.constant 0 : index
    %c0_113 = arith.constant 0 : index
    %175 = vector.load %arg21[%c0_111, %c0_112, %c0_113] : memref<1x1x64xf32, #tpu.memory_space<vmem>>, vector<1x1x64xf32>
    %176 = vector.shape_cast %175 : vector<1x1x64xf32> to vector<1x64xf32>
    %177 = vector.broadcast %176 : vector<1x64xf32> to vector<8x64xf32>
    %178 = arith.addf %174, %177 : vector<8x64xf32>
    %cst_114 = arith.constant 0.000000e+00 : f32
    %179 = vector.broadcast %cst_114 : f32 to vector<8x64xf32>
    %180 = arith.maximumf %178, %179 : vector<8x64xf32>
    %181 = arith.truncf %180 : vector<8x64xf32> to vector<8x64xbf16>
    %c0_115 = arith.constant 0 : index
    %c0_116 = arith.constant 0 : index
    %c0_117 = arith.constant 0 : index
    %182 = vector.load %arg22[%c0_115, %c0_116, %c0_117] : memref<1x64x32xbf16, #tpu.memory_space<vmem>>, vector<1x64x32xbf16>
    %183 = vector.shape_cast %182 : vector<1x64x32xbf16> to vector<64x32xbf16>
    %cst_118 = arith.constant dense<0.000000e+00> : vector<8x32xf32>
    %184 = tpu.matmul %181, %183, %cst_118 {dimension_numbers = #tpu.dot_dimension_numbers<[1], [0], [0], [1], [0, 0, 1, 1], [], []>} : vector<8x64xbf16>, vector<64x32xbf16>, vector<8x32xf32> -> vector<8x32xf32>
    %c0_119 = arith.constant 0 : index
    %c0_120 = arith.constant 0 : index
    %c0_121 = arith.constant 0 : index
    %185 = vector.load %arg23[%c0_119, %c0_120, %c0_121] : memref<1x1x32xf32, #tpu.memory_space<vmem>>, vector<1x1x32xf32>
    %186 = vector.shape_cast %185 : vector<1x1x32xf32> to vector<1x32xf32>
    %187 = vector.broadcast %186 : vector<1x32xf32> to vector<8x32xf32>
    %188 = arith.addf %184, %187 : vector<8x32xf32>
    %189 = arith.addf %170, %188 : vector<8x32xf32>
    %c0_122 = arith.constant 0 : index
    %c0_123 = arith.constant 0 : index
    %c0_124 = arith.constant 0 : index
    %190 = vector.load %arg28[%c0_122, %c0_123, %c0_124] : memref<1x8x32xf32, #tpu.memory_space<vmem>>, vector<1x8x32xf32>
    %191 = vector.shape_cast %190 : vector<1x8x32xf32> to vector<8x32xf32>
    %c0_125 = arith.constant 0 : index
    %c0_126 = arith.constant 0 : index
    %c0_127 = arith.constant 0 : index
    %192 = vector.load %arg29[%c0_125, %c0_126, %c0_127] : memref<1x8x32xf32, #tpu.memory_space<vmem>>, vector<1x8x32xf32>
    %193 = vector.shape_cast %192 : vector<1x8x32xf32> to vector<8x32xf32>
    %194 = vector.shape_cast %189 : vector<8x32xf32> to vector<1x8x32xf32>
    %cst_128 = arith.constant dense<0.000000e+00> : vector<1xf32>
    %195 = vector.multi_reduction <add>, %194, %cst_128 [1, 2] : vector<1x8x32xf32> to vector<1xf32>
    %196 = vector.shape_cast %195 : vector<1xf32> to vector<1x1x1xf32>
    %197 = vector.extract %196[0, 0, 0] : f32 from vector<1x1x1xf32>
    %cst_129 = arith.constant 2.560000e+02 : f32
    %198 = arith.divf %197, %cst_129 : f32
    %199 = vector.broadcast %198 : f32 to vector<8x32xf32>
    %200 = arith.subf %189, %199 : vector<8x32xf32>
    %201 = vector.broadcast %198 : f32 to vector<8x32xf32>
    %202 = arith.subf %189, %201 : vector<8x32xf32>
    %203 = arith.mulf %200, %202 : vector<8x32xf32>
    %204 = vector.shape_cast %203 : vector<8x32xf32> to vector<1x8x32xf32>
    %cst_130 = arith.constant dense<0.000000e+00> : vector<1xf32>
    %205 = vector.multi_reduction <add>, %204, %cst_130 [1, 2] : vector<1x8x32xf32> to vector<1xf32>
    %206 = vector.shape_cast %205 : vector<1xf32> to vector<1x1x1xf32>
    %207 = vector.extract %206[0, 0, 0] : f32 from vector<1x1x1xf32>
    %cst_131 = arith.constant 2.560000e+02 : f32
    %208 = arith.divf %207, %cst_131 : f32
    %209 = vector.broadcast %198 : f32 to vector<8x32xf32>
    %210 = arith.subf %189, %209 : vector<8x32xf32>
    %cst_132 = arith.constant 9.99999997E-7 : f32
    %211 = arith.addf %208, %cst_132 : f32
    %212 = math.rsqrt %211 : f32
    %213 = vector.broadcast %212 : f32 to vector<8x32xf32>
    %214 = arith.mulf %210, %213 : vector<8x32xf32>
    %215 = arith.mulf %214, %191 : vector<8x32xf32>
    %216 = arith.addf %215, %193 : vector<8x32xf32>
    %c0_133 = arith.constant 0 : index
    %c0_134 = arith.constant 0 : index
    %c0_135 = arith.constant 0 : index
    %217 = vector.load %arg30[%c0_133, %c0_134, %c0_135] : memref<1x8x32xf32, #tpu.memory_space<vmem>>, vector<1x8x32xf32>
    %218 = vector.shape_cast %217 : vector<1x8x32xf32> to vector<8x32xf32>
    %219 = vector.shape_cast %216 : vector<8x32xf32> to vector<1x8x32xf32>
    tpu.vector_store %arg30[%c0_133, %c0_134, %c0_135], %219 {strides = array<i32>} : memref<1x8x32xf32, #tpu.memory_space<vmem>>, vector<1x8x32xf32>,
    return
  }
  func.func @transform_0(%arg0: i32, %arg1: i32) -> (i32, i32, i32) {
    %c0_i32 = arith.constant 0 : i32
    %c0_i32_0 = arith.constant 0 : i32
    %c0_i32_1 = arith.constant 0 : i32
    return %arg0, %c0_i32, %c0_i32_0 : i32, i32, i32
  }
  func.func @transform_1(%arg0: i32, %arg1: i32) -> (i32, i32, i32) {
    %c0_i32 = arith.constant 0 : i32
    %c0_i32_0 = arith.constant 0 : i32
    %c0_i32_1 = arith.constant 0 : i32
    return %arg0, %c0_i32, %c0_i32_0 : i32, i32, i32
  }
  func.func @transform_2(%arg0: i32, %arg1: i32) -> (i32, i32, i32, i32) {
    %c0_i32 = arith.constant 0 : i32
    %c0_i32_0 = arith.constant 0 : i32
    %c0_i32_1 = arith.constant 0 : i32
    %c0_i32_2 = arith.constant 0 : i32
    return %arg1, %c0_i32, %c0_i32_0, %c0_i32_1 : i32, i32, i32, i32
  }
  func.func @transform_3(%arg0: i32, %arg1: i32) -> (i32, i32, i32, i32) {
    %c0_i32 = arith.constant 0 : i32
    %c0_i32_0 = arith.constant 0 : i32
    %c0_i32_1 = arith.constant 0 : i32
    %c0_i32_2 = arith.constant 0 : i32
    return %arg1, %c0_i32, %c0_i32_0, %c0_i32_1 : i32, i32, i32, i32
  }
  func.func @transform_4(%arg0: i32, %arg1: i32) -> (i32, i32, i32, i32) {
    %c0_i32 = arith.constant 0 : i32
    %c0_i32_0 = arith.constant 0 : i32
    %c0_i32_1 = arith.constant 0 : i32
    %c0_i32_2 = arith.constant 0 : i32
    return %arg1, %c0_i32, %c0_i32_0, %c0_i32_1 : i32, i32, i32, i32
  }
  func.func @transform_5(%arg0: i32, %arg1: i32) -> (i32, i32, i32, i32) {
    %c0_i32 = arith.constant 0 : i32
    %c0_i32_0 = arith.constant 0 : i32
    %c0_i32_1 = arith.constant 0 : i32
    %c0_i32_2 = arith.constant 0 : i32
    return %arg1, %c0_i32, %c0_i32_0, %c0_i32_1 : i32, i32, i32, i32
  }
  func.func @transform_6(%arg0: i32, %arg1: i32) -> (i32, i32, i32, i32) {
    %c0_i32 = arith.constant 0 : i32
    %c0_i32_0 = arith.constant 0 : i32
    %c0_i32_1 = arith.constant 0 : i32
    %c0_i32_2 = arith.constant 0 : i32
    return %arg1, %c0_i32, %c0_i32_0, %c0_i32_1 : i32, i32, i32, i32
  }
  func.func @transform_7(%arg0: i32, %arg1: i32) -> (i32, i32, i32, i32) {
    %c0_i32 = arith.constant 0 : i32
    %c0_i32_0 = arith.constant 0 : i32
    %c0_i32_1 = arith.constant 0 : i32
    %c0_i32_2 = arith.constant 0 : i32
    return %arg1, %c0_i32, %c0_i32_0, %c0_i32_1 : i32, i32, i32, i32
  }
  func.func @transform_8(%arg0: i32, %arg1: i32) -> (i32, i32, i32, i32) {
    %c0_i32 = arith.constant 0 : i32
    %c0_i32_0 = arith.constant 0 : i32
    %c0_i32_1 = arith.constant 0 : i32
    %c0_i32_2 = arith.constant 0 : i32
    return %arg1, %c0_i32, %c0_i32_0, %c0_i32_1 : i32, i32, i32, i32
  }
  func.func @transform_9(%arg0: i32, %arg1: i32) -> (i32, i32, i32) {
    %c0_i32 = arith.constant 0 : i32
    %c0_i32_0 = arith.constant 0 : i32
    %c0_i32_1 = arith.constant 0 : i32
    return %arg1, %c0_i32, %c0_i32_0 : i32, i32, i32
  }
  func.func @transform_10(%arg0: i32, %arg1: i32) -> (i32, i32, i32, i32) {
    %c0_i32 = arith.constant 0 : i32
    %c0_i32_0 = arith.constant 0 : i32
    %c0_i32_1 = arith.constant 0 : i32
    %c0_i32_2 = arith.constant 0 : i32
    return %arg1, %c0_i32, %c0_i32_0, %c0_i32_1 : i32, i32, i32, i32
  }
  func.func @transform_11(%arg0: i32, %arg1: i32) -> (i32, i32, i32, i32) {
    %c0_i32 = arith.constant 0 : i32
    %c0_i32_0 = arith.constant 0 : i32
    %c0_i32_1 = arith.constant 0 : i32
    %c0_i32_2 = arith.constant 0 : i32
    return %arg1, %c0_i32, %c0_i32_0, %c0_i32_1 : i32, i32, i32, i32
  }
  func.func @transform_12(%arg0: i32, %arg1: i32) -> (i32, i32, i32, i32) {
    %c0_i32 = arith.constant 0 : i32
    %c0_i32_0 = arith.constant 0 : i32
    %c0_i32_1 = arith.constant 0 : i32
    %c0_i32_2 = arith.constant 0 : i32
    return %arg1, %c0_i32, %c0_i32_0, %c0_i32_1 : i32, i32, i32, i32
  }
  func.func @transform_13(%arg0: i32, %arg1: i32) -> (i32, i32, i32, i32) {
    %c0_i32 = arith.constant 0 : i32
    %c0_i32_0 = arith.constant 0 : i32
    %c0_i32_1 = arith.constant 0 : i32
    %c0_i32_2 = arith.constant 0 : i32
    return %arg1, %c0_i32, %c0_i32_0, %c0_i32_1 : i32, i32, i32, i32
  }
  func.func @transform_14(%arg0: i32, %arg1: i32) -> (i32, i32, i32, i32) {
    %c0_i32 = arith.constant 0 : i32
    %c0_i32_0 = arith.constant 0 : i32
    %c0_i32_1 = arith.constant 0 : i32
    %c0_i32_2 = arith.constant 0 : i32
    return %arg1, %c0_i32, %c0_i32_0, %c0_i32_1 : i32, i32, i32, i32
  }
  func.func @transform_15(%arg0: i32, %arg1: i32) -> (i32, i32, i32, i32) {
    %c0_i32 = arith.constant 0 : i32
    %c0_i32_0 = arith.constant 0 : i32
    %c0_i32_1 = arith.constant 0 : i32
    %c0_i32_2 = arith.constant 0 : i32
    return %arg1, %c0_i32, %c0_i32_0, %c0_i32_1 : i32, i32, i32, i32
  }
  func.func @transform_16(%arg0: i32, %arg1: i32) -> (i32, i32, i32, i32) {
    %c0_i32 = arith.constant 0 : i32
    %c0_i32_0 = arith.constant 0 : i32
    %c0_i32_1 = arith.constant 0 : i32
    %c0_i32_2 = arith.constant 0 : i32
    return %arg1, %c0_i32, %c0_i32_0, %c0_i32_1 : i32, i32, i32, i32
  }
  func.func @transform_17(%arg0: i32, %arg1: i32) -> (i32, i32, i32) {
    %c0_i32 = arith.constant 0 : i32
    %c0_i32_0 = arith.constant 0 : i32
    %c0_i32_1 = arith.constant 0 : i32
    return %arg1, %c0_i32, %c0_i32_0 : i32, i32, i32
  }
  func.func @transform_18(%arg0: i32, %arg1: i32) -> (i32, i32, i32) {
    %c0_i32 = arith.constant 0 : i32
    %c0_i32_0 = arith.constant 0 : i32
    %c0_i32_1 = arith.constant 0 : i32
    return %arg1, %c0_i32, %c0_i32_0 : i32, i32, i32
  }
  func.func @transform_19(%arg0: i32, %arg1: i32) -> (i32, i32, i32) {
    %c0_i32 = arith.constant 0 : i32
    %c0_i32_0 = arith.constant 0 : i32
    %c0_i32_1 = arith.constant 0 : i32
    return %arg1, %c0_i32, %c0_i32_0 : i32, i32, i32
  }
  func.func @transform_20(%arg0: i32, %arg1: i32) -> (i32, i32, i32) {
    %c0_i32 = arith.constant 0 : i32
    %c0_i32_0 = arith.constant 0 : i32
    %c0_i32_1 = arith.constant 0 : i32
    return %arg1, %c0_i32, %c0_i32_0 : i32, i32, i32
  }
  func.func @transform_21(%arg0: i32, %arg1: i32) -> (i32, i32, i32) {
    %c0_i32 = arith.constant 0 : i32
    %c0_i32_0 = arith.constant 0 : i32
    %c0_i32_1 = arith.constant 0 : i32
    return %arg1, %c0_i32, %c0_i32_0 : i32, i32, i32
  }
  func.func @transform_22(%arg0: i32, %arg1: i32) -> (i32, i32, i32) {
    %c0_i32 = arith.constant 0 : i32
    %c0_i32_0 = arith.constant 0 : i32
    %c0_i32_1 = arith.constant 0 : i32
    return %arg1, %c0_i32, %c0_i32_0 : i32, i32, i32
  }
  func.func @transform_23(%arg0: i32, %arg1: i32) -> (i32, i32, i32) {
    %c0_i32 = arith.constant 0 : i32
    %c0_i32_0 = arith.constant 0 : i32
    %c0_i32_1 = arith.constant 0 : i32
    return %arg1, %c0_i32, %c0_i32_0 : i32, i32, i32
  }
  func.func @transform_24(%arg0: i32, %arg1: i32) -> (i32, i32, i32) {
    %c0_i32 = arith.constant 0 : i32
    %c0_i32_0 = arith.constant 0 : i32
    %c0_i32_1 = arith.constant 0 : i32
    return %arg1, %c0_i32, %c0_i32_0 : i32, i32, i32
  }
  func.func @transform_25(%arg0: i32, %arg1: i32) -> (i32, i32, i32) {
    %c0_i32 = arith.constant 0 : i32
    %c0_i32_0 = arith.constant 0 : i32
    %c0_i32_1 = arith.constant 0 : i32
    return %arg1, %c0_i32, %c0_i32_0 : i32, i32, i32
  }
  func.func @transform_26(%arg0: i32, %arg1: i32) -> (i32, i32, i32) {
    %c0_i32 = arith.constant 0 : i32
    %c0_i32_0 = arith.constant 0 : i32
    %c0_i32_1 = arith.constant 0 : i32
    return %arg1, %c0_i32, %c0_i32_0 : i32, i32, i32
  }
  func.func @transform_27(%arg0: i32, %arg1: i32) -> (i32, i32, i32) {
    %c0_i32 = arith.constant 0 : i32
    %c0_i32_0 = arith.constant 0 : i32
    %c0_i32_1 = arith.constant 0 : i32
    return %arg1, %c0_i32, %c0_i32_0 : i32, i32, i32
  }
  func.func @transform_28(%arg0: i32, %arg1: i32) -> (i32, i32, i32) {
    %c0_i32 = arith.constant 0 : i32
    %c0_i32_0 = arith.constant 0 : i32
    %c0_i32_1 = arith.constant 0 : i32
    return %arg0, %c0_i32, %c0_i32_0 : i32, i32, i32
  }
}

</mosaic_0001>

<llo_original>
// kernel: tpu_custom_call.1
$region0: #{tpu_custom_call.1}
  #allocation0 [shape = 'u32[]', space=smem, size = 0x4, offset = 0x4, fixed_abs, tag = 'smem constant byte address 0x4 - core index']
  #allocation1 [shape = 'u32[72,128]{1,0:T(1,128)}', space=vmem, size = 0x9000, scoped, tag = 'internal scratch']
  %s0 = inlined_call_operand.vmem [shape: f32[2,8,32], index: 0, kind: input, shape index: {}]
  %s1 = inlined_call_operand.vmem [shape: f32[2,8,32], index: 1, kind: input, shape index: {}]
  %s2 = inlined_call_operand.vmem [shape: bf16[2,4,32,8], index: 2, kind: input, shape index: {}]
  %s3 = inlined_call_operand.vmem [shape: f32[2,4,1,8], index: 3, kind: input, shape index: {}]
  %s4 = inlined_call_operand.vmem [shape: bf16[2,4,32,8], index: 4, kind: input, shape index: {}]
  %s5 = inlined_call_operand.vmem [shape: f32[2,4,1,8], index: 5, kind: input, shape index: {}]
  %s6 = inlined_call_operand.vmem [shape: bf16[2,4,32,8], index: 6, kind: input, shape index: {}]
  %s7 = inlined_call_operand.vmem [shape: f32[2,4,1,8], index: 7, kind: input, shape index: {}]
  %s8 = inlined_call_operand.vmem [shape: bf16[2,4,8,32], index: 8, kind: input, shape index: {}]
  %s9 = inlined_call_operand.vmem [shape: f32[2,1,32], index: 9, kind: input, shape index: {}]
  %s10 = inlined_call_operand.vmem [shape: bf16[2,4,32,8], index: 10, kind: input, shape index: {}]
  %s11 = inlined_call_operand.vmem [shape: f32[2,4,1,8], index: 11, kind: input, shape index: {}]
  %s12 = inlined_call_operand.vmem [shape: bf16[2,4,32,8], index: 12, kind: input, shape index: {}]
  %s13 = inlined_call_operand.vmem [shape: f32[2,4,1,8], index: 13, kind: input, shape index: {}]
  %s14 = inlined_call_operand.vmem [shape: bf16[2,4,32,8], index: 14, kind: input, shape index: {}]
  %s15 = inlined_call_operand.vmem [shape: f32[2,4,1,8], index: 15, kind: input, shape index: {}]
  %s16 = inlined_call_operand.vmem [shape: bf16[2,4,8,32], index: 16, kind: input, shape index: {}]
  %s17 = inlined_call_operand.vmem [shape: f32[2,1,32], index: 17, kind: input, shape index: {}]
  %s18 = inlined_call_operand.vmem [shape: bf16[2,32,64], index: 18, kind: input, shape index: {}]
  %s19 = inlined_call_operand.vmem [shape: f32[2,1,64], index: 19, kind: input, shape index: {}]
  %s20 = inlined_call_operand.vmem [shape: bf16[2,64,32], index: 20, kind: input, shape index: {}]
  %s21 = inlined_call_operand.vmem [shape: f32[2,1,32], index: 21, kind: input, shape index: {}]
  %s22 = inlined_call_operand.vmem [shape: f32[2,8,32], index: 22, kind: input, shape index: {}]
  %s23 = inlined_call_operand.vmem [shape: f32[2,8,32], index: 23, kind: input, shape index: {}]
  %s24 = inlined_call_operand.vmem [shape: f32[2,8,32], index: 24, kind: input, shape index: {}]
  %s25 = inlined_call_operand.vmem [shape: f32[2,8,32], index: 25, kind: input, shape index: {}]
  %s26 = inlined_call_operand.vmem [shape: f32[2,8,32], index: 26, kind: input, shape index: {}]
  %s27 = inlined_call_operand.vmem [shape: f32[2,8,32], index: 27, kind: input, shape index: {}]
  %s28 = inlined_call_operand.hbm [shape: f32[2,8,32], index: 28, kind: output, shape index: {}]
  %s29 = sld [smem:[#allocation0]]
  $region149: #{tpu_custom_call.1} parent=0
    _
  %s31 = ssub.s32 1, %s29
  %s32 = scalar_select 0, %s31, %s29
  $region1: #{tpu_custom_call.1} parent=0
    #allocation2 [shape = 'u8[8192]{0}', space=vmem, size = 0x2000, scoped, tag = 'output window, operand 0']
    #allocation3 [shape = 's32[2]{0}', space=sflag, size = 0x8, scoped, tag = 'scoped memory for tpu_custom_call.1']
    %33 = vsyncpa [#allocation3], 0
    %s34 = scalar_lea.sflag [#allocation3], 1
    %35 = vsyncpa %s34, 0
    loop: start=0, step=1, limit=6
    $region2: #{tpu_custom_call.1} parent=1 // loop_pre_header
      _
    $region3: #{tpu_custom_call.1} parent=1 // loop_header
      %s37 = sphi 0, %s41
      %p38 = scmp.ge.s32.totalorder %s37, 6
      %s44 = sphi 0, %s56
      %s45 = sphi 0, %s52
      %s46 = sphi 0, %s44
      %s47 = sphi 0, %s45
      %s48 = sphi 0, %s46
      %s49 = sphi 0, %s47
      %s59 = sphi 0, %s61
      %s62 = sphi 0, %s59
      %s63 = sphi 0, %s62
      %s79 = sphi 0, %s63
      %s85 = sphi 0, %s87
      %s88 = sphi 0, %s85
      %s89 = sphi 0, %s88
      %s105 = sphi 0, %s89
      %s111 = sphi 0, %s113
      %s114 = sphi 0, %s111
      %s115 = sphi 0, %s114
      %s131 = sphi 0, %s115
      %s137 = sphi 0, %s139
      %s140 = sphi 0, %s137
      %s141 = sphi 0, %s140
      %s157 = sphi 0, %s141
      %s163 = sphi 0, %s165
      %s166 = sphi 0, %s163
      %s167 = sphi 0, %s166
      %s183 = sphi 0, %s167
      %s189 = sphi 0, %s191
      %s192 = sphi 0, %s189
      %s193 = sphi 0, %s192
      %s209 = sphi 0, %s193
      %s215 = sphi 0, %s217
      %s218 = sphi 0, %s215
      %s219 = sphi 0, %s218
      %s235 = sphi 0, %s219
      %s241 = sphi 0, %s243
      %s244 = sphi 0, %s241
      %s245 = sphi 0, %s244
      %s261 = sphi 0, %s245
      %s267 = sphi 0, %s269
      %s270 = sphi 0, %s267
      %s271 = sphi 0, %s270
      %s287 = sphi 0, %s271
      %s293 = sphi 0, %s295
      %s296 = sphi 0, %s293
      %s297 = sphi 0, %s296
      %s313 = sphi 0, %s297
      %s319 = sphi 0, %s321
      %s322 = sphi 0, %s319
      %s323 = sphi 0, %s322
      %s339 = sphi 0, %s323
      %s345 = sphi 0, %s347
      %s348 = sphi 0, %s345
      %s349 = sphi 0, %s348
      %s365 = sphi 0, %s349
      %s371 = sphi 0, %s373
      %s374 = sphi 0, %s371
      %s375 = sphi 0, %s374
      %s391 = sphi 0, %s375
      %s397 = sphi 0, %s399
      %s400 = sphi 0, %s397
      %s401 = sphi 0, %s400
      %s417 = sphi 0, %s401
      %s423 = sphi 0, %s425
      %s426 = sphi 0, %s423
      %s427 = sphi 0, %s426
      %s443 = sphi 0, %s427
      %s449 = sphi 0, %s451
      %s452 = sphi 0, %s449
      %s453 = sphi 0, %s452
      %s469 = sphi 0, %s453
      %s475 = sphi 0, %s477
      %s478 = sphi 0, %s475
      %s479 = sphi 0, %s478
      %s495 = sphi 0, %s479
      %s501 = sphi 0, %s503
      %s504 = sphi 0, %s501
      %s505 = sphi 0, %s504
      %s521 = sphi 0, %s505
      %s527 = sphi 0, %s529
      %s530 = sphi 0, %s527
      %s531 = sphi 0, %s530
      %s547 = sphi 0, %s531
      %s553 = sphi 0, %s555
      %s556 = sphi 0, %s553
      %s557 = sphi 0, %s556
      %s573 = sphi 0, %s557
      %s579 = sphi 0, %s581
      %s582 = sphi 0, %s579
      %s583 = sphi 0, %s582
      %s599 = sphi 0, %s583
      %s605 = sphi 0, %s607
      %s608 = sphi 0, %s605
      %s609 = sphi 0, %s608
      %s625 = sphi 0, %s609
      %s631 = sphi 0, %s633
      %s634 = sphi 0, %s631
      %s635 = sphi 0, %s634
      %s651 = sphi 0, %s635
      %s657 = sphi 0, %s659
      %s660 = sphi 0, %s657
      %s661 = sphi 0, %s660
      %s677 = sphi 0, %s661
      %s683 = sphi 0, %s685
      %s686 = sphi 0, %s683
      %s687 = sphi 0, %s686
      %s703 = sphi 0, %s687
      %s709 = sphi 0, %s711
      %s712 = sphi 0, %s709
      %s713 = sphi 0, %s712
      %s729 = sphi 0, %s713
      %s735 = sphi 0, %s737
      %s738 = sphi 0, %s735
      %s739 = sphi 0, %s738
      %s755 = sphi 0, %s739
      %s761 = sphi 0, %s763
      %s764 = sphi 0, %s761
      %s765 = sphi 0, %s764
      %s781 = sphi 0, %s765
      %s787 = sphi 0, %s789
      %s790 = sphi 0, %s787
      %s791 = sphi 0, %s790
      %s807 = sphi 0, %s791
    $region4: #{tpu_custom_call.1} parent=1 // loop_header_branch
      %40 = sbr.rel (%p38) target = $region8
    $region5: #{tpu_custom_call.1} parent=1 // loop_body
      %s42 = ssub.s32 %s37, 1
      %s43 = ssub.s32 %s37, 2
      %s50 = sadd.s32 1, %s45
      %p51 = scmp.ge.s32.totalorder %s50, 2
      %s52 = scalar_select %p51, 0, %s50
      %s53 = sadd.s32 1, %s44
      %s54 = scalar_select %p51, %s53, %s44
      %p55 = scmp.ge.s32.totalorder %s54, 2
      %s56 = scalar_select %p55, 0, %s54
      %s57 = ssub.s32 %s44, %s56
      %p58 = scmp.eq.s32.totalorder %s57, 0
      %s60 = sadd.s32 %s59, 1
      %s61 = scalar_select %p58, %s59, %s60
      %p64 = pneg %p58
      %p65 = scmp.eq.s32.totalorder %s37, 3
      %p66 = por %p64, %p65
      %p67 = scmp.ne.s32.totalorder %s59, %s62
      %p68 = scmp.eq.s32.totalorder %s37, 0
      %p69 = por %p67, %p68
      %p70 = scmp.ne.s32.totalorder %s59, %s62
      %p71 = scmp.eq.s32.totalorder %s42, 3
      %p72 = por %p70, %p71
      %p73 = scmp.ne.s32.totalorder %s62, %s63
      %p74 = scmp.eq.s32.totalorder %s42, 0
      %p75 = por %p73, %p74
      %p76 = scmp.ne.s32.totalorder %s62, %s63
      %p77 = scmp.eq.s32.totalorder %s43, 3
      %p78 = por %p76, %p77
      %p80 = scmp.ne.s32.totalorder %s63, %s79
      %p81 = scmp.eq.s32.totalorder %s43, 0
      %p82 = por %p80, %p81
      %s83 = ssub.s32 %s44, %s56
      %p84 = scmp.eq.s32.totalorder %s83, 0
      %s86 = sadd.s32 %s85, 1
      %s87 = scalar_select %p84, %s85, %s86
      %p90 = pneg %p84
      %p91 = scmp.eq.s32.totalorder %s37, 3
      %p92 = por %p90, %p91
      %p93 = scmp.ne.s32.totalorder %s85, %s88
      %p94 = scmp.eq.s32.totalorder %s37, 0
      %p95 = por %p93, %p94
      %p96 = scmp.ne.s32.totalorder %s85, %s88
      %p97 = scmp.eq.s32.totalorder %s42, 3
      %p98 = por %p96, %p97
      %p99 = scmp.ne.s32.totalorder %s88, %s89
      %p100 = scmp.eq.s32.totalorder %s42, 0
      %p101 = por %p99, %p100
      %p102 = scmp.ne.s32.totalorder %s88, %s89
      %p103 = scmp.eq.s32.totalorder %s43, 3
      %p104 = por %p102, %p103
      %p106 = scmp.ne.s32.totalorder %s89, %s105
      %p107 = scmp.eq.s32.totalorder %s43, 0
      %p108 = por %p106, %p107
      %s109 = ssub.s32 %s45, %s52
      %p110 = scmp.eq.s32.totalorder %s109, 0
      %s112 = sadd.s32 %s111, 1
      %s113 = scalar_select %p110, %s111, %s112
      %p116 = pneg %p110
      %p117 = scmp.eq.s32.totalorder %s37, 3
      %p118 = por %p116, %p117
      %p119 = scmp.ne.s32.totalorder %s111, %s114
      %p120 = scmp.eq.s32.totalorder %s37, 0
      %p121 = por %p119, %p120
      %p122 = scmp.ne.s32.totalorder %s111, %s114
      %p123 = scmp.eq.s32.totalorder %s42, 3
      %p124 = por %p122, %p123
      %p125 = scmp.ne.s32.totalorder %s114, %s115
      %p126 = scmp.eq.s32.totalorder %s42, 0
      %p127 = por %p125, %p126
      %p128 = scmp.ne.s32.totalorder %s114, %s115
      %p129 = scmp.eq.s32.totalorder %s43, 3
      %p130 = por %p128, %p129
      %p132 = scmp.ne.s32.totalorder %s115, %s131
      %p133 = scmp.eq.s32.totalorder %s43, 0
      %p134 = por %p132, %p133
      %s135 = ssub.s32 %s45, %s52
      %p136 = scmp.eq.s32.totalorder %s135, 0
      %s138 = sadd.s32 %s137, 1
      %s139 = scalar_select %p136, %s137, %s138
      %p142 = pneg %p136
      %p143 = scmp.eq.s32.totalorder %s37, 3
      %p144 = por %p142, %p143
      %p145 = scmp.ne.s32.totalorder %s137, %s140
      %p146 = scmp.eq.s32.totalorder %s37, 0
      %p147 = por %p145, %p146
      %p148 = scmp.ne.s32.totalorder %s137, %s140
      %p149 = scmp.eq.s32.totalorder %s42, 3
      %p150 = por %p148, %p149
      %p151 = scmp.ne.s32.totalorder %s140, %s141
      %p152 = scmp.eq.s32.totalorder %s42, 0
      %p153 = por %p151, %p152
      %p154 = scmp.ne.s32.totalorder %s140, %s141
      %p155 = scmp.eq.s32.totalorder %s43, 3
      %p156 = por %p154, %p155
      %p158 = scmp.ne.s32.totalorder %s141, %s157
      %p159 = scmp.eq.s32.totalorder %s43, 0
      %p160 = por %p158, %p159
      %s161 = ssub.s32 %s45, %s52
      %p162 = scmp.eq.s32.totalorder %s161, 0
      %s164 = sadd.s32 %s163, 1
      %s165 = scalar_select %p162, %s163, %s164
      %p168 = pneg %p162
      %p169 = scmp.eq.s32.totalorder %s37, 3
      %p170 = por %p168, %p169
      %p171 = scmp.ne.s32.totalorder %s163, %s166
      %p172 = scmp.eq.s32.totalorder %s37, 0
      %p173 = por %p171, %p172
      %p174 = scmp.ne.s32.totalorder %s163, %s166
      %p175 = scmp.eq.s32.totalorder %s42, 3
      %p176 = por %p174, %p175
      %p177 = scmp.ne.s32.totalorder %s166, %s167
      %p178 = scmp.eq.s32.totalorder %s42, 0
      %p179 = por %p177, %p178
      %p180 = scmp.ne.s32.totalorder %s166, %s167
      %p181 = scmp.eq.s32.totalorder %s43, 3
      %p182 = por %p180, %p181
      %p184 = scmp.ne.s32.totalorder %s167, %s183
      %p185 = scmp.eq.s32.totalorder %s43, 0
      %p186 = por %p184, %p185
      %s187 = ssub.s32 %s45, %s52
      %p188 = scmp.eq.s32.totalorder %s187, 0
      %s190 = sadd.s32 %s189, 1
      %s191 = scalar_select %p188, %s189, %s190
      %p194 = pneg %p188
      %p195 = scmp.eq.s32.totalorder %s37, 3
      %p196 = por %p194, %p195
      %p197 = scmp.ne.s32.totalorder %s189, %s192
      %p198 = scmp.eq.s32.totalorder %s37, 0
      %p199 = por %p197, %p198
      %p200 = scmp.ne.s32.totalorder %s189, %s192
      %p201 = scmp.eq.s32.totalorder %s42, 3
      %p202 = por %p200, %p201
      %p203 = scmp.ne.s32.totalorder %s192, %s193
      %p204 = scmp.eq.s32.totalorder %s42, 0
      %p205 = por %p203, %p204
      %p206 = scmp.ne.s32.totalorder %s192, %s193
      %p207 = scmp.eq.s32.totalorder %s43, 3
      %p208 = por %p206, %p207
      %p210 = scmp.ne.s32.totalorder %s193, %s209
      %p211 = scmp.eq.s32.totalorder %s43, 0
      %p212 = por %p210, %p211
      %s213 = ssub.s32 %s45, %s52
      %p214 = scmp.eq.s32.totalorder %s213, 0
      %s216 = sadd.s32 %s215, 1
      %s217 = scalar_select %p214, %s215, %s216
      %p220 = pneg %p214
      %p221 = scmp.eq.s32.totalorder %s37, 3
      %p222 = por %p220, %p221
      %p223 = scmp.ne.s32.totalorder %s215, %s218
      %p224 = scmp.eq.s32.totalorder %s37, 0
      %p225 = por %p223, %p224
      %p226 = scmp.ne.s32.totalorder %s215, %s218
      %p227 = scmp.eq.s32.totalorder %s42, 3
      %p228 = por %p226, %p227
      %p229 = scmp.ne.s32.totalorder %s218, %s219
      %p230 = scmp.eq.s32.totalorder %s42, 0
      %p231 = por %p229, %p230
      %p232 = scmp.ne.s32.totalorder %s218, %s219
      %p233 = scmp.eq.s32.totalorder %s43, 3
      %p234 = por %p232, %p233
      %p236 = scmp.ne.s32.totalorder %s219, %s235
      %p237 = scmp.eq.s32.totalorder %s43, 0
      %p238 = por %p236, %p237
      %s239 = ssub.s32 %s45, %s52
      %p240 = scmp.eq.s32.totalorder %s239, 0
      %s242 = sadd.s32 %s241, 1
      %s243 = scalar_select %p240, %s241, %s242
      %p246 = pneg %p240
      %p247 = scmp.eq.s32.totalorder %s37, 3
      %p248 = por %p246, %p247
      %p249 = scmp.ne.s32.totalorder %s241, %s244
      %p250 = scmp.eq.s32.totalorder %s37, 0
      %p251 = por %p249, %p250
      %p252 = scmp.ne.s32.totalorder %s241, %s244
      %p253 = scmp.eq.s32.totalorder %s42, 3
      %p254 = por %p252, %p253
      %p255 = scmp.ne.s32.totalorder %s244, %s245
      %p256 = scmp.eq.s32.totalorder %s42, 0
      %p257 = por %p255, %p256
      %p258 = scmp.ne.s32.totalorder %s244, %s245
      %p259 = scmp.eq.s32.totalorder %s43, 3
      %p260 = por %p258, %p259
      %p262 = scmp.ne.s32.totalorder %s245, %s261
      %p263 = scmp.eq.s32.totalorder %s43, 0
      %p264 = por %p262, %p263
      %s265 = ssub.s32 %s45, %s52
      %p266 = scmp.eq.s32.totalorder %s265, 0
      %s268 = sadd.s32 %s267, 1
      %s269 = scalar_select %p266, %s267, %s268
      %p272 = pneg %p266
      %p273 = scmp.eq.s32.totalorder %s37, 3
      %p274 = por %p272, %p273
      %p275 = scmp.ne.s32.totalorder %s267, %s270
      %p276 = scmp.eq.s32.totalorder %s37, 0
      %p277 = por %p275, %p276
      %p278 = scmp.ne.s32.totalorder %s267, %s270
      %p279 = scmp.eq.s32.totalorder %s42, 3
      %p280 = por %p278, %p279
      %p281 = scmp.ne.s32.totalorder %s270, %s271
      %p282 = scmp.eq.s32.totalorder %s42, 0
      %p283 = por %p281, %p282
      %p284 = scmp.ne.s32.totalorder %s270, %s271
      %p285 = scmp.eq.s32.totalorder %s43, 3
      %p286 = por %p284, %p285
      %p288 = scmp.ne.s32.totalorder %s271, %s287
      %p289 = scmp.eq.s32.totalorder %s43, 0
      %p290 = por %p288, %p289
      %s291 = ssub.s32 %s45, %s52
      %p292 = scmp.eq.s32.totalorder %s291, 0
      %s294 = sadd.s32 %s293, 1
      %s295 = scalar_select %p292, %s293, %s294
      %p298 = pneg %p292
      %p299 = scmp.eq.s32.totalorder %s37, 3
      %p300 = por %p298, %p299
      %p301 = scmp.ne.s32.totalorder %s293, %s296
      %p302 = scmp.eq.s32.totalorder %s37, 0
      %p303 = por %p301, %p302
      %p304 = scmp.ne.s32.totalorder %s293, %s296
      %p305 = scmp.eq.s32.totalorder %s42, 3
      %p306 = por %p304, %p305
      %p307 = scmp.ne.s32.totalorder %s296, %s297
      %p308 = scmp.eq.s32.totalorder %s42, 0
      %p309 = por %p307, %p308
      %p310 = scmp.ne.s32.totalorder %s296, %s297
      %p311 = scmp.eq.s32.totalorder %s43, 3
      %p312 = por %p310, %p311
      %p314 = scmp.ne.s32.totalorder %s297, %s313
      %p315 = scmp.eq.s32.totalorder %s43, 0
      %p316 = por %p314, %p315
      %s317 = ssub.s32 %s45, %s52
      %p318 = scmp.eq.s32.totalorder %s317, 0
      %s320 = sadd.s32 %s319, 1
      %s321 = scalar_select %p318, %s319, %s320
      %p324 = pneg %p318
      %p325 = scmp.eq.s32.totalorder %s37, 3
      %p326 = por %p324, %p325
      %p327 = scmp.ne.s32.totalorder %s319, %s322
      %p328 = scmp.eq.s32.totalorder %s37, 0
      %p329 = por %p327, %p328
      %p330 = scmp.ne.s32.totalorder %s319, %s322
      %p331 = scmp.eq.s32.totalorder %s42, 3
      %p332 = por %p330, %p331
      %p333 = scmp.ne.s32.totalorder %s322, %s323
      %p334 = scmp.eq.s32.totalorder %s42, 0
      %p335 = por %p333, %p334
      %p336 = scmp.ne.s32.totalorder %s322, %s323
      %p337 = scmp.eq.s32.totalorder %s43, 3
      %p338 = por %p336, %p337
      %p340 = scmp.ne.s32.totalorder %s323, %s339
      %p341 = scmp.eq.s32.totalorder %s43, 0
      %p342 = por %p340, %p341
      %s343 = ssub.s32 %s45, %s52
      %p344 = scmp.eq.s32.totalorder %s343, 0
      %s346 = sadd.s32 %s345, 1
      %s347 = scalar_select %p344, %s345, %s346
      %p350 = pneg %p344
      %p351 = scmp.eq.s32.totalorder %s37, 3
      %p352 = por %p350, %p351
      %p353 = scmp.ne.s32.totalorder %s345, %s348
      %p354 = scmp.eq.s32.totalorder %s37, 0
      %p355 = por %p353, %p354
      %p356 = scmp.ne.s32.totalorder %s345, %s348
      %p357 = scmp.eq.s32.totalorder %s42, 3
      %p358 = por %p356, %p357
      %p359 = scmp.ne.s32.totalorder %s348, %s349
      %p360 = scmp.eq.s32.totalorder %s42, 0
      %p361 = por %p359, %p360
      %p362 = scmp.ne.s32.totalorder %s348, %s349
      %p363 = scmp.eq.s32.totalorder %s43, 3
      %p364 = por %p362, %p363
      %p366 = scmp.ne.s32.totalorder %s349, %s365
      %p367 = scmp.eq.s32.totalorder %s43, 0
      %p368 = por %p366, %p367
      %s369 = ssub.s32 %s45, %s52
      %p370 = scmp.eq.s32.totalorder %s369, 0
      %s372 = sadd.s32 %s371, 1
      %s373 = scalar_select %p370, %s371, %s372
      %p376 = pneg %p370
      %p377 = scmp.eq.s32.totalorder %s37, 3
      %p378 = por %p376, %p377
      %p379 = scmp.ne.s32.totalorder %s371, %s374
      %p380 = scmp.eq.s32.totalorder %s37, 0
      %p381 = por %p379, %p380
      %p382 = scmp.ne.s32.totalorder %s371, %s374
      %p383 = scmp.eq.s32.totalorder %s42, 3
      %p384 = por %p382, %p383
      %p385 = scmp.ne.s32.totalorder %s374, %s375
      %p386 = scmp.eq.s32.totalorder %s42, 0
      %p387 = por %p385, %p386
      %p388 = scmp.ne.s32.totalorder %s374, %s375
      %p389 = scmp.eq.s32.totalorder %s43, 3
      %p390 = por %p388, %p389
      %p392 = scmp.ne.s32.totalorder %s375, %s391
      %p393 = scmp.eq.s32.totalorder %s43, 0
      %p394 = por %p392, %p393
      %s395 = ssub.s32 %s45, %s52
      %p396 = scmp.eq.s32.totalorder %s395, 0
      %s398 = sadd.s32 %s397, 1
      %s399 = scalar_select %p396, %s397, %s398
      %p402 = pneg %p396
      %p403 = scmp.eq.s32.totalorder %s37, 3
      %p404 = por %p402, %p403
      %p405 = scmp.ne.s32.totalorder %s397, %s400
      %p406 = scmp.eq.s32.totalorder %s37, 0
      %p407 = por %p405, %p406
      %p408 = scmp.ne.s32.totalorder %s397, %s400
      %p409 = scmp.eq.s32.totalorder %s42, 3
      %p410 = por %p408, %p409
      %p411 = scmp.ne.s32.totalorder %s400, %s401
      %p412 = scmp.eq.s32.totalorder %s42, 0
      %p413 = por %p411, %p412
      %p414 = scmp.ne.s32.totalorder %s400, %s401
      %p415 = scmp.eq.s32.totalorder %s43, 3
      %p416 = por %p414, %p415
      %p418 = scmp.ne.s32.totalorder %s401, %s417
      %p419 = scmp.eq.s32.totalorder %s43, 0
      %p420 = por %p418, %p419
      %s421 = ssub.s32 %s45, %s52
      %p422 = scmp.eq.s32.totalorder %s421, 0
      %s424 = sadd.s32 %s423, 1
      %s425 = scalar_select %p422, %s423, %s424
      %p428 = pneg %p422
      %p429 = scmp.eq.s32.totalorder %s37, 3
      %p430 = por %p428, %p429
      %p431 = scmp.ne.s32.totalorder %s423, %s426
      %p432 = scmp.eq.s32.totalorder %s37, 0
      %p433 = por %p431, %p432
      %p434 = scmp.ne.s32.totalorder %s423, %s426
      %p435 = scmp.eq.s32.totalorder %s42, 3
      %p436 = por %p434, %p435
      %p437 = scmp.ne.s32.totalorder %s426, %s427
      %p438 = scmp.eq.s32.totalorder %s42, 0
      %p439 = por %p437, %p438
      %p440 = scmp.ne.s32.totalorder %s426, %s427
      %p441 = scmp.eq.s32.totalorder %s43, 3
      %p442 = por %p440, %p441
      %p444 = scmp.ne.s32.totalorder %s427, %s443
      %p445 = scmp.eq.s32.totalorder %s43, 0
      %p446 = por %p444, %p445
      %s447 = ssub.s32 %s45, %s52
      %p448 = scmp.eq.s32.totalorder %s447, 0
      %s450 = sadd.s32 %s449, 1
      %s451 = scalar_select %p448, %s449, %s450
      %p454 = pneg %p448
      %p455 = scmp.eq.s32.totalorder %s37, 3
      %p456 = por %p454, %p455
      %p457 = scmp.ne.s32.totalorder %s449, %s452
      %p458 = scmp.eq.s32.totalorder %s37, 0
      %p459 = por %p457, %p458
      %p460 = scmp.ne.s32.totalorder %s449, %s452
      %p461 = scmp.eq.s32.totalorder %s42, 3
      %p462 = por %p460, %p461
      %p463 = scmp.ne.s32.totalorder %s452, %s453
      %p464 = scmp.eq.s32.totalorder %s42, 0
      %p465 = por %p463, %p464
      %p466 = scmp.ne.s32.totalorder %s452, %s453
      %p467 = scmp.eq.s32.totalorder %s43, 3
      %p468 = por %p466, %p467
      %p470 = scmp.ne.s32.totalorder %s453, %s469
      %p471 = scmp.eq.s32.totalorder %s43, 0
      %p472 = por %p470, %p471
      %s473 = ssub.s32 %s45, %s52
      %p474 = scmp.eq.s32.totalorder %s473, 0
      %s476 = sadd.s32 %s475, 1
      %s477 = scalar_select %p474, %s475, %s476
      %p480 = pneg %p474
      %p481 = scmp.eq.s32.totalorder %s37, 3
      %p482 = por %p480, %p481
      %p483 = scmp.ne.s32.totalorder %s475, %s478
      %p484 = scmp.eq.s32.totalorder %s37, 0
      %p485 = por %p483, %p484
      %p486 = scmp.ne.s32.totalorder %s475, %s478
      %p487 = scmp.eq.s32.totalorder %s42, 3
      %p488 = por %p486, %p487
      %p489 = scmp.ne.s32.totalorder %s478, %s479
      %p490 = scmp.eq.s32.totalorder %s42, 0
      %p491 = por %p489, %p490
      %p492 = scmp.ne.s32.totalorder %s478, %s479
      %p493 = scmp.eq.s32.totalorder %s43, 3
      %p494 = por %p492, %p493
      %p496 = scmp.ne.s32.totalorder %s479, %s495
      %p497 = scmp.eq.s32.totalorder %s43, 0
      %p498 = por %p496, %p497
      %s499 = ssub.s32 %s45, %s52
      %p500 = scmp.eq.s32.totalorder %s499, 0
      %s502 = sadd.s32 %s501, 1
      %s503 = scalar_select %p500, %s501, %s502
      %p506 = pneg %p500
      %p507 = scmp.eq.s32.totalorder %s37, 3
      %p508 = por %p506, %p507
      %p509 = scmp.ne.s32.totalorder %s501, %s504
      %p510 = scmp.eq.s32.totalorder %s37, 0
      %p511 = por %p509, %p510
      %p512 = scmp.ne.s32.totalorder %s501, %s504
      %p513 = scmp.eq.s32.totalorder %s42, 3
      %p514 = por %p512, %p513
      %p515 = scmp.ne.s32.totalorder %s504, %s505
      %p516 = scmp.eq.s32.totalorder %s42, 0
      %p517 = por %p515, %p516
      %p518 = scmp.ne.s32.totalorder %s504, %s505
      %p519 = scmp.eq.s32.totalorder %s43, 3
      %p520 = por %p518, %p519
      %p522 = scmp.ne.s32.totalorder %s505, %s521
      %p523 = scmp.eq.s32.totalorder %s43, 0
      %p524 = por %p522, %p523
      %s525 = ssub.s32 %s45, %s52
      %p526 = scmp.eq.s32.totalorder %s525, 0
      %s528 = sadd.s32 %s527, 1
      %s529 = scalar_select %p526, %s527, %s528
      %p532 = pneg %p526
      %p533 = scmp.eq.s32.totalorder %s37, 3
      %p534 = por %p532, %p533
      %p535 = scmp.ne.s32.totalorder %s527, %s530
      %p536 = scmp.eq.s32.totalorder %s37, 0
      %p537 = por %p535, %p536
      %p538 = scmp.ne.s32.totalorder %s527, %s530
      %p539 = scmp.eq.s32.totalorder %s42, 3
      %p540 = por %p538, %p539
      %p541 = scmp.ne.s32.totalorder %s530, %s531
      %p542 = scmp.eq.s32.totalorder %s42, 0
      %p543 = por %p541, %p542
      %p544 = scmp.ne.s32.totalorder %s530, %s531
      %p545 = scmp.eq.s32.totalorder %s43, 3
      %p546 = por %p544, %p545
      %p548 = scmp.ne.s32.totalorder %s531, %s547
      %p549 = scmp.eq.s32.totalorder %s43, 0
      %p550 = por %p548, %p549
      %s551 = ssub.s32 %s45, %s52
      %p552 = scmp.eq.s32.totalorder %s551, 0
      %s554 = sadd.s32 %s553, 1
      %s555 = scalar_select %p552, %s553, %s554
      %p558 = pneg %p552
      %p559 = scmp.eq.s32.totalorder %s37, 3
      %p560 = por %p558, %p559
      %p561 = scmp.ne.s32.totalorder %s553, %s556
      %p562 = scmp.eq.s32.totalorder %s37, 0
      %p563 = por %p561, %p562
      %p564 = scmp.ne.s32.totalorder %s553, %s556
      %p565 = scmp.eq.s32.totalorder %s42, 3
      %p566 = por %p564, %p565
      %p567 = scmp.ne.s32.totalorder %s556, %s557
      %p568 = scmp.eq.s32.totalorder %s42, 0
      %p569 = por %p567, %p568
      %p570 = scmp.ne.s32.totalorder %s556, %s557
      %p571 = scmp.eq.s32.totalorder %s43, 3
      %p572 = por %p570, %p571
      %p574 = scmp.ne.s32.totalorder %s557, %s573
      %p575 = scmp.eq.s32.totalorder %s43, 0
      %p576 = por %p574, %p575
      %s577 = ssub.s32 %s45, %s52
      %p578 = scmp.eq.s32.totalorder %s577, 0
      %s580 = sadd.s32 %s579, 1
      %s581 = scalar_select %p578, %s579, %s580
      %p584 = pneg %p578
      %p585 = scmp.eq.s32.totalorder %s37, 3
      %p586 = por %p584, %p585
      %p587 = scmp.ne.s32.totalorder %s579, %s582
      %p588 = scmp.eq.s32.totalorder %s37, 0
      %p589 = por %p587, %p588
      %p590 = scmp.ne.s32.totalorder %s579, %s582
      %p591 = scmp.eq.s32.totalorder %s42, 3
      %p592 = por %p590, %p591
      %p593 = scmp.ne.s32.totalorder %s582, %s583
      %p594 = scmp.eq.s32.totalorder %s42, 0
      %p595 = por %p593, %p594
      %p596 = scmp.ne.s32.totalorder %s582, %s583
      %p597 = scmp.eq.s32.totalorder %s43, 3
      %p598 = por %p596, %p597
      %p600 = scmp.ne.s32.totalorder %s583, %s599
      %p601 = scmp.eq.s32.totalorder %s43, 0
      %p602 = por %p600, %p601
      %s603 = ssub.s32 %s45, %s52
      %p604 = scmp.eq.s32.totalorder %s603, 0
      %s606 = sadd.s32 %s605, 1
      %s607 = scalar_select %p604, %s605, %s606
      %p610 = pneg %p604
      %p611 = scmp.eq.s32.totalorder %s37, 3
      %p612 = por %p610, %p611
      %p613 = scmp.ne.s32.totalorder %s605, %s608
      %p614 = scmp.eq.s32.totalorder %s37, 0
      %p615 = por %p613, %p614
      %p616 = scmp.ne.s32.totalorder %s605, %s608
      %p617 = scmp.eq.s32.totalorder %s42, 3
      %p618 = por %p616, %p617
      %p619 = scmp.ne.s32.totalorder %s608, %s609
      %p620 = scmp.eq.s32.totalorder %s42, 0
      %p621 = por %p619, %p620
      %p622 = scmp.ne.s32.totalorder %s608, %s609
      %p623 = scmp.eq.s32.totalorder %s43, 3
      %p624 = por %p622, %p623
      %p626 = scmp.ne.s32.totalorder %s609, %s625
      %p627 = scmp.eq.s32.totalorder %s43, 0
      %p628 = por %p626, %p627
      %s629 = ssub.s32 %s45, %s52
      %p630 = scmp.eq.s32.totalorder %s629, 0
      %s632 = sadd.s32 %s631, 1
      %s633 = scalar_select %p630, %s631, %s632
      %p636 = pneg %p630
      %p637 = scmp.eq.s32.totalorder %s37, 3
      %p638 = por %p636, %p637
      %p639 = scmp.ne.s32.totalorder %s631, %s634
      %p640 = scmp.eq.s32.totalorder %s37, 0
      %p641 = por %p639, %p640
      %p642 = scmp.ne.s32.totalorder %s631, %s634
      %p643 = scmp.eq.s32.totalorder %s42, 3
      %p644 = por %p642, %p643
      %p645 = scmp.ne.s32.totalorder %s634, %s635
      %p646 = scmp.eq.s32.totalorder %s42, 0
      %p647 = por %p645, %p646
      %p648 = scmp.ne.s32.totalorder %s634, %s635
      %p649 = scmp.eq.s32.totalorder %s43, 3
      %p650 = por %p648, %p649
      %p652 = scmp.ne.s32.totalorder %s635, %s651
      %p653 = scmp.eq.s32.totalorder %s43, 0
      %p654 = por %p652, %p653
      %s655 = ssub.s32 %s45, %s52
      %p656 = scmp.eq.s32.totalorder %s655, 0
      %s658 = sadd.s32 %s657, 1
      %s659 = scalar_select %p656, %s657, %s658
      %p662 = pneg %p656
      %p663 = scmp.eq.s32.totalorder %s37, 3
      %p664 = por %p662, %p663
      %p665 = scmp.ne.s32.totalorder %s657, %s660
      %p666 = scmp.eq.s32.totalorder %s37, 0
      %p667 = por %p665, %p666
      %p668 = scmp.ne.s32.totalorder %s657, %s660
      %p669 = scmp.eq.s32.totalorder %s42, 3
      %p670 = por %p668, %p669
      %p671 = scmp.ne.s32.totalorder %s660, %s661
      %p672 = scmp.eq.s32.totalorder %s42, 0
      %p673 = por %p671, %p672
      %p674 = scmp.ne.s32.totalorder %s660, %s661
      %p675 = scmp.eq.s32.totalorder %s43, 3
      %p676 = por %p674, %p675
      %p678 = scmp.ne.s32.totalorder %s661, %s677
      %p679 = scmp.eq.s32.totalorder %s43, 0
      %p680 = por %p678, %p679
      %s681 = ssub.s32 %s45, %s52
      %p682 = scmp.eq.s32.totalorder %s681, 0
      %s684 = sadd.s32 %s683, 1
      %s685 = scalar_select %p682, %s683, %s684
      %p688 = pneg %p682
      %p689 = scmp.eq.s32.totalorder %s37, 3
      %p690 = por %p688, %p689
      %p691 = scmp.ne.s32.totalorder %s683, %s686
      %p692 = scmp.eq.s32.totalorder %s37, 0
      %p693 = por %p691, %p692
      %p694 = scmp.ne.s32.totalorder %s683, %s686
      %p695 = scmp.eq.s32.totalorder %s42, 3
      %p696 = por %p694, %p695
      %p697 = scmp.ne.s32.totalorder %s686, %s687
      %p698 = scmp.eq.s32.totalorder %s42, 0
      %p699 = por %p697, %p698
      %p700 = scmp.ne.s32.totalorder %s686, %s687
      %p701 = scmp.eq.s32.totalorder %s43, 3
      %p702 = por %p700, %p701
      %p704 = scmp.ne.s32.totalorder %s687, %s703
      %p705 = scmp.eq.s32.totalorder %s43, 0
      %p706 = por %p704, %p705
      %s707 = ssub.s32 %s45, %s52
      %p708 = scmp.eq.s32.totalorder %s707, 0
      %s710 = sadd.s32 %s709, 1
      %s711 = scalar_select %p708, %s709, %s710
      %p714 = pneg %p708
      %p715 = scmp.eq.s32.totalorder %s37, 3
      %p716 = por %p714, %p715
      %p717 = scmp.ne.s32.totalorder %s709, %s712
      %p718 = scmp.eq.s32.totalorder %s37, 0
      %p719 = por %p717, %p718
      %p720 = scmp.ne.s32.totalorder %s709, %s712
      %p721 = scmp.eq.s32.totalorder %s42, 3
      %p722 = por %p720, %p721
      %p723 = scmp.ne.s32.totalorder %s712, %s713
      %p724 = scmp.eq.s32.totalorder %s42, 0
      %p725 = por %p723, %p724
      %p726 = scmp.ne.s32.totalorder %s712, %s713
      %p727 = scmp.eq.s32.totalorder %s43, 3
      %p728 = por %p726, %p727
      %p730 = scmp.ne.s32.totalorder %s713, %s729
      %p731 = scmp.eq.s32.totalorder %s43, 0
      %p732 = por %p730, %p731
      %s733 = ssub.s32 %s45, %s52
      %p734 = scmp.eq.s32.totalorder %s733, 0
      %s736 = sadd.s32 %s735, 1
      %s737 = scalar_select %p734, %s735, %s736
      %p740 = pneg %p734
      %p741 = scmp.eq.s32.totalorder %s37, 3
      %p742 = por %p740, %p741
      %p743 = scmp.ne.s32.totalorder %s735, %s738
      %p744 = scmp.eq.s32.totalorder %s37, 0
      %p745 = por %p743, %p744
      %p746 = scmp.ne.s32.totalorder %s735, %s738
      %p747 = scmp.eq.s32.totalorder %s42, 3
      %p748 = por %p746, %p747
      %p749 = scmp.ne.s32.totalorder %s738, %s739
      %p750 = scmp.eq.s32.totalorder %s42, 0
      %p751 = por %p749, %p750
      %p752 = scmp.ne.s32.totalorder %s738, %s739
      %p753 = scmp.eq.s32.totalorder %s43, 3
      %p754 = por %p752, %p753
      %p756 = scmp.ne.s32.totalorder %s739, %s755
      %p757 = scmp.eq.s32.totalorder %s43, 0
      %p758 = por %p756, %p757
      %s759 = ssub.s32 %s45, %s52
      %p760 = scmp.eq.s32.totalorder %s759, 0
      %s762 = sadd.s32 %s761, 1
      %s763 = scalar_select %p760, %s761, %s762
      %p766 = pneg %p760
      %p767 = scmp.eq.s32.totalorder %s37, 3
      %p768 = por %p766, %p767
      %p769 = scmp.ne.s32.totalorder %s761, %s764
      %p770 = scmp.eq.s32.totalorder %s37, 0
      %p771 = por %p769, %p770
      %p772 = scmp.ne.s32.totalorder %s761, %s764
      %p773 = scmp.eq.s32.totalorder %s42, 3
      %p774 = por %p772, %p773
      %p775 = scmp.ne.s32.totalorder %s764, %s765
      %p776 = scmp.eq.s32.totalorder %s42, 0
      %p777 = por %p775, %p776
      %p778 = scmp.ne.s32.totalorder %s764, %s765
      %p779 = scmp.eq.s32.totalorder %s43, 3
      %p780 = por %p778, %p779
      %p782 = scmp.ne.s32.totalorder %s765, %s781
      %p783 = scmp.eq.s32.totalorder %s43, 0
      %p784 = por %p782, %p783
      %s785 = ssub.s32 %s44, %s56
      %p786 = scmp.eq.s32.totalorder %s785, 0
      %s788 = sadd.s32 %s787, 1
      %s789 = scalar_select %p786, %s787, %s788
      %p792 = pneg %p786
      %p793 = scmp.eq.s32.totalorder %s37, 3
      %p794 = por %p792, %p793
      %p795 = scmp.ne.s32.totalorder %s787, %s790
      %p796 = scmp.eq.s32.totalorder %s37, 0
      %p797 = por %p795, %p796
      %p798 = scmp.ne.s32.totalorder %s787, %s790
      %p799 = scmp.eq.s32.totalorder %s42, 3
      %p800 = por %p798, %p799
      %p801 = scmp.ne.s32.totalorder %s790, %s791
      %p802 = scmp.eq.s32.totalorder %s42, 0
      %p803 = por %p801, %p802
      %p804 = scmp.ne.s32.totalorder %s790, %s791
      %p805 = scmp.eq.s32.totalorder %s43, 3
      %p806 = por %p804, %p805
      %p808 = scmp.ne.s32.totalorder %s791, %s807
      %p809 = scmp.eq.s32.totalorder %s43, 0
      %p810 = por %p808, %p809
      %p811 = scmp.le.s32.totalorder 1, %s37
      %p812 = scmp.lt.s32.totalorder %s37, 5
      %p813 = pnand %p811, %p812
      %p814 = pneg %p813
      // Predicated region
      $region9: #{tpu_custom_call.1} parent=5 // pred_check
        _
      $region10: #{tpu_custom_call.1} parent=5 // pred_check_branch
        %816 = sbr.rel (%p813) target = $region12
      $region11: #{tpu_custom_call.1} parent=5 // pred_region
        %s817 = ssub.s32 %s37, 1
      $region12: #{tpu_custom_call.1} parent=5 // pred_fallthru
        _
      %p818 = scmp.lt.s32.totalorder %s37, 4
      // Predicated region
      $region13: #{tpu_custom_call.1} parent=5 // pred_check
        %p819 = pneg %p818
      $region14: #{tpu_custom_call.1} parent=5 // pred_check_branch
        %821 = sbr.rel (%p819) target = $region16
      $region15: #{tpu_custom_call.1} parent=5 // pred_region
        // Predicated region
        $region17: #{tpu_custom_call.1} parent=15 // pred_check
          %p822 = pneg %p69
        $region18: #{tpu_custom_call.1} parent=15 // pred_check_branch
          %824 = sbr.rel (%p822) target = $region20
        $region19: #{tpu_custom_call.1} parent=15 // pred_region
          %p825 = scmp.lt.s32.totalorder %s44, 1
          %s826 = scalar_select %p825, %s44, 1
          %s827 = smul.addr %s826, 8
          %s828 = scalar_lea.vmem %s0, %s827
        $region20: #{tpu_custom_call.1} parent=15 // pred_fallthru
          _
        // Predicated region
        $region21: #{tpu_custom_call.1} parent=15 // pred_check
          %p829 = pneg %p95
        $region22: #{tpu_custom_call.1} parent=15 // pred_check_branch
          %831 = sbr.rel (%p829) target = $region24
        $region23: #{tpu_custom_call.1} parent=15 // pred_region
          %p832 = scmp.lt.s32.totalorder %s44, 1
          %s833 = scalar_select %p832, %s44, 1
          %s834 = smul.addr %s833, 8
          %s835 = scalar_lea.vmem %s1, %s834
        $region24: #{tpu_custom_call.1} parent=15 // pred_fallthru
          _
        // Predicated region
        $region25: #{tpu_custom_call.1} parent=15 // pred_check
          %p836 = pneg %p121
        $region26: #{tpu_custom_call.1} parent=15 // pred_check_branch
          %838 = sbr.rel (%p836) target = $region28
        $region27: #{tpu_custom_call.1} parent=15 // pred_region
          %p839 = scmp.lt.s32.totalorder %s45, 1
          %s840 = scalar_select %p839, %s45, 1
          %s841 = smul.addr %s840, 16
          %s842 = smul.addr %s841, 4
          %s843 = scalar_lea.vmem %s2, %s842
        $region28: #{tpu_custom_call.1} parent=15 // pred_fallthru
          _
        // Predicated region
        $region29: #{tpu_custom_call.1} parent=15 // pred_check
          %p844 = pneg %p147
        $region30: #{tpu_custom_call.1} parent=15 // pred_check_branch
          %846 = sbr.rel (%p844) target = $region32
        $region31: #{tpu_custom_call.1} parent=15 // pred_region
          %p847 = scmp.lt.s32.totalorder %s45, 1
          %s848 = scalar_select %p847, %s45, 1
          %s849 = smul.addr %s848, 4
          %s850 = scalar_lea.vmem %s3, %s849
        $region32: #{tpu_custom_call.1} parent=15 // pred_fallthru
          _
        // Predicated region
        $region33: #{tpu_custom_call.1} parent=15 // pred_check
          %p851 = pneg %p173
        $region34: #{tpu_custom_call.1} parent=15 // pred_check_branch
          %853 = sbr.rel (%p851) target = $region36
        $region35: #{tpu_custom_call.1} parent=15 // pred_region
          %p854 = scmp.lt.s32.totalorder %s45, 1
          %s855 = scalar_select %p854, %s45, 1
          %s856 = smul.addr %s855, 16
          %s857 = smul.addr %s856, 4
          %s858 = scalar_lea.vmem %s4, %s857
        $region36: #{tpu_custom_call.1} parent=15 // pred_fallthru
          _
        // Predicated region
        $region37: #{tpu_custom_call.1} parent=15 // pred_check
          %p859 = pneg %p199
        $region38: #{tpu_custom_call.1} parent=15 // pred_check_branch
          %861 = sbr.rel (%p859) target = $region40
        $region39: #{tpu_custom_call.1} parent=15 // pred_region
          %p862 = scmp.lt.s32.totalorder %s45, 1
          %s863 = scalar_select %p862, %s45, 1
          %s864 = smul.addr %s863, 4
          %s865 = scalar_lea.vmem %s5, %s864
        $region40: #{tpu_custom_call.1} parent=15 // pred_fallthru
          _
        // Predicated region
        $region41: #{tpu_custom_call.1} parent=15 // pred_check
          %p866 = pneg %p225
        $region42: #{tpu_custom_call.1} parent=15 // pred_check_branch
          %868 = sbr.rel (%p866) target = $region44
        $region43: #{tpu_custom_call.1} parent=15 // pred_region
          %p869 = scmp.lt.s32.totalorder %s45, 1
          %s870 = scalar_select %p869, %s45, 1
          %s871 = smul.addr %s870, 16
          %s872 = smul.addr %s871, 4
          %s873 = scalar_lea.vmem %s6, %s872
        $region44: #{tpu_custom_call.1} parent=15 // pred_fallthru
          _
        // Predicated region
        $region45: #{tpu_custom_call.1} parent=15 // pred_check
          %p874 = pneg %p251
        $region46: #{tpu_custom_call.1} parent=15 // pred_check_branch
          %876 = sbr.rel (%p874) target = $region48
        $region47: #{tpu_custom_call.1} parent=15 // pred_region
          %p877 = scmp.lt.s32.totalorder %s45, 1
          %s878 = scalar_select %p877, %s45, 1
          %s879 = smul.addr %s878, 4
          %s880 = scalar_lea.vmem %s7, %s879
        $region48: #{tpu_custom_call.1} parent=15 // pred_fallthru
          _
        // Predicated region
        $region49: #{tpu_custom_call.1} parent=15 // pred_check
          %p881 = pneg %p277
        $region50: #{tpu_custom_call.1} parent=15 // pred_check_branch
          %883 = sbr.rel (%p881) target = $region52
        $region51: #{tpu_custom_call.1} parent=15 // pred_region
          %p884 = scmp.lt.s32.totalorder %s45, 1
          %s885 = scalar_select %p884, %s45, 1
          %s886 = smul.addr %s885, 4
          %s887 = smul.addr %s886, 4
          %s888 = scalar_lea.vmem %s8, %s887
        $region52: #{tpu_custom_call.1} parent=15 // pred_fallthru
          _
        // Predicated region
        $region53: #{tpu_custom_call.1} parent=15 // pred_check
          %p889 = pneg %p303
        $region54: #{tpu_custom_call.1} parent=15 // pred_check_branch
          %891 = sbr.rel (%p889) target = $region56
        $region55: #{tpu_custom_call.1} parent=15 // pred_region
          %p892 = scmp.lt.s32.totalorder %s45, 1
          %s893 = scalar_select %p892, %s45, 1
          %s894 = scalar_lea.vmem %s9, %s893
        $region56: #{tpu_custom_call.1} parent=15 // pred_fallthru
          _
        // Predicated region
        $region57: #{tpu_custom_call.1} parent=15 // pred_check
          %p895 = pneg %p329
        $region58: #{tpu_custom_call.1} parent=15 // pred_check_branch
          %897 = sbr.rel (%p895) target = $region60
        $region59: #{tpu_custom_call.1} parent=15 // pred_region
          %p898 = scmp.lt.s32.totalorder %s45, 1
          %s899 = scalar_select %p898, %s45, 1
          %s900 = smul.addr %s899, 16
          %s901 = smul.addr %s900, 4
          %s902 = scalar_lea.vmem %s10, %s901
        $region60: #{tpu_custom_call.1} parent=15 // pred_fallthru
          _
        // Predicated region
        $region61: #{tpu_custom_call.1} parent=15 // pred_check
          %p903 = pneg %p355
        $region62: #{tpu_custom_call.1} parent=15 // pred_check_branch
          %905 = sbr.rel (%p903) target = $region64
        $region63: #{tpu_custom_call.1} parent=15 // pred_region
          %p906 = scmp.lt.s32.totalorder %s45, 1
          %s907 = scalar_select %p906, %s45, 1
          %s908 = smul.addr %s907, 4
          %s909 = scalar_lea.vmem %s11, %s908
        $region64: #{tpu_custom_call.1} parent=15 // pred_fallthru
          _
        // Predicated region
        $region65: #{tpu_custom_call.1} parent=15 // pred_check
          %p910 = pneg %p381
        $region66: #{tpu_custom_call.1} parent=15 // pred_check_branch
          %912 = sbr.rel (%p910) target = $region68
        $region67: #{tpu_custom_call.1} parent=15 // pred_region
          %p913 = scmp.lt.s32.totalorder %s45, 1
          %s914 = scalar_select %p913, %s45, 1
          %s915 = smul.addr %s914, 16
          %s916 = smul.addr %s915, 4
          %s917 = scalar_lea.vmem %s12, %s916
        $region68: #{tpu_custom_call.1} parent=15 // pred_fallthru
          _
        // Predicated region
        $region69: #{tpu_custom_call.1} parent=15 // pred_check
          %p918 = pneg %p407
        $region70: #{tpu_custom_call.1} parent=15 // pred_check_branch
          %920 = sbr.rel (%p918) target = $region72
        $region71: #{tpu_custom_call.1} parent=15 // pred_region
          %p921 = scmp.lt.s32.totalorder %s45, 1
          %s922 = scalar_select %p921, %s45, 1
          %s923 = smul.addr %s922, 4
          %s924 = scalar_lea.vmem %s13, %s923
        $region72: #{tpu_custom_call.1} parent=15 // pred_fallthru
          _
        // Predicated region
        $region73: #{tpu_custom_call.1} parent=15 // pred_check
          %p925 = pneg %p433
        $region74: #{tpu_custom_call.1} parent=15 // pred_check_branch
          %927 = sbr.rel (%p925) target = $region76
        $region75: #{tpu_custom_call.1} parent=15 // pred_region
          %p928 = scmp.lt.s32.totalorder %s45, 1
          %s929 = scalar_select %p928, %s45, 1
          %s930 = smul.addr %s929, 16
          %s931 = smul.addr %s930, 4
          %s932 = scalar_lea.vmem %s14, %s931
        $region76: #{tpu_custom_call.1} parent=15 // pred_fallthru
          _
        // Predicated region
        $region77: #{tpu_custom_call.1} parent=15 // pred_check
          %p933 = pneg %p459
        $region78: #{tpu_custom_call.1} parent=15 // pred_check_branch
          %935 = sbr.rel (%p933) target = $region80
        $region79: #{tpu_custom_call.1} parent=15 // pred_region
          %p936 = scmp.lt.s32.totalorder %s45, 1
          %s937 = scalar_select %p936, %s45, 1
          %s938 = smul.addr %s937, 4
          %s939 = scalar_lea.vmem %s15, %s938
        $region80: #{tpu_custom_call.1} parent=15 // pred_fallthru
          _
        // Predicated region
        $region81: #{tpu_custom_call.1} parent=15 // pred_check
          %p940 = pneg %p485
        $region82: #{tpu_custom_call.1} parent=15 // pred_check_branch
          %942 = sbr.rel (%p940) target = $region84
        $region83: #{tpu_custom_call.1} parent=15 // pred_region
          %p943 = scmp.lt.s32.totalorder %s45, 1
          %s944 = scalar_select %p943, %s45, 1
          %s945 = smul.addr %s944, 4
          %s946 = smul.addr %s945, 4
          %s947 = scalar_lea.vmem %s16, %s946
        $region84: #{tpu_custom_call.1} parent=15 // pred_fallthru
          _
        // Predicated region
        $region85: #{tpu_custom_call.1} parent=15 // pred_check
          %p948 = pneg %p511
        $region86: #{tpu_custom_call.1} parent=15 // pred_check_branch
          %950 = sbr.rel (%p948) target = $region88
        $region87: #{tpu_custom_call.1} parent=15 // pred_region
          %p951 = scmp.lt.s32.totalorder %s45, 1
          %s952 = scalar_select %p951, %s45, 1
          %s953 = scalar_lea.vmem %s17, %s952
        $region88: #{tpu_custom_call.1} parent=15 // pred_fallthru
          _
        // Predicated region
        $region89: #{tpu_custom_call.1} parent=15 // pred_check
          %p954 = pneg %p537
        $region90: #{tpu_custom_call.1} parent=15 // pred_check_branch
          %956 = sbr.rel (%p954) target = $region92
        $region91: #{tpu_custom_call.1} parent=15 // pred_region
          %p957 = scmp.lt.s32.totalorder %s45, 1
          %s958 = scalar_select %p957, %s45, 1
          %s959 = smul.addr %s958, 4
          %s960 = smul.addr %s959, 4
          %s961 = scalar_lea.vmem %s18, %s960
        $region92: #{tpu_custom_call.1} parent=15 // pred_fallthru
          _
        // Predicated region
        $region93: #{tpu_custom_call.1} parent=15 // pred_check
          %p962 = pneg %p563
        $region94: #{tpu_custom_call.1} parent=15 // pred_check_branch
          %964 = sbr.rel (%p962) target = $region96
        $region95: #{tpu_custom_call.1} parent=15 // pred_region
          %p965 = scmp.lt.s32.totalorder %s45, 1
          %s966 = scalar_select %p965, %s45, 1
          %s967 = scalar_lea.vmem %s19, %s966
        $region96: #{tpu_custom_call.1} parent=15 // pred_fallthru
          _
        // Predicated region
        $region97: #{tpu_custom_call.1} parent=15 // pred_check
          %p968 = pneg %p589
        $region98: #{tpu_custom_call.1} parent=15 // pred_check_branch
          %970 = sbr.rel (%p968) target = $region100
        $region99: #{tpu_custom_call.1} parent=15 // pred_region
          %p971 = scmp.lt.s32.totalorder %s45, 1
          %s972 = scalar_select %p971, %s45, 1
          %s973 = smul.addr %s972, 8
          %s974 = smul.addr %s973, 4
          %s975 = scalar_lea.vmem %s20, %s974
        $region100: #{tpu_custom_call.1} parent=15 // pred_fallthru
          _
        // Predicated region
        $region101: #{tpu_custom_call.1} parent=15 // pred_check
          %p976 = pneg %p615
        $region102: #{tpu_custom_call.1} parent=15 // pred_check_branch
          %978 = sbr.rel (%p976) target = $region104
        $region103: #{tpu_custom_call.1} parent=15 // pred_region
          %p979 = scmp.lt.s32.totalorder %s45, 1
          %s980 = scalar_select %p979, %s45, 1
          %s981 = scalar_lea.vmem %s21, %s980
        $region104: #{tpu_custom_call.1} parent=15 // pred_fallthru
          _
        // Predicated region
        $region105: #{tpu_custom_call.1} parent=15 // pred_check
          %p982 = pneg %p641
        $region106: #{tpu_custom_call.1} parent=15 // pred_check_branch
          %984 = sbr.rel (%p982) target = $region108
        $region107: #{tpu_custom_call.1} parent=15 // pred_region
          %p985 = scmp.lt.s32.totalorder %s45, 1
          %s986 = scalar_select %p985, %s45, 1
          %s987 = smul.addr %s986, 8
          %s988 = scalar_lea.vmem %s22, %s987
        $region108: #{tpu_custom_call.1} parent=15 // pred_fallthru
          _
        // Predicated region
        $region109: #{tpu_custom_call.1} parent=15 // pred_check
          %p989 = pneg %p667
        $region110: #{tpu_custom_call.1} parent=15 // pred_check_branch
          %991 = sbr.rel (%p989) target = $region112
        $region111: #{tpu_custom_call.1} parent=15 // pred_region
          %p992 = scmp.lt.s32.totalorder %s45, 1
          %s993 = scalar_select %p992, %s45, 1
          %s994 = smul.addr %s993, 8
          %s995 = scalar_lea.vmem %s23, %s994
        $region112: #{tpu_custom_call.1} parent=15 // pred_fallthru
          _
        // Predicated region
        $region113: #{tpu_custom_call.1} parent=15 // pred_check
          %p996 = pneg %p693
        $region114: #{tpu_custom_call.1} parent=15 // pred_check_branch
          %998 = sbr.rel (%p996) target = $region116
        $region115: #{tpu_custom_call.1} parent=15 // pred_region
          %p999 = scmp.lt.s32.totalorder %s45, 1
          %s1000 = scalar_select %p999, %s45, 1
          %s1001 = smul.addr %s1000, 8
          %s1002 = scalar_lea.vmem %s24, %s1001
        $region116: #{tpu_custom_call.1} parent=15 // pred_fallthru
          _
        // Predicated region
        $region117: #{tpu_custom_call.1} parent=15 // pred_check
          %p1003 = pneg %p719
        $region118: #{tpu_custom_call.1} parent=15 // pred_check_branch
          %1005 = sbr.rel (%p1003) target = $region120
        $region119: #{tpu_custom_call.1} parent=15 // pred_region
          %p1006 = scmp.lt.s32.totalorder %s45, 1
          %s1007 = scalar_select %p1006, %s45, 1
          %s1008 = smul.addr %s1007, 8
          %s1009 = scalar_lea.vmem %s25, %s1008
        $region120: #{tpu_custom_call.1} parent=15 // pred_fallthru
          _
        // Predicated region
        $region121: #{tpu_custom_call.1} parent=15 // pred_check
          %p1010 = pneg %p745
        $region122: #{tpu_custom_call.1} parent=15 // pred_check_branch
          %1012 = sbr.rel (%p1010) target = $region124
        $region123: #{tpu_custom_call.1} parent=15 // pred_region
          %p1013 = scmp.lt.s32.totalorder %s45, 1
          %s1014 = scalar_select %p1013, %s45, 1
          %s1015 = smul.addr %s1014, 8
          %s1016 = scalar_lea.vmem %s26, %s1015
        $region124: #{tpu_custom_call.1} parent=15 // pred_fallthru
          _
        // Predicated region
        $region125: #{tpu_custom_call.1} parent=15 // pred_check
          %p1017 = pneg %p771
        $region126: #{tpu_custom_call.1} parent=15 // pred_check_branch
          %1019 = sbr.rel (%p1017) target = $region128
        $region127: #{tpu_custom_call.1} parent=15 // pred_region
          %p1020 = scmp.lt.s32.totalorder %s45, 1
          %s1021 = scalar_select %p1020, %s45, 1
          %s1022 = smul.addr %s1021, 8
          %s1023 = scalar_lea.vmem %s27, %s1022
        $region128: #{tpu_custom_call.1} parent=15 // pred_fallthru
          _
      $region16: #{tpu_custom_call.1} parent=5 // pred_fallthru
        _
      %p1024 = scmp.le.s32.totalorder 1, %s37
      %p1025 = scmp.lt.s32.totalorder %s37, 5
      %p1026 = pnand %p1024, %p1025
      %p1027 = pneg %p1026
      // Predicated region
      $region129: #{tpu_custom_call.1} parent=5 // pred_check
        _
      $region130: #{tpu_custom_call.1} parent=5 // pred_check_branch
        %1029 = sbr.rel (%p1026) target = $region132
      $region131: #{tpu_custom_call.1} parent=5 // pred_region
        %s1030 = ssub.s32 %s37, 1
        %p1031 = scmp.lt.s32.totalorder %s46, 1
        %s1032 = scalar_select %p1031, %s46, 1
        %s1033 = smul.addr %s1032, 8
        %s1034 = scalar_lea.vmem %s0, %s1033
        %p1035 = pneg %p75
        %p1036 = pneg %p72
        %p1037 = scmp.lt.s32.totalorder %s46, 1
        %s1038 = scalar_select %p1037, %s46, 1
        %s1039 = smul.addr %s1038, 8
        %s1040 = scalar_lea.vmem %s1, %s1039
        %p1041 = pneg %p101
        %p1042 = pneg %p98
        %p1043 = scmp.lt.s32.totalorder %s47, 1
        %s1044 = scalar_select %p1043, %s47, 1
        %s1045 = smul.addr %s1044, 16
        %s1046 = smul.addr %s1045, 4
        %s1047 = scalar_lea.vmem %s2, %s1046
        %p1048 = pneg %p127
        %p1049 = pneg %p124
        %p1050 = scmp.lt.s32.totalorder %s47, 1
        %s1051 = scalar_select %p1050, %s47, 1
        %s1052 = smul.addr %s1051, 4
        %s1053 = scalar_lea.vmem %s3, %s1052
        %p1054 = pneg %p153
        %p1055 = pneg %p150
        %p1056 = scmp.lt.s32.totalorder %s47, 1
        %s1057 = scalar_select %p1056, %s47, 1
        %s1058 = smul.addr %s1057, 16
        %s1059 = smul.addr %s1058, 4
        %s1060 = scalar_lea.vmem %s4, %s1059
        %p1061 = pneg %p179
        %p1062 = pneg %p176
        %p1063 = scmp.lt.s32.totalorder %s47, 1
        %s1064 = scalar_select %p1063, %s47, 1
        %s1065 = smul.addr %s1064, 4
        %s1066 = scalar_lea.vmem %s5, %s1065
        %p1067 = pneg %p205
        %p1068 = pneg %p202
        %p1069 = scmp.lt.s32.totalorder %s47, 1
        %s1070 = scalar_select %p1069, %s47, 1
        %s1071 = smul.addr %s1070, 16
        %s1072 = smul.addr %s1071, 4
        %s1073 = scalar_lea.vmem %s6, %s1072
        %p1074 = pneg %p231
        %p1075 = pneg %p228
        %p1076 = scmp.lt.s32.totalorder %s47, 1
        %s1077 = scalar_select %p1076, %s47, 1
        %s1078 = smul.addr %s1077, 4
        %s1079 = scalar_lea.vmem %s7, %s1078
        %p1080 = pneg %p257
        %p1081 = pneg %p254
        %p1082 = scmp.lt.s32.totalorder %s47, 1
        %s1083 = scalar_select %p1082, %s47, 1
        %s1084 = smul.addr %s1083, 4
        %s1085 = smul.addr %s1084, 4
        %s1086 = scalar_lea.vmem %s8, %s1085
        %p1087 = pneg %p283
        %p1088 = pneg %p280
        %p1089 = scmp.lt.s32.totalorder %s47, 1
        %s1090 = scalar_select %p1089, %s47, 1
        %s1091 = scalar_lea.vmem %s9, %s1090
        %p1092 = pneg %p309
        %p1093 = pneg %p306
        %p1094 = scmp.lt.s32.totalorder %s47, 1
        %s1095 = scalar_select %p1094, %s47, 1
        %s1096 = smul.addr %s1095, 16
        %s1097 = smul.addr %s1096, 4
        %s1098 = scalar_lea.vmem %s10, %s1097
        %p1099 = pneg %p335
        %p1100 = pneg %p332
        %p1101 = scmp.lt.s32.totalorder %s47, 1
        %s1102 = scalar_select %p1101, %s47, 1
        %s1103 = smul.addr %s1102, 4
        %s1104 = scalar_lea.vmem %s11, %s1103
        %p1105 = pneg %p361
        %p1106 = pneg %p358
        %p1107 = scmp.lt.s32.totalorder %s47, 1
        %s1108 = scalar_select %p1107, %s47, 1
        %s1109 = smul.addr %s1108, 16
        %s1110 = smul.addr %s1109, 4
        %s1111 = scalar_lea.vmem %s12, %s1110
        %p1112 = pneg %p387
        %p1113 = pneg %p384
        %p1114 = scmp.lt.s32.totalorder %s47, 1
        %s1115 = scalar_select %p1114, %s47, 1
        %s1116 = smul.addr %s1115, 4
        %s1117 = scalar_lea.vmem %s13, %s1116
        %p1118 = pneg %p413
        %p1119 = pneg %p410
        %p1120 = scmp.lt.s32.totalorder %s47, 1
        %s1121 = scalar_select %p1120, %s47, 1
        %s1122 = smul.addr %s1121, 16
        %s1123 = smul.addr %s1122, 4
        %s1124 = scalar_lea.vmem %s14, %s1123
        %p1125 = pneg %p439
        %p1126 = pneg %p436
        %p1127 = scmp.lt.s32.totalorder %s47, 1
        %s1128 = scalar_select %p1127, %s47, 1
        %s1129 = smul.addr %s1128, 4
        %s1130 = scalar_lea.vmem %s15, %s1129
        %p1131 = pneg %p465
        %p1132 = pneg %p462
        %p1133 = scmp.lt.s32.totalorder %s47, 1
        %s1134 = scalar_select %p1133, %s47, 1
        %s1135 = smul.addr %s1134, 4
        %s1136 = smul.addr %s1135, 4
        %s1137 = scalar_lea.vmem %s16, %s1136
        %p1138 = pneg %p491
        %p1139 = pneg %p488
        %p1140 = scmp.lt.s32.totalorder %s47, 1
        %s1141 = scalar_select %p1140, %s47, 1
        %s1142 = scalar_lea.vmem %s17, %s1141
        %p1143 = pneg %p517
        %p1144 = pneg %p514
        %p1145 = scmp.lt.s32.totalorder %s47, 1
        %s1146 = scalar_select %p1145, %s47, 1
        %s1147 = smul.addr %s1146, 4
        %s1148 = smul.addr %s1147, 4
        %s1149 = scalar_lea.vmem %s18, %s1148
        %p1150 = pneg %p543
        %p1151 = pneg %p540
        %p1152 = scmp.lt.s32.totalorder %s47, 1
        %s1153 = scalar_select %p1152, %s47, 1
        %s1154 = scalar_lea.vmem %s19, %s1153
        %p1155 = pneg %p569
        %p1156 = pneg %p566
        %p1157 = scmp.lt.s32.totalorder %s47, 1
        %s1158 = scalar_select %p1157, %s47, 1
        %s1159 = smul.addr %s1158, 8
        %s1160 = smul.addr %s1159, 4
        %s1161 = scalar_lea.vmem %s20, %s1160
        %p1162 = pneg %p595
        %p1163 = pneg %p592
        %p1164 = scmp.lt.s32.totalorder %s47, 1
        %s1165 = scalar_select %p1164, %s47, 1
        %s1166 = scalar_lea.vmem %s21, %s1165
        %p1167 = pneg %p621
        %p1168 = pneg %p618
        %p1169 = scmp.lt.s32.totalorder %s47, 1
        %s1170 = scalar_select %p1169, %s47, 1
        %s1171 = smul.addr %s1170, 8
        %s1172 = scalar_lea.vmem %s22, %s1171
        %p1173 = pneg %p647
        %p1174 = pneg %p644
        %p1175 = scmp.lt.s32.totalorder %s47, 1
        %s1176 = scalar_select %p1175, %s47, 1
        %s1177 = smul.addr %s1176, 8
        %s1178 = scalar_lea.vmem %s23, %s1177
        %p1179 = pneg %p673
        %p1180 = pneg %p670
        %p1181 = scmp.lt.s32.totalorder %s47, 1
        %s1182 = scalar_select %p1181, %s47, 1
        %s1183 = smul.addr %s1182, 8
        %s1184 = scalar_lea.vmem %s24, %s1183
        %p1185 = pneg %p699
        %p1186 = pneg %p696
        %p1187 = scmp.lt.s32.totalorder %s47, 1
        %s1188 = scalar_select %p1187, %s47, 1
        %s1189 = smul.addr %s1188, 8
        %s1190 = scalar_lea.vmem %s25, %s1189
        %p1191 = pneg %p725
        %p1192 = pneg %p722
        %p1193 = scmp.lt.s32.totalorder %s47, 1
        %s1194 = scalar_select %p1193, %s47, 1
        %s1195 = smul.addr %s1194, 8
        %s1196 = scalar_lea.vmem %s26, %s1195
        %p1197 = pneg %p751
        %p1198 = pneg %p748
        %p1199 = scmp.lt.s32.totalorder %s47, 1
        %s1200 = scalar_select %p1199, %s47, 1
        %s1201 = smul.addr %s1200, 8
        %s1202 = scalar_lea.vmem %s27, %s1201
        %p1203 = pneg %p777
        %p1204 = pneg %p774
        %p1205 = pneg %p803
        %p1206 = pneg %p800
        %s1207 = sand.u32 %s790, 1
        %s1208 = scalar_lea.sflag [#allocation3], %s1207
        %s1209 = sand.u32 %s790, 1
        %s1210 = smul.addr %s1209, 8
        %s1211 = scalar_lea.vmem [#allocation2], %s1210
        %p1212 = scmp.lt.s32.totalorder %s46, 1
        %s1213 = scalar_select %p1212, %s46, 1
        %s1214 = smul.addr %s1213, 8
        %s1215 = scalar_lea.vmem %s0, %s1214
        %p1216 = scmp.lt.s32.totalorder %s46, 1
        %s1217 = scalar_select %p1216, %s46, 1
        %s1218 = smul.addr %s1217, 8
        %s1219 = scalar_lea.vmem %s1, %s1218
        %p1220 = scmp.lt.s32.totalorder %s47, 1
        %s1221 = scalar_select %p1220, %s47, 1
        %s1222 = smul.addr %s1221, 16
        %s1223 = smul.addr %s1222, 4
        %s1224 = scalar_lea.vmem %s2, %s1223
        %p1225 = scmp.lt.s32.totalorder %s47, 1
        %s1226 = scalar_select %p1225, %s47, 1
        %s1227 = smul.addr %s1226, 4
        %s1228 = scalar_lea.vmem %s3, %s1227
        %p1229 = scmp.lt.s32.totalorder %s47, 1
        %s1230 = scalar_select %p1229, %s47, 1
        %s1231 = smul.addr %s1230, 16
        %s1232 = smul.addr %s1231, 4
        %s1233 = scalar_lea.vmem %s4, %s1232
        %p1234 = scmp.lt.s32.totalorder %s47, 1
        %s1235 = scalar_select %p1234, %s47, 1
        %s1236 = smul.addr %s1235, 4
        %s1237 = scalar_lea.vmem %s5, %s1236
        %p1238 = scmp.lt.s32.totalorder %s47, 1
        %s1239 = scalar_select %p1238, %s47, 1
        %s1240 = smul.addr %s1239, 16
        %s1241 = smul.addr %s1240, 4
        %s1242 = scalar_lea.vmem %s6, %s1241
        %p1243 = scmp.lt.s32.totalorder %s47, 1
        %s1244 = scalar_select %p1243, %s47, 1
        %s1245 = smul.addr %s1244, 4
        %s1246 = scalar_lea.vmem %s7, %s1245
        %p1247 = scmp.lt.s32.totalorder %s47, 1
        %s1248 = scalar_select %p1247, %s47, 1
        %s1249 = smul.addr %s1248, 4
        %s1250 = smul.addr %s1249, 4
        %s1251 = scalar_lea.vmem %s8, %s1250
        %p1252 = scmp.lt.s32.totalorder %s47, 1
        %s1253 = scalar_select %p1252, %s47, 1
        %s1254 = scalar_lea.vmem %s9, %s1253
        %p1255 = scmp.lt.s32.totalorder %s47, 1
        %s1256 = scalar_select %p1255, %s47, 1
        %s1257 = smul.addr %s1256, 16
        %s1258 = smul.addr %s1257, 4
        %s1259 = scalar_lea.vmem %s10, %s1258
        %p1260 = scmp.lt.s32.totalorder %s47, 1
        %s1261 = scalar_select %p1260, %s47, 1
        %s1262 = smul.addr %s1261, 4
        %s1263 = scalar_lea.vmem %s11, %s1262
        %p1264 = scmp.lt.s32.totalorder %s47, 1
        %s1265 = scalar_select %p1264, %s47, 1
        %s1266 = smul.addr %s1265, 16
        %s1267 = smul.addr %s1266, 4
        %s1268 = scalar_lea.vmem %s12, %s1267
        %p1269 = scmp.lt.s32.totalorder %s47, 1
        %s1270 = scalar_select %p1269, %s47, 1
        %s1271 = smul.addr %s1270, 4
        %s1272 = scalar_lea.vmem %s13, %s1271
        %p1273 = scmp.lt.s32.totalorder %s47, 1
        %s1274 = scalar_select %p1273, %s47, 1
        %s1275 = smul.addr %s1274, 16
        %s1276 = smul.addr %s1275, 4
        %s1277 = scalar_lea.vmem %s14, %s1276
        %p1278 = scmp.lt.s32.totalorder %s47, 1
        %s1279 = scalar_select %p1278, %s47, 1
        %s1280 = smul.addr %s1279, 4
        %s1281 = scalar_lea.vmem %s15, %s1280
        %p1282 = scmp.lt.s32.totalorder %s47, 1
        %s1283 = scalar_select %p1282, %s47, 1
        %s1284 = smul.addr %s1283, 4
        %s1285 = smul.addr %s1284, 4
        %s1286 = scalar_lea.vmem %s16, %s1285
        %p1287 = scmp.lt.s32.totalorder %s47, 1
        %s1288 = scalar_select %p1287, %s47, 1
        %s1289 = scalar_lea.vmem %s17, %s1288
        %p1290 = scmp.lt.s32.totalorder %s47, 1
        %s1291 = scalar_select %p1290, %s47, 1
        %s1292 = smul.addr %s1291, 4
        %s1293 = smul.addr %s1292, 4
        %s1294 = scalar_lea.vmem %s18, %s1293
        %p1295 = scmp.lt.s32.totalorder %s47, 1
        %s1296 = scalar_select %p1295, %s47, 1
        %s1297 = scalar_lea.vmem %s19, %s1296
        %p1298 = scmp.lt.s32.totalorder %s47, 1
        %s1299 = scalar_select %p1298, %s47, 1
        %s1300 = smul.addr %s1299, 8
        %s1301 = smul.addr %s1300, 4
        %s1302 = scalar_lea.vmem %s20, %s1301
        %p1303 = scmp.lt.s32.totalorder %s47, 1
        %s1304 = scalar_select %p1303, %s47, 1
        %s1305 = scalar_lea.vmem %s21, %s1304
        %p1306 = scmp.lt.s32.totalorder %s47, 1
        %s1307 = scalar_select %p1306, %s47, 1
        %s1308 = smul.addr %s1307, 8
        %s1309 = scalar_lea.vmem %s22, %s1308
        %p1310 = scmp.lt.s32.totalorder %s47, 1
        %s1311 = scalar_select %p1310, %s47, 1
        %s1312 = smul.addr %s1311, 8
        %s1313 = scalar_lea.vmem %s23, %s1312
        %p1314 = scmp.lt.s32.totalorder %s47, 1
        %s1315 = scalar_select %p1314, %s47, 1
        %s1316 = smul.addr %s1315, 8
        %s1317 = scalar_lea.vmem %s24, %s1316
        %p1318 = scmp.lt.s32.totalorder %s47, 1
        %s1319 = scalar_select %p1318, %s47, 1
        %s1320 = smul.addr %s1319, 8
        %s1321 = scalar_lea.vmem %s25, %s1320
        %p1322 = scmp.lt.s32.totalorder %s47, 1
        %s1323 = scalar_select %p1322, %s47, 1
        %s1324 = smul.addr %s1323, 8
        %s1325 = scalar_lea.vmem %s26, %s1324
        %p1326 = scmp.lt.s32.totalorder %s47, 1
        %s1327 = scalar_select %p1326, %s47, 1
        %s1328 = smul.addr %s1327, 8
        %s1329 = scalar_lea.vmem %s27, %s1328
        %p1331 = scmp.eq.s32.totalorder %s47, 0
        // Predicated region
        $region133: #{tpu_custom_call.1} parent=131 // pred_check
          %p1332 = pneg %p1331
        $region134: #{tpu_custom_call.1} parent=131 // pred_check_branch
          %1334 = sbr.rel (%p1332) target = $region136
        $region135: #{tpu_custom_call.1} parent=131 // pred_region
          %v1335 = vld [vmem:[%s1215] sm:$0xff]
          %vm1336 = vcmask 261120
          %1337 = vst.msk [vmem:[%s1211] sm:$0xff] %vm1336, %v1335
        $region136: #{tpu_custom_call.1} parent=131 // pred_fallthru
          _
        %v1338 = vld [vmem:[%s1211] sm:$0xff]
        %v1339 = vld [vmem:[%s1219] sm:$0xff]
        %v1340 = vld [vmem:[%s1224] sm:$0xf]
        %v1341 = vld [vmem:[%s1224 + $0x4] sm:$0xf]
        %v1342 = vld [vmem:[%s1224 + $0x8] sm:$0xf]
        %v1343 = vld [vmem:[%s1224 + $0xc] sm:$0xf]
        %v1344 = vld [vmem:[%s1224 + $0x10] sm:$0xf]
        %v1345 = vld [vmem:[%s1224 + $0x14] sm:$0xf]
        %v1346 = vld [vmem:[%s1224 + $0x18] sm:$0xf]
        %v1347 = vld [vmem:[%s1224 + $0x1c] sm:$0xf]
        %v1348 = vld [vmem:[%s1224 + $0x20] sm:$0xf]
        %v1349 = vld [vmem:[%s1224 + $0x24] sm:$0xf]
        %v1350 = vld [vmem:[%s1224 + $0x28] sm:$0xf]
        %v1351 = vld [vmem:[%s1224 + $0x2c] sm:$0xf]
        %v1352 = vld [vmem:[%s1224 + $0x30] sm:$0xf]
        %v1353 = vld [vmem:[%s1224 + $0x34] sm:$0xf]
        %v1354 = vld [vmem:[%s1224 + $0x38] sm:$0xf]
        %v1355 = vld [vmem:[%s1224 + $0x3c] sm:$0xf]
        %v1356 = vld [vmem:[%s1228] sm:$0x1]
        %v1357 = vld [vmem:[%s1228 + $0x1] sm:$0x1]
        %v1358 = vld [vmem:[%s1228 + $0x2] sm:$0x1]
        %v1359 = vld [vmem:[%s1228 + $0x3] sm:$0x1]
        %v1360 = vld [vmem:[%s1233] sm:$0xf]
        %v1361 = vld [vmem:[%s1233 + $0x4] sm:$0xf]
        %v1362 = vld [vmem:[%s1233 + $0x8] sm:$0xf]
        %v1363 = vld [vmem:[%s1233 + $0xc] sm:$0xf]
        %v1364 = vld [vmem:[%s1233 + $0x10] sm:$0xf]
        %v1365 = vld [vmem:[%s1233 + $0x14] sm:$0xf]
        %v1366 = vld [vmem:[%s1233 + $0x18] sm:$0xf]
        %v1367 = vld [vmem:[%s1233 + $0x1c] sm:$0xf]
        %v1368 = vld [vmem:[%s1233 + $0x20] sm:$0xf]
        %v1369 = vld [vmem:[%s1233 + $0x24] sm:$0xf]
        %v1370 = vld [vmem:[%s1233 + $0x28] sm:$0xf]
        %v1371 = vld [vmem:[%s1233 + $0x2c] sm:$0xf]
        %v1372 = vld [vmem:[%s1233 + $0x30] sm:$0xf]
        %v1373 = vld [vmem:[%s1233 + $0x34] sm:$0xf]
        %v1374 = vld [vmem:[%s1233 + $0x38] sm:$0xf]
        %v1375 = vld [vmem:[%s1233 + $0x3c] sm:$0xf]
        %v1376 = vld [vmem:[%s1237] sm:$0x1]
        %v1377 = vld [vmem:[%s1237 + $0x1] sm:$0x1]
        %v1378 = vld [vmem:[%s1237 + $0x2] sm:$0x1]
        %v1379 = vld [vmem:[%s1237 + $0x3] sm:$0x1]
        %v1380 = vld [vmem:[%s1242] sm:$0xf]
        %v1381 = vld [vmem:[%s1242 + $0x4] sm:$0xf]
        %v1382 = vld [vmem:[%s1242 + $0x8] sm:$0xf]
        %v1383 = vld [vmem:[%s1242 + $0xc] sm:$0xf]
        %v1384 = vld [vmem:[%s1242 + $0x10] sm:$0xf]
        %v1385 = vld [vmem:[%s1242 + $0x14] sm:$0xf]
        %v1386 = vld [vmem:[%s1242 + $0x18] sm:$0xf]
        %v1387 = vld [vmem:[%s1242 + $0x1c] sm:$0xf]
        %v1388 = vld [vmem:[%s1242 + $0x20] sm:$0xf]
        %v1389 = vld [vmem:[%s1242 + $0x24] sm:$0xf]
        %v1390 = vld [vmem:[%s1242 + $0x28] sm:$0xf]
        %v1391 = vld [vmem:[%s1242 + $0x2c] sm:$0xf]
        %v1392 = vld [vmem:[%s1242 + $0x30] sm:$0xf]
        %v1393 = vld [vmem:[%s1242 + $0x34] sm:$0xf]
        %v1394 = vld [vmem:[%s1242 + $0x38] sm:$0xf]
        %v1395 = vld [vmem:[%s1242 + $0x3c] sm:$0xf]
        %v1396 = vld [vmem:[%s1246] sm:$0x1]
        %v1397 = vld [vmem:[%s1246 + $0x1] sm:$0x1]
        %v1398 = vld [vmem:[%s1246 + $0x2] sm:$0x1]
        %v1399 = vld [vmem:[%s1246 + $0x3] sm:$0x1]
        %v1400 = vld [vmem:[%s1251] sm:$0xf]
        %v1401 = vld [vmem:[%s1251 + $0x4] sm:$0xf]
        %v1402 = vld [vmem:[%s1251 + $0x8] sm:$0xf]
        %v1403 = vld [vmem:[%s1251 + $0xc] sm:$0xf]
        %v1404 = vld [vmem:[%s1254] sm:$0x1]
        %v1405 = vpack.c.bf16 %v1338, %v1338
        %v1410 = vperm.slane %v1356, 0
        %v1411 = vperm.slane %v1357, 0
        %v1412 = vperm.slane %v1358, 0
        %v1413 = vperm.slane %v1359, 0
        %v1422 = vunpack.c.l.b16 %v1340
        %v1423 = vunpack.c.l.b16 %v1341
        %v1424 = vunpack.c.l.b16 %v1342
        %v1425 = vunpack.c.l.b16 %v1343
        %v1426 = vpack.c.b16 %v1423, %v1422
        %v1427 = vpack.c.b16 %v1425, %v1424
        %vm1430 = vcmask 261120
        %v1432 = vsel %vm1430, %v1405, 0
        %1434 = vmatpush.bf16.msra.mxu0 0
        %1435 = vmatpush.bf16.msra.mxu0 0
        %1436 = vmatpush.bf16.msra.mxu0 0
        %1437 = vmatpush.bf16.msra.mxu0 0
        %1438 = vmatpush.bf16.msra.mxu0 0
        %1439 = vmatpush.bf16.msra.mxu0 0
        %1440 = vmatpush.bf16.msra.mxu0 %v1427
        %1441 = vmatpush.bf16.msra.mxu0 %v1426
        %1442 = vmatmul.bf16.gmra.mxu0 %v1432
        %v1443 = vpop.f32.mrf.mxu0
        %v1444 = vadd.f32 %v1410, %v1443
        %v1445 = vpop.f32.mrf.mxu0
        %1446 = vdwg.mxu0
        %v1451 = vunpack.c.l.b16 %v1344
        %v1452 = vunpack.c.l.b16 %v1345
        %v1453 = vunpack.c.l.b16 %v1346
        %v1454 = vunpack.c.l.b16 %v1347
        %v1455 = vpack.c.b16 %v1452, %v1451
        %v1456 = vpack.c.b16 %v1454, %v1453
        %1459 = vmatpush.bf16.msra.mxu0 0
        %1460 = vmatpush.bf16.msra.mxu0 0
        %1461 = vmatpush.bf16.msra.mxu0 0
        %1462 = vmatpush.bf16.msra.mxu0 0
        %1463 = vmatpush.bf16.msra.mxu0 0
        %1464 = vmatpush.bf16.msra.mxu0 0
        %1465 = vmatpush.bf16.msra.mxu0 %v1456
        %1466 = vmatpush.bf16.msra.mxu0 %v1455
        %1467 = vmatmul.bf16.gmra.mxu0 %v1432
        %v1468 = vpop.f32.mrf.mxu0
        %v1469 = vadd.f32 %v1411, %v1468
        %v1470 = vpop.f32.mrf.mxu0
        %1471 = vdwg.mxu0
        %v1476 = vunpack.c.l.b16 %v1348
        %v1477 = vunpack.c.l.b16 %v1349
        %v1478 = vunpack.c.l.b16 %v1350
        %v1479 = vunpack.c.l.b16 %v1351
        %v1480 = vpack.c.b16 %v1477, %v1476
        %v1481 = vpack.c.b16 %v1479, %v1478
        %1484 = vmatpush.bf16.msra.mxu0 0
        %1485 = vmatpush.bf16.msra.mxu0 0
        %1486 = vmatpush.bf16.msra.mxu0 0
        %1487 = vmatpush.bf16.msra.mxu0 0
        %1488 = vmatpush.bf16.msra.mxu0 0
        %1489 = vmatpush.bf16.msra.mxu0 0
        %1490 = vmatpush.bf16.msra.mxu0 %v1481
        %1491 = vmatpush.bf16.msra.mxu0 %v1480
        %1492 = vmatmul.bf16.gmra.mxu0 %v1432
        %v1493 = vpop.f32.mrf.mxu0
        %v1494 = vadd.f32 %v1412, %v1493
        %v1495 = vpop.f32.mrf.mxu0
        %1496 = vdwg.mxu0
        %v1501 = vunpack.c.l.b16 %v1352
        %v1502 = vunpack.c.l.b16 %v1353
        %v1503 = vunpack.c.l.b16 %v1354
        %v1504 = vunpack.c.l.b16 %v1355
        %v1505 = vpack.c.b16 %v1502, %v1501
        %v1506 = vpack.c.b16 %v1504, %v1503
        %1509 = vmatpush.bf16.msra.mxu0 0
        %1510 = vmatpush.bf16.msra.mxu0 0
        %1511 = vmatpush.bf16.msra.mxu0 0
        %1512 = vmatpush.bf16.msra.mxu0 0
        %1513 = vmatpush.bf16.msra.mxu0 0
        %1514 = vmatpush.bf16.msra.mxu0 0
        %1515 = vmatpush.bf16.msra.mxu0 %v1506
        %1516 = vmatpush.bf16.msra.mxu0 %v1505
        %1517 = vmatmul.bf16.gmra.mxu0 %v1432
        %v1518 = vpop.f32.mrf.mxu0
        %v1519 = vadd.f32 %v1413, %v1518
        %v1520 = vpop.f32.mrf.mxu0
        %1521 = vdwg.mxu0
        %v1526 = vperm.slane %v1376, 0
        %v1527 = vperm.slane %v1377, 0
        %v1528 = vperm.slane %v1378, 0
        %v1529 = vperm.slane %v1379, 0
        %v1538 = vunpack.c.l.b16 %v1360
        %v1539 = vunpack.c.l.b16 %v1361
        %v1540 = vunpack.c.l.b16 %v1362
        %v1541 = vunpack.c.l.b16 %v1363
        %v1542 = vpack.c.b16 %v1539, %v1538
        %v1543 = vpack.c.b16 %v1541, %v1540
        %1546 = vmatpush.bf16.msra.mxu0 0
        %1547 = vmatpush.bf16.msra.mxu0 0
        %1548 = vmatpush.bf16.msra.mxu0 0
        %1549 = vmatpush.bf16.msra.mxu0 0
        %1550 = vmatpush.bf16.msra.mxu0 0
        %1551 = vmatpush.bf16.msra.mxu0 0
        %1552 = vmatpush.bf16.msra.mxu0 %v1543
        %1553 = vmatpush.bf16.msra.mxu0 %v1542
        %1554 = vmatmul.bf16.gmra.mxu0 %v1432
        %v1555 = vpop.f32.mrf.mxu0
        %v1556 = vadd.f32 %v1526, %v1555
        %v1557 = vpop.f32.mrf.mxu0
        %1558 = vdwg.mxu0
        %v1563 = vunpack.c.l.b16 %v1364
        %v1564 = vunpack.c.l.b16 %v1365
        %v1565 = vunpack.c.l.b16 %v1366
        %v1566 = vunpack.c.l.b16 %v1367
        %v1567 = vpack.c.b16 %v1564, %v1563
        %v1568 = vpack.c.b16 %v1566, %v1565
        %1571 = vmatpush.bf16.msra.mxu0 0
        %1572 = vmatpush.bf16.msra.mxu0 0
        %1573 = vmatpush.bf16.msra.mxu0 0
        %1574 = vmatpush.bf16.msra.mxu0 0
        %1575 = vmatpush.bf16.msra.mxu0 0
        %1576 = vmatpush.bf16.msra.mxu0 0
        %1577 = vmatpush.bf16.msra.mxu0 %v1568
        %1578 = vmatpush.bf16.msra.mxu0 %v1567
        %1579 = vmatmul.bf16.gmra.mxu0 %v1432
        %v1580 = vpop.f32.mrf.mxu0
        %v1581 = vadd.f32 %v1527, %v1580
        %v1582 = vpop.f32.mrf.mxu0
        %1583 = vdwg.mxu0
        %v1588 = vunpack.c.l.b16 %v1368
        %v1589 = vunpack.c.l.b16 %v1369
        %v1590 = vunpack.c.l.b16 %v1370
        %v1591 = vunpack.c.l.b16 %v1371
        %v1592 = vpack.c.b16 %v1589, %v1588
        %v1593 = vpack.c.b16 %v1591, %v1590
        %1596 = vmatpush.bf16.msra.mxu0 0
        %1597 = vmatpush.bf16.msra.mxu0 0
        %1598 = vmatpush.bf16.msra.mxu0 0
        %1599 = vmatpush.bf16.msra.mxu0 0
        %1600 = vmatpush.bf16.msra.mxu0 0
        %1601 = vmatpush.bf16.msra.mxu0 0
        %1602 = vmatpush.bf16.msra.mxu0 %v1593
        %1603 = vmatpush.bf16.msra.mxu0 %v1592
        %1604 = vmatmul.bf16.gmra.mxu0 %v1432
        %v1605 = vpop.f32.mrf.mxu0
        %v1606 = vadd.f32 %v1528, %v1605
        %v1607 = vpop.f32.mrf.mxu0
        %1608 = vdwg.mxu0
        %v1613 = vunpack.c.l.b16 %v1372
        %v1614 = vunpack.c.l.b16 %v1373
        %v1615 = vunpack.c.l.b16 %v1374
        %v1616 = vunpack.c.l.b16 %v1375
        %v1617 = vpack.c.b16 %v1614, %v1613
        %v1618 = vpack.c.b16 %v1616, %v1615
        %1621 = vmatpush.bf16.msra.mxu0 0
        %1622 = vmatpush.bf16.msra.mxu0 0
        %1623 = vmatpush.bf16.msra.mxu0 0
        %1624 = vmatpush.bf16.msra.mxu0 0
        %1625 = vmatpush.bf16.msra.mxu0 0
        %1626 = vmatpush.bf16.msra.mxu0 0
        %1627 = vmatpush.bf16.msra.mxu0 %v1618
        %1628 = vmatpush.bf16.msra.mxu0 %v1617
        %1629 = vmatmul.bf16.gmra.mxu0 %v1432
        %v1630 = vpop.f32.mrf.mxu0
        %v1631 = vadd.f32 %v1529, %v1630
        %v1632 = vpop.f32.mrf.mxu0
        %1633 = vdwg.mxu0
        %v1638 = vperm.slane %v1396, 0
        %v1639 = vperm.slane %v1397, 0
        %v1640 = vperm.slane %v1398, 0
        %v1641 = vperm.slane %v1399, 0
        %v1650 = vunpack.c.l.b16 %v1380
        %v1651 = vunpack.c.l.b16 %v1381
        %v1652 = vunpack.c.l.b16 %v1382
        %v1653 = vunpack.c.l.b16 %v1383
        %v1654 = vpack.c.b16 %v1651, %v1650
        %v1655 = vpack.c.b16 %v1653, %v1652
        %1658 = vmatpush.bf16.msra.mxu0 0
        %1659 = vmatpush.bf16.msra.mxu0 0
        %1660 = vmatpush.bf16.msra.mxu0 0
        %1661 = vmatpush.bf16.msra.mxu0 0
        %1662 = vmatpush.bf16.msra.mxu0 0
        %1663 = vmatpush.bf16.msra.mxu0 0
        %1664 = vmatpush.bf16.msra.mxu0 %v1655
        %1665 = vmatpush.bf16.msra.mxu0 %v1654
        %1666 = vmatmul.bf16.gmra.mxu0 %v1432
        %v1667 = vpop.f32.mrf.mxu0
        %v1668 = vadd.f32 %v1638, %v1667
        %v1669 = vpop.f32.mrf.mxu0
        %1670 = vdwg.mxu0
        %v1675 = vunpack.c.l.b16 %v1384
        %v1676 = vunpack.c.l.b16 %v1385
        %v1677 = vunpack.c.l.b16 %v1386
        %v1678 = vunpack.c.l.b16 %v1387
        %v1679 = vpack.c.b16 %v1676, %v1675
        %v1680 = vpack.c.b16 %v1678, %v1677
        %1683 = vmatpush.bf16.msra.mxu0 0
        %1684 = vmatpush.bf16.msra.mxu0 0
        %1685 = vmatpush.bf16.msra.mxu0 0
        %1686 = vmatpush.bf16.msra.mxu0 0
        %1687 = vmatpush.bf16.msra.mxu0 0
        %1688 = vmatpush.bf16.msra.mxu0 0
        %1689 = vmatpush.bf16.msra.mxu0 %v1680
        %1690 = vmatpush.bf16.msra.mxu0 %v1679
        %1691 = vmatmul.bf16.gmra.mxu0 %v1432
        %v1692 = vpop.f32.mrf.mxu0
        %v1693 = vadd.f32 %v1639, %v1692
        %v1694 = vpop.f32.mrf.mxu0
        %1695 = vdwg.mxu0
        %v1700 = vunpack.c.l.b16 %v1388
        %v1701 = vunpack.c.l.b16 %v1389
        %v1702 = vunpack.c.l.b16 %v1390
        %v1703 = vunpack.c.l.b16 %v1391
        %v1704 = vpack.c.b16 %v1701, %v1700
        %v1705 = vpack.c.b16 %v1703, %v1702
        %1708 = vmatpush.bf16.msra.mxu0 0
        %1709 = vmatpush.bf16.msra.mxu0 0
        %1710 = vmatpush.bf16.msra.mxu0 0
        %1711 = vmatpush.bf16.msra.mxu0 0
        %1712 = vmatpush.bf16.msra.mxu0 0
        %1713 = vmatpush.bf16.msra.mxu0 0
        %1714 = vmatpush.bf16.msra.mxu0 %v1705
        %1715 = vmatpush.bf16.msra.mxu0 %v1704
        %1716 = vmatmul.bf16.gmra.mxu0 %v1432
        %v1717 = vpop.f32.mrf.mxu0
        %v1718 = vadd.f32 %v1640, %v1717
        %v1719 = vpop.f32.mrf.mxu0
        %1720 = vdwg.mxu0
        %v1725 = vunpack.c.l.b16 %v1392
        %v1726 = vunpack.c.l.b16 %v1393
        %v1727 = vunpack.c.l.b16 %v1394
        %v1728 = vunpack.c.l.b16 %v1395
        %v1729 = vpack.c.b16 %v1726, %v1725
        %v1730 = vpack.c.b16 %v1728, %v1727
        %1733 = vmatpush.bf16.msra.mxu0 0
        %1734 = vmatpush.bf16.msra.mxu0 0
        %1735 = vmatpush.bf16.msra.mxu0 0
        %1736 = vmatpush.bf16.msra.mxu0 0
        %1737 = vmatpush.bf16.msra.mxu0 0
        %1738 = vmatpush.bf16.msra.mxu0 0
        %1739 = vmatpush.bf16.msra.mxu0 %v1730
        %1740 = vmatpush.bf16.msra.mxu0 %v1729
        %1741 = vmatmul.bf16.gmra.mxu0 %v1432
        %v1742 = vpop.f32.mrf.mxu0
        %v1743 = vadd.f32 %v1641, %v1742
        %v1744 = vpop.f32.mrf.mxu0
        %1745 = vdwg.mxu0
        %v1746 = vpack.c.bf16 %v1444, %v1444
        %v1747 = vpack.c.bf16 %v1469, %v1469
        %v1748 = vpack.c.bf16 %v1494, %v1494
        %v1749 = vpack.c.bf16 %v1519, %v1519
        %v1750 = vpack.c.bf16 %v1556, %v1556
        %v1751 = vpack.c.bf16 %v1581, %v1581
        %v1752 = vpack.c.bf16 %v1606, %v1606
        %v1753 = vpack.c.bf16 %v1631, %v1631
        %vm1754 = vcmask 64512
        %v1756 = vsel %vm1754, %v1746, 0
        %v1759 = vsel %vm1754, %v1750, 0
        %1761 = vmatpush.bf16.xpose.msra.mxu0 0
        %1762 = vmatpush.bf16.xpose.msra.mxu0 0
        %1763 = vmatpush.bf16.xpose.msra.mxu0 0
        %1764 = vmatpush.bf16.xpose.msra.mxu0 0
        %1765 = vmatpush.bf16.xpose.msra.mxu0 0
        %1766 = vmatpush.bf16.xpose.msra.mxu0 0
        %1767 = vmatpush.bf16.xpose.msra.mxu0 0
        %1768 = vmatpush.bf16.xpose.msra.mxu0 %v1759
        %1769 = vmatmul.bf16.gmra.mxu0 %v1756
        %v1770 = vpop.f32.mrf.mxu0
        %v1771 = vadd.f32 0.0, %v1770
        %v1772 = vpop.f32.mrf.mxu0
        %1773 = vdwg.mxu0
        %v1775 = vsel %vm1754, %v1747, 0
        %v1778 = vsel %vm1754, %v1751, 0
        %1780 = vmatpush.bf16.xpose.msra.mxu0 0
        %1781 = vmatpush.bf16.xpose.msra.mxu0 0
        %1782 = vmatpush.bf16.xpose.msra.mxu0 0
        %1783 = vmatpush.bf16.xpose.msra.mxu0 0
        %1784 = vmatpush.bf16.xpose.msra.mxu0 0
        %1785 = vmatpush.bf16.xpose.msra.mxu0 0
        %1786 = vmatpush.bf16.xpose.msra.mxu0 0
        %1787 = vmatpush.bf16.xpose.msra.mxu0 %v1778
        %1788 = vmatmul.bf16.gmra.mxu0 %v1775
        %v1789 = vpop.f32.mrf.mxu0
        %v1790 = vadd.f32 0.0, %v1789
        %v1791 = vpop.f32.mrf.mxu0
        %1792 = vdwg.mxu0
        %v1794 = vsel %vm1754, %v1748, 0
        %v1797 = vsel %vm1754, %v1752, 0
        %1799 = vmatpush.bf16.xpose.msra.mxu0 0
        %1800 = vmatpush.bf16.xpose.msra.mxu0 0
        %1801 = vmatpush.bf16.xpose.msra.mxu0 0
        %1802 = vmatpush.bf16.xpose.msra.mxu0 0
        %1803 = vmatpush.bf16.xpose.msra.mxu0 0
        %1804 = vmatpush.bf16.xpose.msra.mxu0 0
        %1805 = vmatpush.bf16.xpose.msra.mxu0 0
        %1806 = vmatpush.bf16.xpose.msra.mxu0 %v1797
        %1807 = vmatmul.bf16.gmra.mxu0 %v1794
        %v1808 = vpop.f32.mrf.mxu0
        %v1809 = vadd.f32 0.0, %v1808
        %v1810 = vpop.f32.mrf.mxu0
        %1811 = vdwg.mxu0
        %v1813 = vsel %vm1754, %v1749, 0
        %v1816 = vsel %vm1754, %v1753, 0
        %1818 = vmatpush.bf16.xpose.msra.mxu0 0
        %1819 = vmatpush.bf16.xpose.msra.mxu0 0
        %1820 = vmatpush.bf16.xpose.msra.mxu0 0
        %1821 = vmatpush.bf16.xpose.msra.mxu0 0
        %1822 = vmatpush.bf16.xpose.msra.mxu0 0
        %1823 = vmatpush.bf16.xpose.msra.mxu0 0
        %1824 = vmatpush.bf16.xpose.msra.mxu0 0
        %1825 = vmatpush.bf16.xpose.msra.mxu0 %v1816
        %1826 = vmatmul.bf16.gmra.mxu0 %v1813
        %v1827 = vpop.f32.mrf.mxu0
        %v1828 = vadd.f32 0.0, %v1827
        %v1829 = vpop.f32.mrf.mxu0
        %1830 = vdwg.mxu0
        %v1831 = vsel %vm1754, %v1771, -inf
        %1832 = vmax.xlane.f32.xlu0 %v1831
        %v1833 = vpop.xlane.xlu0 %1832
        %v1834 = vsel %vm1754, %v1790, -inf
        %1835 = vmax.xlane.f32.xlu0 %v1834
        %v1836 = vpop.xlane.xlu0 %1835
        %v1837 = vsel %vm1754, %v1809, -inf
        %1838 = vmax.xlane.f32.xlu0 %v1837
        %v1839 = vpop.xlane.xlu0 %1838
        %v1840 = vsel %vm1754, %v1828, -inf
        %1841 = vmax.xlane.f32.xlu0 %v1840
        %v1842 = vpop.xlane.xlu0 %1841
        %v1843 = vsub.f32 %v1771, %v1833
        %v1844 = vsub.f32 %v1790, %v1836
        %v1845 = vsub.f32 %v1809, %v1839
        %v1846 = vsub.f32 %v1828, %v1842
        %v1847 = vmul.f32 %v1843, 1.442695
        %v1848 = vpow.pop %v1847
        %v1849 = vmul.f32 %v1844, 1.442695
        %v1850 = vpow.pop %v1849
        %v1851 = vmul.f32 %v1845, 1.442695
        %v1852 = vpow.pop %v1851
        %v1853 = vmul.f32 %v1846, 1.442695
        %v1854 = vpow.pop %v1853
        %v1855 = vsel %vm1754, %v1848, 0.0
        %1856 = vadd.xlane.f32.xlu0 %v1855
        %v1857 = vpop.xlane.xlu0 %1856
        %v1858 = vsel %vm1754, %v1850, 0.0
        %1859 = vadd.xlane.f32.xlu0 %v1858
        %v1860 = vpop.xlane.xlu0 %1859
        %v1861 = vsel %vm1754, %v1852, 0.0
        %1862 = vadd.xlane.f32.xlu0 %v1861
        %v1863 = vpop.xlane.xlu0 %1862
        %v1864 = vsel %vm1754, %v1854, 0.0
        %1865 = vadd.xlane.f32.xlu0 %v1864
        %v1866 = vpop.xlane.xlu0 %1865
        %v1867 = vrcp.pop %v1857
        %v1868 = vrcp.pop %v1860
        %v1869 = vrcp.pop %v1863
        %v1870 = vrcp.pop %v1866
        %v1871 = vmul.f32 %v1848, %v1867
        %v1872 = vmul.f32 %v1850, %v1868
        %v1873 = vmul.f32 %v1852, %v1869
        %v1874 = vmul.f32 %v1854, %v1870
        %v1875 = vpack.c.bf16 %v1871, %v1871
        %v1876 = vpack.c.bf16 %v1872, %v1872
        %v1877 = vpack.c.bf16 %v1873, %v1873
        %v1878 = vpack.c.bf16 %v1874, %v1874
        %v1879 = vpack.c.bf16 %v1668, %v1668
        %v1880 = vpack.c.bf16 %v1693, %v1693
        %v1881 = vpack.c.bf16 %v1718, %v1718
        %v1882 = vpack.c.bf16 %v1743, %v1743
        %v1884 = vsel %vm1754, %v1875, 0
        %vm1886 = vcmask 1043456
        %v1888 = vsel %vm1886, %v1879, 0
        %1890 = vmatpush.bf16.msra.mxu0 0
        %1891 = vmatpush.bf16.msra.mxu0 0
        %1892 = vmatpush.bf16.msra.mxu0 0
        %1893 = vmatpush.bf16.msra.mxu0 0
        %1894 = vmatpush.bf16.msra.mxu0 0
        %1895 = vmatpush.bf16.msra.mxu0 0
        %1896 = vmatpush.bf16.msra.mxu0 0
        %1897 = vmatpush.bf16.msra.mxu0 %v1888
        %1898 = vmatmul.bf16.gmra.mxu0 %v1884
        %v1899 = vpop.f32.mrf.mxu0
        %v1900 = vadd.f32 0.0, %v1899
        %v1901 = vpop.f32.mrf.mxu0
        %1902 = vdwg.mxu0
        %v1904 = vsel %vm1754, %v1876, 0
        %v1907 = vsel %vm1886, %v1880, 0
        %1909 = vmatpush.bf16.msra.mxu0 0
        %1910 = vmatpush.bf16.msra.mxu0 0
        %1911 = vmatpush.bf16.msra.mxu0 0
        %1912 = vmatpush.bf16.msra.mxu0 0
        %1913 = vmatpush.bf16.msra.mxu0 0
        %1914 = vmatpush.bf16.msra.mxu0 0
        %1915 = vmatpush.bf16.msra.mxu0 0
        %1916 = vmatpush.bf16.msra.mxu0 %v1907
        %1917 = vmatmul.bf16.gmra.mxu0 %v1904
        %v1918 = vpop.f32.mrf.mxu0
        %v1919 = vadd.f32 0.0, %v1918
        %v1920 = vpop.f32.mrf.mxu0
        %1921 = vdwg.mxu0
        %v1923 = vsel %vm1754, %v1877, 0
        %v1926 = vsel %vm1886, %v1881, 0
        %1928 = vmatpush.bf16.msra.mxu0 0
        %1929 = vmatpush.bf16.msra.mxu0 0
        %1930 = vmatpush.bf16.msra.mxu0 0
        %1931 = vmatpush.bf16.msra.mxu0 0
        %1932 = vmatpush.bf16.msra.mxu0 0
        %1933 = vmatpush.bf16.msra.mxu0 0
        %1934 = vmatpush.bf16.msra.mxu0 0
        %1935 = vmatpush.bf16.msra.mxu0 %v1926
        %1936 = vmatmul.bf16.gmra.mxu0 %v1923
        %v1937 = vpop.f32.mrf.mxu0
        %v1938 = vadd.f32 0.0, %v1937
        %v1939 = vpop.f32.mrf.mxu0
        %1940 = vdwg.mxu0
        %v1942 = vsel %vm1754, %v1878, 0
        %v1945 = vsel %vm1886, %v1882, 0
        %1947 = vmatpush.bf16.msra.mxu0 0
        %1948 = vmatpush.bf16.msra.mxu0 0
        %1949 = vmatpush.bf16.msra.mxu0 0
        %1950 = vmatpush.bf16.msra.mxu0 0
        %1951 = vmatpush.bf16.msra.mxu0 0
        %1952 = vmatpush.bf16.msra.mxu0 0
        %1953 = vmatpush.bf16.msra.mxu0 0
        %1954 = vmatpush.bf16.msra.mxu0 %v1945
        %1955 = vmatmul.bf16.gmra.mxu0 %v1942
        %v1956 = vpop.f32.mrf.mxu0
        %v1957 = vadd.f32 0.0, %v1956
        %v1958 = vpop.f32.mrf.mxu0
        %1959 = vdwg.mxu0
        %v1960 = vpack.c.bf16 %v1900, %v1900
        %v1961 = vpack.c.bf16 %v1919, %v1919
        %v1962 = vpack.c.bf16 %v1938, %v1938
        %v1963 = vpack.c.bf16 %v1957, %v1957
        %v1965 = vsel %vm1754, %v1960, 0
        %v1968 = vsel %vm1886, %v1400, 0
        %1970 = vmatpush.bf16.msra.mxu0 0
        %1971 = vmatpush.bf16.msra.mxu0 0
        %1972 = vmatpush.bf16.msra.mxu0 0
        %1973 = vmatpush.bf16.msra.mxu0 0
        %1974 = vmatpush.bf16.msra.mxu0 0
        %1975 = vmatpush.bf16.msra.mxu0 0
        %1976 = vmatpush.bf16.msra.mxu0 0
        %1977 = vmatpush.bf16.msra.mxu0 %v1968
        %1978 = vmatmul.bf16.gmra.mxu0 %v1965
        %v1979 = vpop.f32.mrf.mxu0
        %v1980 = vadd.f32 0.0, %v1979
        %v1981 = vpop.f32.mrf.mxu0
        %1982 = vdwg.mxu0
        %v1984 = vsel %vm1754, %v1961, 0
        %v1987 = vsel %vm1886, %v1401, 0
        %1989 = vmatpush.bf16.msra.mxu0 0
        %1990 = vmatpush.bf16.msra.mxu0 0
        %1991 = vmatpush.bf16.msra.mxu0 0
        %1992 = vmatpush.bf16.msra.mxu0 0
        %1993 = vmatpush.bf16.msra.mxu0 0
        %1994 = vmatpush.bf16.msra.mxu0 0
        %1995 = vmatpush.bf16.msra.mxu0 0
        %1996 = vmatpush.bf16.msra.mxu0 %v1987
        %1997 = vmatmul.bf16.gmra.mxu0 %v1984
        %v1998 = vpop.f32.mrf.mxu0
        %v1999 = vadd.f32 0.0, %v1998
        %v2000 = vpop.f32.mrf.mxu0
        %2001 = vdwg.mxu0
        %v2003 = vsel %vm1754, %v1962, 0
        %v2006 = vsel %vm1886, %v1402, 0
        %2008 = vmatpush.bf16.msra.mxu0 0
        %2009 = vmatpush.bf16.msra.mxu0 0
        %2010 = vmatpush.bf16.msra.mxu0 0
        %2011 = vmatpush.bf16.msra.mxu0 0
        %2012 = vmatpush.bf16.msra.mxu0 0
        %2013 = vmatpush.bf16.msra.mxu0 0
        %2014 = vmatpush.bf16.msra.mxu0 0
        %2015 = vmatpush.bf16.msra.mxu0 %v2006
        %2016 = vmatmul.bf16.gmra.mxu0 %v2003
        %v2017 = vpop.f32.mrf.mxu0
        %v2018 = vadd.f32 0.0, %v2017
        %v2019 = vpop.f32.mrf.mxu0
        %2020 = vdwg.mxu0
        %v2022 = vsel %vm1754, %v1963, 0
        %v2025 = vsel %vm1886, %v1403, 0
        %2027 = vmatpush.bf16.msra.mxu0 0
        %2028 = vmatpush.bf16.msra.mxu0 0
        %2029 = vmatpush.bf16.msra.mxu0 0
        %2030 = vmatpush.bf16.msra.mxu0 0
        %2031 = vmatpush.bf16.msra.mxu0 0
        %2032 = vmatpush.bf16.msra.mxu0 0
        %2033 = vmatpush.bf16.msra.mxu0 0
        %2034 = vmatpush.bf16.msra.mxu0 %v2025
        %2035 = vmatmul.bf16.gmra.mxu0 %v2022
        %v2036 = vpop.f32.mrf.mxu0
        %v2037 = vadd.f32 0.0, %v2036
        %v2038 = vpop.f32.mrf.mxu0
        %2039 = vdwg.mxu0
        %v2040 = vsel %vm1430, %v1980, 0.0
        %v2041 = vsel %vm1430, %v1999, 0.0
        %v2042 = vadd.f32 %v2040, %v2041
        %v2043 = vsel %vm1430, %v2018, 0.0
        %v2044 = vadd.f32 %v2042, %v2043
        %v2045 = vsel %vm1430, %v2037, 0.0
        %v2046 = vadd.f32 %v2044, %v2045
        %v2048 = vperm.slane %v1404, 0
        %v2050 = vadd.f32 %v2046, %v2048
        %v2051 = vadd.f32 %v1338, %v2050
        %v2052 = vld [vmem:[%s1309] sm:$0xff]
        %v2053 = vld [vmem:[%s1313] sm:$0xff]
        %v2054 = vsel %vm1430, %v2051, 0.0
        %2055 = vadd.xlane.f32.xlu0 %v2054
        %v2056 = vpop.xlane.xlu0 %2055
        %v2057 = vrot.slane %v2056, 4
        %v2058 = vadd.f32 %v2056, %v2057
        %v2059 = vrot.slane %v2058, 2
        %v2060 = vadd.f32 %v2058, %v2059
        %v2061 = vrot.slane %v2060, 1
        %v2062 = vadd.f32 %v2060, %v2061
        %s2063 = vtos %v2062
        %v2064 = vrcp.pop 256.0
        %v2065 = vmul.f32 256.0, %v2064
        %v2066 = vsub.f32 1.0, %v2065
        %v2067 = vmul.f32 %v2064, %v2066
        %v2068 = vadd.f32 %v2064, %v2067
        %vm2069 = vweird.f32 %v2064
        %v2070 = vsel %vm2069, %v2064, %v2068
        %s2071 = vtos %v2070
        %s2072 = smul.f32 %s2063, %s2071
        %v2073 = vstv %s2072
        %v2074 = vsub.f32 %v2051, %v2073
        %v2075 = vmul.f32 %v2074, %v2074
        %v2076 = vsel %vm1430, %v2075, 0.0
        %2077 = vadd.xlane.f32.xlu0 %v2076
        %v2078 = vpop.xlane.xlu0 %2077
        %v2079 = vrot.slane %v2078, 4
        %v2080 = vadd.f32 %v2078, %v2079
        %v2081 = vrot.slane %v2080, 2
        %v2082 = vadd.f32 %v2080, %v2081
        %v2083 = vrot.slane %v2082, 1
        %v2084 = vadd.f32 %v2082, %v2083
        %s2085 = vtos %v2084
        %v2086 = vrcp.pop 256.0
        %v2087 = vmul.f32 256.0, %v2086
        %v2088 = vsub.f32 1.0, %v2087
        %v2089 = vmul.f32 %v2086, %v2088
        %v2090 = vadd.f32 %v2086, %v2089
        %vm2091 = vweird.f32 %v2086
        %v2092 = vsel %vm2091, %v2086, %v2090
        %s2093 = vtos %v2092
        %s2094 = smul.f32 %s2085, %s2093
        %s2095 = sadd.f32 %s2094, 1e-06
        %v2096 = vstv %s2095
        %v2097 = vrsqrt.pop %v2096
        %v2098 = vmul.f32 %v2097, %v2096
        %v2099 = vmul.f32 %v2098, %v2097
        %v2100 = vmul.f32 0.5, %v2099
        %v2101 = vsub.f32 1.5, %v2100
        %v2102 = vmul.f32 %v2097, %v2101
        %vm2103 = vweird.f32 %v2096
        %vm2104 = vweird.f32 %v2097
        %vm2105 = vmor %vm2103, %vm2104
        %v2106 = vsel %vm2105, %v2097, %v2102
        %s2107 = vtos %v2106
        %v2108 = vstv %s2107
        %v2109 = vmul.f32 %v2074, %v2108
        %v2110 = vmul.f32 %v2109, %v2052
        %v2111 = vadd.f32 %v2110, %v2053
        %v2112 = vld [vmem:[%s1259] sm:$0xf]
        %v2113 = vld [vmem:[%s1259 + $0x4] sm:$0xf]
        %v2114 = vld [vmem:[%s1259 + $0x8] sm:$0xf]
        %v2115 = vld [vmem:[%s1259 + $0xc] sm:$0xf]
        %v2116 = vld [vmem:[%s1259 + $0x10] sm:$0xf]
        %v2117 = vld [vmem:[%s1259 + $0x14] sm:$0xf]
        %v2118 = vld [vmem:[%s1259 + $0x18] sm:$0xf]
        %v2119 = vld [vmem:[%s1259 + $0x1c] sm:$0xf]
        %v2120 = vld [vmem:[%s1259 + $0x20] sm:$0xf]
        %v2121 = vld [vmem:[%s1259 + $0x24] sm:$0xf]
        %v2122 = vld [vmem:[%s1259 + $0x28] sm:$0xf]
        %v2123 = vld [vmem:[%s1259 + $0x2c] sm:$0xf]
        %v2124 = vld [vmem:[%s1259 + $0x30] sm:$0xf]
        %v2125 = vld [vmem:[%s1259 + $0x34] sm:$0xf]
        %v2126 = vld [vmem:[%s1259 + $0x38] sm:$0xf]
        %v2127 = vld [vmem:[%s1259 + $0x3c] sm:$0xf]
        %v2128 = vld [vmem:[%s1263] sm:$0x1]
        %v2129 = vld [vmem:[%s1263 + $0x1] sm:$0x1]
        %v2130 = vld [vmem:[%s1263 + $0x2] sm:$0x1]
        %v2131 = vld [vmem:[%s1263 + $0x3] sm:$0x1]
        %v2132 = vld [vmem:[%s1268] sm:$0xf]
        %v2133 = vld [vmem:[%s1268 + $0x4] sm:$0xf]
        %v2134 = vld [vmem:[%s1268 + $0x8] sm:$0xf]
        %v2135 = vld [vmem:[%s1268 + $0xc] sm:$0xf]
        %v2136 = vld [vmem:[%s1268 + $0x10] sm:$0xf]
        %v2137 = vld [vmem:[%s1268 + $0x14] sm:$0xf]
        %v2138 = vld [vmem:[%s1268 + $0x18] sm:$0xf]
        %v2139 = vld [vmem:[%s1268 + $0x1c] sm:$0xf]
        %v2140 = vld [vmem:[%s1268 + $0x20] sm:$0xf]
        %v2141 = vld [vmem:[%s1268 + $0x24] sm:$0xf]
        %v2142 = vld [vmem:[%s1268 + $0x28] sm:$0xf]
        %v2143 = vld [vmem:[%s1268 + $0x2c] sm:$0xf]
        %v2144 = vld [vmem:[%s1268 + $0x30] sm:$0xf]
        %v2145 = vld [vmem:[%s1268 + $0x34] sm:$0xf]
        %v2146 = vld [vmem:[%s1268 + $0x38] sm:$0xf]
        %v2147 = vld [vmem:[%s1268 + $0x3c] sm:$0xf]
        %v2148 = vld [vmem:[%s1272] sm:$0x1]
        %v2149 = vld [vmem:[%s1272 + $0x1] sm:$0x1]
        %v2150 = vld [vmem:[%s1272 + $0x2] sm:$0x1]
        %v2151 = vld [vmem:[%s1272 + $0x3] sm:$0x1]
        %v2152 = vld [vmem:[%s1277] sm:$0xf]
        %v2153 = vld [vmem:[%s1277 + $0x4] sm:$0xf]
        %v2154 = vld [vmem:[%s1277 + $0x8] sm:$0xf]
        %v2155 = vld [vmem:[%s1277 + $0xc] sm:$0xf]
        %v2156 = vld [vmem:[%s1277 + $0x10] sm:$0xf]
        %v2157 = vld [vmem:[%s1277 + $0x14] sm:$0xf]
        %v2158 = vld [vmem:[%s1277 + $0x18] sm:$0xf]
        %v2159 = vld [vmem:[%s1277 + $0x1c] sm:$0xf]
        %v2160 = vld [vmem:[%s1277 + $0x20] sm:$0xf]
        %v2161 = vld [vmem:[%s1277 + $0x24] sm:$0xf]
        %v2162 = vld [vmem:[%s1277 + $0x28] sm:$0xf]
        %v2163 = vld [vmem:[%s1277 + $0x2c] sm:$0xf]
        %v2164 = vld [vmem:[%s1277 + $0x30] sm:$0xf]
        %v2165 = vld [vmem:[%s1277 + $0x34] sm:$0xf]
        %v2166 = vld [vmem:[%s1277 + $0x38] sm:$0xf]
        %v2167 = vld [vmem:[%s1277 + $0x3c] sm:$0xf]
        %v2168 = vld [vmem:[%s1281] sm:$0x1]
        %v2169 = vld [vmem:[%s1281 + $0x1] sm:$0x1]
        %v2170 = vld [vmem:[%s1281 + $0x2] sm:$0x1]
        %v2171 = vld [vmem:[%s1281 + $0x3] sm:$0x1]
        %v2172 = vld [vmem:[%s1286] sm:$0xf]
        %v2173 = vld [vmem:[%s1286 + $0x4] sm:$0xf]
        %v2174 = vld [vmem:[%s1286 + $0x8] sm:$0xf]
        %v2175 = vld [vmem:[%s1286 + $0xc] sm:$0xf]
        %v2176 = vld [vmem:[%s1289] sm:$0x1]
        %v2177 = vpack.c.bf16 %v2111, %v2111
        %v2178 = vpack.c.bf16 %v1339, %v1339
        %v2183 = vperm.slane %v2128, 0
        %v2184 = vperm.slane %v2129, 0
        %v2185 = vperm.slane %v2130, 0
        %v2186 = vperm.slane %v2131, 0
        %v2195 = vunpack.c.l.b16 %v2112
        %v2196 = vunpack.c.l.b16 %v2113
        %v2197 = vunpack.c.l.b16 %v2114
        %v2198 = vunpack.c.l.b16 %v2115
        %v2199 = vpack.c.b16 %v2196, %v2195
        %v2200 = vpack.c.b16 %v2198, %v2197
        %v2204 = vsel %vm1430, %v2177, 0
        %2206 = vmatpush.bf16.msra.mxu0 0
        %2207 = vmatpush.bf16.msra.mxu0 0
        %2208 = vmatpush.bf16.msra.mxu0 0
        %2209 = vmatpush.bf16.msra.mxu0 0
        %2210 = vmatpush.bf16.msra.mxu0 0
        %2211 = vmatpush.bf16.msra.mxu0 0
        %2212 = vmatpush.bf16.msra.mxu0 %v2200
        %2213 = vmatpush.bf16.msra.mxu0 %v2199
        %2214 = vmatmul.bf16.gmra.mxu0 %v2204
        %v2215 = vpop.f32.mrf.mxu0
        %v2216 = vadd.f32 %v2183, %v2215
        %v2217 = vpop.f32.mrf.mxu0
        %2218 = vdwg.mxu0
        %v2223 = vunpack.c.l.b16 %v2116
        %v2224 = vunpack.c.l.b16 %v2117
        %v2225 = vunpack.c.l.b16 %v2118
        %v2226 = vunpack.c.l.b16 %v2119
        %v2227 = vpack.c.b16 %v2224, %v2223
        %v2228 = vpack.c.b16 %v2226, %v2225
        %2231 = vmatpush.bf16.msra.mxu0 0
        %2232 = vmatpush.bf16.msra.mxu0 0
        %2233 = vmatpush.bf16.msra.mxu0 0
        %2234 = vmatpush.bf16.msra.mxu0 0
        %2235 = vmatpush.bf16.msra.mxu0 0
        %2236 = vmatpush.bf16.msra.mxu0 0
        %2237 = vmatpush.bf16.msra.mxu0 %v2228
        %2238 = vmatpush.bf16.msra.mxu0 %v2227
        %2239 = vmatmul.bf16.gmra.mxu0 %v2204
        %v2240 = vpop.f32.mrf.mxu0
        %v2241 = vadd.f32 %v2184, %v2240
        %v2242 = vpop.f32.mrf.mxu0
        %2243 = vdwg.mxu0
        %v2248 = vunpack.c.l.b16 %v2120
        %v2249 = vunpack.c.l.b16 %v2121
        %v2250 = vunpack.c.l.b16 %v2122
        %v2251 = vunpack.c.l.b16 %v2123
        %v2252 = vpack.c.b16 %v2249, %v2248
        %v2253 = vpack.c.b16 %v2251, %v2250
        %2256 = vmatpush.bf16.msra.mxu0 0
        %2257 = vmatpush.bf16.msra.mxu0 0
        %2258 = vmatpush.bf16.msra.mxu0 0
        %2259 = vmatpush.bf16.msra.mxu0 0
        %2260 = vmatpush.bf16.msra.mxu0 0
        %2261 = vmatpush.bf16.msra.mxu0 0
        %2262 = vmatpush.bf16.msra.mxu0 %v2253
        %2263 = vmatpush.bf16.msra.mxu0 %v2252
        %2264 = vmatmul.bf16.gmra.mxu0 %v2204
        %v2265 = vpop.f32.mrf.mxu0
        %v2266 = vadd.f32 %v2185, %v2265
        %v2267 = vpop.f32.mrf.mxu0
        %2268 = vdwg.mxu0
        %v2273 = vunpack.c.l.b16 %v2124
        %v2274 = vunpack.c.l.b16 %v2125
        %v2275 = vunpack.c.l.b16 %v2126
        %v2276 = vunpack.c.l.b16 %v2127
        %v2277 = vpack.c.b16 %v2274, %v2273
        %v2278 = vpack.c.b16 %v2276, %v2275
        %2281 = vmatpush.bf16.msra.mxu0 0
        %2282 = vmatpush.bf16.msra.mxu0 0
        %2283 = vmatpush.bf16.msra.mxu0 0
        %2284 = vmatpush.bf16.msra.mxu0 0
        %2285 = vmatpush.bf16.msra.mxu0 0
        %2286 = vmatpush.bf16.msra.mxu0 0
        %2287 = vmatpush.bf16.msra.mxu0 %v2278
        %2288 = vmatpush.bf16.msra.mxu0 %v2277
        %2289 = vmatmul.bf16.gmra.mxu0 %v2204
        %v2290 = vpop.f32.mrf.mxu0
        %v2291 = vadd.f32 %v2186, %v2290
        %v2292 = vpop.f32.mrf.mxu0
        %2293 = vdwg.mxu0
        %v2298 = vperm.slane %v2148, 0
        %v2299 = vperm.slane %v2149, 0
        %v2300 = vperm.slane %v2150, 0
        %v2301 = vperm.slane %v2151, 0
        %v2310 = vunpack.c.l.b16 %v2132
        %v2311 = vunpack.c.l.b16 %v2133
        %v2312 = vunpack.c.l.b16 %v2134
        %v2313 = vunpack.c.l.b16 %v2135
        %v2314 = vpack.c.b16 %v2311, %v2310
        %v2315 = vpack.c.b16 %v2313, %v2312
        %v2319 = vsel %vm1430, %v2178, 0
        %2321 = vmatpush.bf16.msra.mxu0 0
        %2322 = vmatpush.bf16.msra.mxu0 0
        %2323 = vmatpush.bf16.msra.mxu0 0
        %2324 = vmatpush.bf16.msra.mxu0 0
        %2325 = vmatpush.bf16.msra.mxu0 0
        %2326 = vmatpush.bf16.msra.mxu0 0
        %2327 = vmatpush.bf16.msra.mxu0 %v2315
        %2328 = vmatpush.bf16.msra.mxu0 %v2314
        %2329 = vmatmul.bf16.gmra.mxu0 %v2319
        %v2330 = vpop.f32.mrf.mxu0
        %v2331 = vadd.f32 %v2298, %v2330
        %v2332 = vpop.f32.mrf.mxu0
        %2333 = vdwg.mxu0
        %v2338 = vunpack.c.l.b16 %v2136
        %v2339 = vunpack.c.l.b16 %v2137
        %v2340 = vunpack.c.l.b16 %v2138
        %v2341 = vunpack.c.l.b16 %v2139
        %v2342 = vpack.c.b16 %v2339, %v2338
        %v2343 = vpack.c.b16 %v2341, %v2340
        %2346 = vmatpush.bf16.msra.mxu0 0
        %2347 = vmatpush.bf16.msra.mxu0 0
        %2348 = vmatpush.bf16.msra.mxu0 0
        %2349 = vmatpush.bf16.msra.mxu0 0
        %2350 = vmatpush.bf16.msra.mxu0 0
        %2351 = vmatpush.bf16.msra.mxu0 0
        %2352 = vmatpush.bf16.msra.mxu0 %v2343
        %2353 = vmatpush.bf16.msra.mxu0 %v2342
        %2354 = vmatmul.bf16.gmra.mxu0 %v2319
        %v2355 = vpop.f32.mrf.mxu0
        %v2356 = vadd.f32 %v2299, %v2355
        %v2357 = vpop.f32.mrf.mxu0
        %2358 = vdwg.mxu0
        %v2363 = vunpack.c.l.b16 %v2140
        %v2364 = vunpack.c.l.b16 %v2141
        %v2365 = vunpack.c.l.b16 %v2142
        %v2366 = vunpack.c.l.b16 %v2143
        %v2367 = vpack.c.b16 %v2364, %v2363
        %v2368 = vpack.c.b16 %v2366, %v2365
        %2371 = vmatpush.bf16.msra.mxu0 0
        %2372 = vmatpush.bf16.msra.mxu0 0
        %2373 = vmatpush.bf16.msra.mxu0 0
        %2374 = vmatpush.bf16.msra.mxu0 0
        %2375 = vmatpush.bf16.msra.mxu0 0
        %2376 = vmatpush.bf16.msra.mxu0 0
        %2377 = vmatpush.bf16.msra.mxu0 %v2368
        %2378 = vmatpush.bf16.msra.mxu0 %v2367
        %2379 = vmatmul.bf16.gmra.mxu0 %v2319
        %v2380 = vpop.f32.mrf.mxu0
        %v2381 = vadd.f32 %v2300, %v2380
        %v2382 = vpop.f32.mrf.mxu0
        %2383 = vdwg.mxu0
        %v2388 = vunpack.c.l.b16 %v2144
        %v2389 = vunpack.c.l.b16 %v2145
        %v2390 = vunpack.c.l.b16 %v2146
        %v2391 = vunpack.c.l.b16 %v2147
        %v2392 = vpack.c.b16 %v2389, %v2388
        %v2393 = vpack.c.b16 %v2391, %v2390
        %2396 = vmatpush.bf16.msra.mxu0 0
        %2397 = vmatpush.bf16.msra.mxu0 0
        %2398 = vmatpush.bf16.msra.mxu0 0
        %2399 = vmatpush.bf16.msra.mxu0 0
        %2400 = vmatpush.bf16.msra.mxu0 0
        %2401 = vmatpush.bf16.msra.mxu0 0
        %2402 = vmatpush.bf16.msra.mxu0 %v2393
        %2403 = vmatpush.bf16.msra.mxu0 %v2392
        %2404 = vmatmul.bf16.gmra.mxu0 %v2319
        %v2405 = vpop.f32.mrf.mxu0
        %v2406 = vadd.f32 %v2301, %v2405
        %v2407 = vpop.f32.mrf.mxu0
        %2408 = vdwg.mxu0
        %v2413 = vperm.slane %v2168, 0
        %v2414 = vperm.slane %v2169, 0
        %v2415 = vperm.slane %v2170, 0
        %v2416 = vperm.slane %v2171, 0
        %v2425 = vunpack.c.l.b16 %v2152
        %v2426 = vunpack.c.l.b16 %v2153
        %v2427 = vunpack.c.l.b16 %v2154
        %v2428 = vunpack.c.l.b16 %v2155
        %v2429 = vpack.c.b16 %v2426, %v2425
        %v2430 = vpack.c.b16 %v2428, %v2427
        %2433 = vmatpush.bf16.msra.mxu0 0
        %2434 = vmatpush.bf16.msra.mxu0 0
        %2435 = vmatpush.bf16.msra.mxu0 0
        %2436 = vmatpush.bf16.msra.mxu0 0
        %2437 = vmatpush.bf16.msra.mxu0 0
        %2438 = vmatpush.bf16.msra.mxu0 0
        %2439 = vmatpush.bf16.msra.mxu0 %v2430
        %2440 = vmatpush.bf16.msra.mxu0 %v2429
        %2441 = vmatmul.bf16.gmra.mxu0 %v2319
        %v2442 = vpop.f32.mrf.mxu0
        %v2443 = vadd.f32 %v2413, %v2442
        %v2444 = vpop.f32.mrf.mxu0
        %2445 = vdwg.mxu0
        %v2450 = vunpack.c.l.b16 %v2156
        %v2451 = vunpack.c.l.b16 %v2157
        %v2452 = vunpack.c.l.b16 %v2158
        %v2453 = vunpack.c.l.b16 %v2159
        %v2454 = vpack.c.b16 %v2451, %v2450
        %v2455 = vpack.c.b16 %v2453, %v2452
        %2458 = vmatpush.bf16.msra.mxu0 0
        %2459 = vmatpush.bf16.msra.mxu0 0
        %2460 = vmatpush.bf16.msra.mxu0 0
        %2461 = vmatpush.bf16.msra.mxu0 0
        %2462 = vmatpush.bf16.msra.mxu0 0
        %2463 = vmatpush.bf16.msra.mxu0 0
        %2464 = vmatpush.bf16.msra.mxu0 %v2455
        %2465 = vmatpush.bf16.msra.mxu0 %v2454
        %2466 = vmatmul.bf16.gmra.mxu0 %v2319
        %v2467 = vpop.f32.mrf.mxu0
        %v2468 = vadd.f32 %v2414, %v2467
        %v2469 = vpop.f32.mrf.mxu0
        %2470 = vdwg.mxu0
        %v2475 = vunpack.c.l.b16 %v2160
        %v2476 = vunpack.c.l.b16 %v2161
        %v2477 = vunpack.c.l.b16 %v2162
        %v2478 = vunpack.c.l.b16 %v2163
        %v2479 = vpack.c.b16 %v2476, %v2475
        %v2480 = vpack.c.b16 %v2478, %v2477
        %2483 = vmatpush.bf16.msra.mxu0 0
        %2484 = vmatpush.bf16.msra.mxu0 0
        %2485 = vmatpush.bf16.msra.mxu0 0
        %2486 = vmatpush.bf16.msra.mxu0 0
        %2487 = vmatpush.bf16.msra.mxu0 0
        %2488 = vmatpush.bf16.msra.mxu0 0
        %2489 = vmatpush.bf16.msra.mxu0 %v2480
        %2490 = vmatpush.bf16.msra.mxu0 %v2479
        %2491 = vmatmul.bf16.gmra.mxu0 %v2319
        %v2492 = vpop.f32.mrf.mxu0
        %v2493 = vadd.f32 %v2415, %v2492
        %v2494 = vpop.f32.mrf.mxu0
        %2495 = vdwg.mxu0
        %v2500 = vunpack.c.l.b16 %v2164
        %v2501 = vunpack.c.l.b16 %v2165
        %v2502 = vunpack.c.l.b16 %v2166
        %v2503 = vunpack.c.l.b16 %v2167
        %v2504 = vpack.c.b16 %v2501, %v2500
        %v2505 = vpack.c.b16 %v2503, %v2502
        %2508 = vmatpush.bf16.msra.mxu0 0
        %2509 = vmatpush.bf16.msra.mxu0 0
        %2510 = vmatpush.bf16.msra.mxu0 0
        %2511 = vmatpush.bf16.msra.mxu0 0
        %2512 = vmatpush.bf16.msra.mxu0 0
        %2513 = vmatpush.bf16.msra.mxu0 0
        %2514 = vmatpush.bf16.msra.mxu0 %v2505
        %2515 = vmatpush.bf16.msra.mxu0 %v2504
        %2516 = vmatmul.bf16.gmra.mxu0 %v2319
        %v2517 = vpop.f32.mrf.mxu0
        %v2518 = vadd.f32 %v2416, %v2517
        %v2519 = vpop.f32.mrf.mxu0
        %2520 = vdwg.mxu0
        %v2521 = vpack.c.bf16 %v2216, %v2216
        %v2522 = vpack.c.bf16 %v2241, %v2241
        %v2523 = vpack.c.bf16 %v2266, %v2266
        %v2524 = vpack.c.bf16 %v2291, %v2291
        %v2525 = vpack.c.bf16 %v2331, %v2331
        %v2526 = vpack.c.bf16 %v2356, %v2356
        %v2527 = vpack.c.bf16 %v2381, %v2381
        %v2528 = vpack.c.bf16 %v2406, %v2406
        %v2530 = vsel %vm1754, %v2521, 0
        %v2533 = vsel %vm1754, %v2525, 0
        %2535 = vmatpush.bf16.xpose.msra.mxu0 0
        %2536 = vmatpush.bf16.xpose.msra.mxu0 0
        %2537 = vmatpush.bf16.xpose.msra.mxu0 0
        %2538 = vmatpush.bf16.xpose.msra.mxu0 0
        %2539 = vmatpush.bf16.xpose.msra.mxu0 0
        %2540 = vmatpush.bf16.xpose.msra.mxu0 0
        %2541 = vmatpush.bf16.xpose.msra.mxu0 0
        %2542 = vmatpush.bf16.xpose.msra.mxu0 %v2533
        %2543 = vmatmul.bf16.gmra.mxu0 %v2530
        %v2544 = vpop.f32.mrf.mxu0
        %v2545 = vadd.f32 0.0, %v2544
        %v2546 = vpop.f32.mrf.mxu0
        %2547 = vdwg.mxu0
        %v2549 = vsel %vm1754, %v2522, 0
        %v2552 = vsel %vm1754, %v2526, 0
        %2554 = vmatpush.bf16.xpose.msra.mxu0 0
        %2555 = vmatpush.bf16.xpose.msra.mxu0 0
        %2556 = vmatpush.bf16.xpose.msra.mxu0 0
        %2557 = vmatpush.bf16.xpose.msra.mxu0 0
        %2558 = vmatpush.bf16.xpose.msra.mxu0 0
        %2559 = vmatpush.bf16.xpose.msra.mxu0 0
        %2560 = vmatpush.bf16.xpose.msra.mxu0 0
        %2561 = vmatpush.bf16.xpose.msra.mxu0 %v2552
        %2562 = vmatmul.bf16.gmra.mxu0 %v2549
        %v2563 = vpop.f32.mrf.mxu0
        %v2564 = vadd.f32 0.0, %v2563
        %v2565 = vpop.f32.mrf.mxu0
        %2566 = vdwg.mxu0
        %v2568 = vsel %vm1754, %v2523, 0
        %v2571 = vsel %vm1754, %v2527, 0
        %2573 = vmatpush.bf16.xpose.msra.mxu0 0
        %2574 = vmatpush.bf16.xpose.msra.mxu0 0
        %2575 = vmatpush.bf16.xpose.msra.mxu0 0
        %2576 = vmatpush.bf16.xpose.msra.mxu0 0
        %2577 = vmatpush.bf16.xpose.msra.mxu0 0
        %2578 = vmatpush.bf16.xpose.msra.mxu0 0
        %2579 = vmatpush.bf16.xpose.msra.mxu0 0
        %2580 = vmatpush.bf16.xpose.msra.mxu0 %v2571
        %2581 = vmatmul.bf16.gmra.mxu0 %v2568
        %v2582 = vpop.f32.mrf.mxu0
        %v2583 = vadd.f32 0.0, %v2582
        %v2584 = vpop.f32.mrf.mxu0
        %2585 = vdwg.mxu0
        %v2587 = vsel %vm1754, %v2524, 0
        %v2590 = vsel %vm1754, %v2528, 0
        %2592 = vmatpush.bf16.xpose.msra.mxu0 0
        %2593 = vmatpush.bf16.xpose.msra.mxu0 0
        %2594 = vmatpush.bf16.xpose.msra.mxu0 0
        %2595 = vmatpush.bf16.xpose.msra.mxu0 0
        %2596 = vmatpush.bf16.xpose.msra.mxu0 0
        %2597 = vmatpush.bf16.xpose.msra.mxu0 0
        %2598 = vmatpush.bf16.xpose.msra.mxu0 0
        %2599 = vmatpush.bf16.xpose.msra.mxu0 %v2590
        %2600 = vmatmul.bf16.gmra.mxu0 %v2587
        %v2601 = vpop.f32.mrf.mxu0
        %v2602 = vadd.f32 0.0, %v2601
        %v2603 = vpop.f32.mrf.mxu0
        %2604 = vdwg.mxu0
        %v2605 = vsel %vm1754, %v2545, -inf
        %2606 = vmax.xlane.f32.xlu0 %v2605
        %v2607 = vpop.xlane.xlu0 %2606
        %v2608 = vsel %vm1754, %v2564, -inf
        %2609 = vmax.xlane.f32.xlu0 %v2608
        %v2610 = vpop.xlane.xlu0 %2609
        %v2611 = vsel %vm1754, %v2583, -inf
        %2612 = vmax.xlane.f32.xlu0 %v2611
        %v2613 = vpop.xlane.xlu0 %2612
        %v2614 = vsel %vm1754, %v2602, -inf
        %2615 = vmax.xlane.f32.xlu0 %v2614
        %v2616 = vpop.xlane.xlu0 %2615
        %v2617 = vsub.f32 %v2545, %v2607
        %v2618 = vsub.f32 %v2564, %v2610
        %v2619 = vsub.f32 %v2583, %v2613
        %v2620 = vsub.f32 %v2602, %v2616
        %v2621 = vmul.f32 %v2617, 1.442695
        %v2622 = vpow.pop %v2621
        %v2623 = vmul.f32 %v2618, 1.442695
        %v2624 = vpow.pop %v2623
        %v2625 = vmul.f32 %v2619, 1.442695
        %v2626 = vpow.pop %v2625
        %v2627 = vmul.f32 %v2620, 1.442695
        %v2628 = vpow.pop %v2627
        %v2629 = vsel %vm1754, %v2622, 0.0
        %2630 = vadd.xlane.f32.xlu0 %v2629
        %v2631 = vpop.xlane.xlu0 %2630
        %v2632 = vsel %vm1754, %v2624, 0.0
        %2633 = vadd.xlane.f32.xlu0 %v2632
        %v2634 = vpop.xlane.xlu0 %2633
        %v2635 = vsel %vm1754, %v2626, 0.0
        %2636 = vadd.xlane.f32.xlu0 %v2635
        %v2637 = vpop.xlane.xlu0 %2636
        %v2638 = vsel %vm1754, %v2628, 0.0
        %2639 = vadd.xlane.f32.xlu0 %v2638
        %v2640 = vpop.xlane.xlu0 %2639
        %v2641 = vrcp.pop %v2631
        %v2642 = vrcp.pop %v2634
        %v2643 = vrcp.pop %v2637
        %v2644 = vrcp.pop %v2640
        %v2645 = vmul.f32 %v2622, %v2641
        %v2646 = vmul.f32 %v2624, %v2642
        %v2647 = vmul.f32 %v2626, %v2643
        %v2648 = vmul.f32 %v2628, %v2644
        %v2649 = vpack.c.bf16 %v2645, %v2645
        %v2650 = vpack.c.bf16 %v2646, %v2646
        %v2651 = vpack.c.bf16 %v2647, %v2647
        %v2652 = vpack.c.bf16 %v2648, %v2648
        %v2653 = vpack.c.bf16 %v2443, %v2443
        %v2654 = vpack.c.bf16 %v2468, %v2468
        %v2655 = vpack.c.bf16 %v2493, %v2493
        %v2656 = vpack.c.bf16 %v2518, %v2518
        %v2658 = vsel %vm1754, %v2649, 0
        %v2661 = vsel %vm1886, %v2653, 0
        %2663 = vmatpush.bf16.msra.mxu0 0
        %2664 = vmatpush.bf16.msra.mxu0 0
        %2665 = vmatpush.bf16.msra.mxu0 0
        %2666 = vmatpush.bf16.msra.mxu0 0
        %2667 = vmatpush.bf16.msra.mxu0 0
        %2668 = vmatpush.bf16.msra.mxu0 0
        %2669 = vmatpush.bf16.msra.mxu0 0
        %2670 = vmatpush.bf16.msra.mxu0 %v2661
        %2671 = vmatmul.bf16.gmra.mxu0 %v2658
        %v2672 = vpop.f32.mrf.mxu0
        %v2673 = vadd.f32 0.0, %v2672
        %v2674 = vpop.f32.mrf.mxu0
        %2675 = vdwg.mxu0
        %v2677 = vsel %vm1754, %v2650, 0
        %v2680 = vsel %vm1886, %v2654, 0
        %2682 = vmatpush.bf16.msra.mxu0 0
        %2683 = vmatpush.bf16.msra.mxu0 0
        %2684 = vmatpush.bf16.msra.mxu0 0
        %2685 = vmatpush.bf16.msra.mxu0 0
        %2686 = vmatpush.bf16.msra.mxu0 0
        %2687 = vmatpush.bf16.msra.mxu0 0
        %2688 = vmatpush.bf16.msra.mxu0 0
        %2689 = vmatpush.bf16.msra.mxu0 %v2680
        %2690 = vmatmul.bf16.gmra.mxu0 %v2677
        %v2691 = vpop.f32.mrf.mxu0
        %v2692 = vadd.f32 0.0, %v2691
        %v2693 = vpop.f32.mrf.mxu0
        %2694 = vdwg.mxu0
        %v2696 = vsel %vm1754, %v2651, 0
        %v2699 = vsel %vm1886, %v2655, 0
        %2701 = vmatpush.bf16.msra.mxu0 0
        %2702 = vmatpush.bf16.msra.mxu0 0
        %2703 = vmatpush.bf16.msra.mxu0 0
        %2704 = vmatpush.bf16.msra.mxu0 0
        %2705 = vmatpush.bf16.msra.mxu0 0
        %2706 = vmatpush.bf16.msra.mxu0 0
        %2707 = vmatpush.bf16.msra.mxu0 0
        %2708 = vmatpush.bf16.msra.mxu0 %v2699
        %2709 = vmatmul.bf16.gmra.mxu0 %v2696
        %v2710 = vpop.f32.mrf.mxu0
        %v2711 = vadd.f32 0.0, %v2710
        %v2712 = vpop.f32.mrf.mxu0
        %2713 = vdwg.mxu0
        %v2715 = vsel %vm1754, %v2652, 0
        %v2718 = vsel %vm1886, %v2656, 0
        %2720 = vmatpush.bf16.msra.mxu0 0
        %2721 = vmatpush.bf16.msra.mxu0 0
        %2722 = vmatpush.bf16.msra.mxu0 0
        %2723 = vmatpush.bf16.msra.mxu0 0
        %2724 = vmatpush.bf16.msra.mxu0 0
        %2725 = vmatpush.bf16.msra.mxu0 0
        %2726 = vmatpush.bf16.msra.mxu0 0
        %2727 = vmatpush.bf16.msra.mxu0 %v2718
        %2728 = vmatmul.bf16.gmra.mxu0 %v2715
        %v2729 = vpop.f32.mrf.mxu0
        %v2730 = vadd.f32 0.0, %v2729
        %v2731 = vpop.f32.mrf.mxu0
        %2732 = vdwg.mxu0
        %v2733 = vpack.c.bf16 %v2673, %v2673
        %v2734 = vpack.c.bf16 %v2692, %v2692
        %v2735 = vpack.c.bf16 %v2711, %v2711
        %v2736 = vpack.c.bf16 %v2730, %v2730
        %v2738 = vsel %vm1754, %v2733, 0
        %v2741 = vsel %vm1886, %v2172, 0
        %2743 = vmatpush.bf16.msra.mxu0 0
        %2744 = vmatpush.bf16.msra.mxu0 0
        %2745 = vmatpush.bf16.msra.mxu0 0
        %2746 = vmatpush.bf16.msra.mxu0 0
        %2747 = vmatpush.bf16.msra.mxu0 0
        %2748 = vmatpush.bf16.msra.mxu0 0
        %2749 = vmatpush.bf16.msra.mxu0 0
        %2750 = vmatpush.bf16.msra.mxu0 %v2741
        %2751 = vmatmul.bf16.gmra.mxu0 %v2738
        %v2752 = vpop.f32.mrf.mxu0
        %v2753 = vadd.f32 0.0, %v2752
        %v2754 = vpop.f32.mrf.mxu0
        %2755 = vdwg.mxu0
        %v2757 = vsel %vm1754, %v2734, 0
        %v2760 = vsel %vm1886, %v2173, 0
        %2762 = vmatpush.bf16.msra.mxu0 0
        %2763 = vmatpush.bf16.msra.mxu0 0
        %2764 = vmatpush.bf16.msra.mxu0 0
        %2765 = vmatpush.bf16.msra.mxu0 0
        %2766 = vmatpush.bf16.msra.mxu0 0
        %2767 = vmatpush.bf16.msra.mxu0 0
        %2768 = vmatpush.bf16.msra.mxu0 0
        %2769 = vmatpush.bf16.msra.mxu0 %v2760
        %2770 = vmatmul.bf16.gmra.mxu0 %v2757
        %v2771 = vpop.f32.mrf.mxu0
        %v2772 = vadd.f32 0.0, %v2771
        %v2773 = vpop.f32.mrf.mxu0
        %2774 = vdwg.mxu0
        %v2776 = vsel %vm1754, %v2735, 0
        %v2779 = vsel %vm1886, %v2174, 0
        %2781 = vmatpush.bf16.msra.mxu0 0
        %2782 = vmatpush.bf16.msra.mxu0 0
        %2783 = vmatpush.bf16.msra.mxu0 0
        %2784 = vmatpush.bf16.msra.mxu0 0
        %2785 = vmatpush.bf16.msra.mxu0 0
        %2786 = vmatpush.bf16.msra.mxu0 0
        %2787 = vmatpush.bf16.msra.mxu0 0
        %2788 = vmatpush.bf16.msra.mxu0 %v2779
        %2789 = vmatmul.bf16.gmra.mxu0 %v2776
        %v2790 = vpop.f32.mrf.mxu0
        %v2791 = vadd.f32 0.0, %v2790
        %v2792 = vpop.f32.mrf.mxu0
        %2793 = vdwg.mxu0
        %v2795 = vsel %vm1754, %v2736, 0
        %v2798 = vsel %vm1886, %v2175, 0
        %2800 = vmatpush.bf16.msra.mxu0 0
        %2801 = vmatpush.bf16.msra.mxu0 0
        %2802 = vmatpush.bf16.msra.mxu0 0
        %2803 = vmatpush.bf16.msra.mxu0 0
        %2804 = vmatpush.bf16.msra.mxu0 0
        %2805 = vmatpush.bf16.msra.mxu0 0
        %2806 = vmatpush.bf16.msra.mxu0 0
        %2807 = vmatpush.bf16.msra.mxu0 %v2798
        %2808 = vmatmul.bf16.gmra.mxu0 %v2795
        %v2809 = vpop.f32.mrf.mxu0
        %v2810 = vadd.f32 0.0, %v2809
        %v2811 = vpop.f32.mrf.mxu0
        %2812 = vdwg.mxu0
        %v2813 = vsel %vm1430, %v2753, 0.0
        %v2814 = vsel %vm1430, %v2772, 0.0
        %v2815 = vadd.f32 %v2813, %v2814
        %v2816 = vsel %vm1430, %v2791, 0.0
        %v2817 = vadd.f32 %v2815, %v2816
        %v2818 = vsel %vm1430, %v2810, 0.0
        %v2819 = vadd.f32 %v2817, %v2818
        %v2821 = vperm.slane %v2176, 0
        %v2823 = vadd.f32 %v2819, %v2821
        %v2824 = vadd.f32 %v2111, %v2823
        %v2825 = vld [vmem:[%s1317] sm:$0xff]
        %v2826 = vld [vmem:[%s1321] sm:$0xff]
        %v2827 = vsel %vm1430, %v2824, 0.0
        %2828 = vadd.xlane.f32.xlu0 %v2827
        %v2829 = vpop.xlane.xlu0 %2828
        %v2830 = vrot.slane %v2829, 4
        %v2831 = vadd.f32 %v2829, %v2830
        %v2832 = vrot.slane %v2831, 2
        %v2833 = vadd.f32 %v2831, %v2832
        %v2834 = vrot.slane %v2833, 1
        %v2835 = vadd.f32 %v2833, %v2834
        %s2836 = vtos %v2835
        %v2837 = vrcp.pop 256.0
        %v2838 = vmul.f32 256.0, %v2837
        %v2839 = vsub.f32 1.0, %v2838
        %v2840 = vmul.f32 %v2837, %v2839
        %v2841 = vadd.f32 %v2837, %v2840
        %vm2842 = vweird.f32 %v2837
        %v2843 = vsel %vm2842, %v2837, %v2841
        %s2844 = vtos %v2843
        %s2845 = smul.f32 %s2836, %s2844
        %v2846 = vstv %s2845
        %v2847 = vsub.f32 %v2824, %v2846
        %v2848 = vmul.f32 %v2847, %v2847
        %v2849 = vsel %vm1430, %v2848, 0.0
        %2850 = vadd.xlane.f32.xlu0 %v2849
        %v2851 = vpop.xlane.xlu0 %2850
        %v2852 = vrot.slane %v2851, 4
        %v2853 = vadd.f32 %v2851, %v2852
        %v2854 = vrot.slane %v2853, 2
        %v2855 = vadd.f32 %v2853, %v2854
        %v2856 = vrot.slane %v2855, 1
        %v2857 = vadd.f32 %v2855, %v2856
        %s2858 = vtos %v2857
        %v2859 = vrcp.pop 256.0
        %v2860 = vmul.f32 256.0, %v2859
        %v2861 = vsub.f32 1.0, %v2860
        %v2862 = vmul.f32 %v2859, %v2861
        %v2863 = vadd.f32 %v2859, %v2862
        %vm2864 = vweird.f32 %v2859
        %v2865 = vsel %vm2864, %v2859, %v2863
        %s2866 = vtos %v2865
        %s2867 = smul.f32 %s2858, %s2866
        %s2868 = sadd.f32 %s2867, 1e-06
        %v2869 = vstv %s2868
        %v2870 = vrsqrt.pop %v2869
        %v2871 = vmul.f32 %v2870, %v2869
        %v2872 = vmul.f32 %v2871, %v2870
        %v2873 = vmul.f32 0.5, %v2872
        %v2874 = vsub.f32 1.5, %v2873
        %v2875 = vmul.f32 %v2870, %v2874
        %vm2876 = vweird.f32 %v2869
        %vm2877 = vweird.f32 %v2870
        %vm2878 = vmor %vm2876, %vm2877
        %v2879 = vsel %vm2878, %v2870, %v2875
        %s2880 = vtos %v2879
        %v2881 = vstv %s2880
        %v2882 = vmul.f32 %v2847, %v2881
        %v2883 = vmul.f32 %v2882, %v2825
        %v2884 = vadd.f32 %v2883, %v2826
        %v2885 = vpack.c.bf16 %v2884, %v2884
        %v2886 = vld [vmem:[%s1294] sm:$0xf]
        %v2887 = vld [vmem:[%s1294 + $0x4] sm:$0xf]
        %v2888 = vld [vmem:[%s1294 + $0x8] sm:$0xf]
        %v2889 = vld [vmem:[%s1294 + $0xc] sm:$0xf]
        %v2890 = vld [vmem:[%s1297] sm:$0x1]
        %v2892 = vperm.slane %v2890, 0
        %v2898 = vunpack.c.l.b16 %v2886
        %v2899 = vunpack.c.l.b16 %v2887
        %v2900 = vunpack.c.l.b16 %v2888
        %v2901 = vunpack.c.l.b16 %v2889
        %v2902 = vpack.c.b16 %v2899, %v2898
        %v2903 = vpack.c.b16 %v2901, %v2900
        %v2907 = vsel %vm1430, %v2885, 0
        %2909 = vmatpush.bf16.msra.mxu0 0
        %2910 = vmatpush.bf16.msra.mxu0 0
        %2911 = vmatpush.bf16.msra.mxu0 0
        %2912 = vmatpush.bf16.msra.mxu0 0
        %2913 = vmatpush.bf16.msra.mxu0 0
        %2914 = vmatpush.bf16.msra.mxu0 0
        %2915 = vmatpush.bf16.msra.mxu0 %v2903
        %2916 = vmatpush.bf16.msra.mxu0 %v2902
        %2917 = vmatmul.bf16.gmra.mxu0 %v2907
        %v2918 = vpop.f32.mrf.mxu0
        %v2919 = vadd.f32 %v2892, %v2918
        %v2920 = vpop.f32.mrf.mxu0
        %2921 = vdwg.mxu0
        %v2922 = vmax.f32 %v2919, 0.0
        %v2923 = vpack.c.bf16 %v2922, %v2922
        %v2924 = vld [vmem:[%s1302] sm:$0xf]
        %v2925 = vld [vmem:[%s1302 + $0x4] sm:$0xf]
        %v2926 = vld [vmem:[%s1302 + $0x8] sm:$0xf]
        %v2927 = vld [vmem:[%s1302 + $0xc] sm:$0xf]
        %v2928 = vld [vmem:[%s1302 + $0x10] sm:$0xf]
        %v2929 = vld [vmem:[%s1302 + $0x14] sm:$0xf]
        %v2930 = vld [vmem:[%s1302 + $0x18] sm:$0xf]
        %v2931 = vld [vmem:[%s1302 + $0x1c] sm:$0xf]
        %v2932 = vld [vmem:[%s1305] sm:$0x1]
        %v2934 = vperm.slane %v2932, 0
        %v2944 = vunpack.c.l.b16 %v2924
        %v2945 = vunpack.c.l.b16 %v2925
        %v2946 = vunpack.c.l.b16 %v2926
        %v2947 = vunpack.c.l.b16 %v2927
        %v2948 = vunpack.c.l.b16 %v2928
        %v2949 = vunpack.c.l.b16 %v2929
        %v2950 = vunpack.c.l.b16 %v2930
        %v2951 = vunpack.c.l.b16 %v2931
        %v2952 = vpack.c.b16 %v2945, %v2944
        %v2953 = vpack.c.b16 %v2947, %v2946
        %v2954 = vpack.c.b16 %v2949, %v2948
        %v2955 = vpack.c.b16 %v2951, %v2950
        %vm2960 = vcmask 523264
        %v2962 = vsel %vm2960, %v2923, 0
        %2964 = vmatpush.bf16.msra.mxu0 0
        %2965 = vmatpush.bf16.msra.mxu0 0
        %2966 = vmatpush.bf16.msra.mxu0 0
        %2967 = vmatpush.bf16.msra.mxu0 0
        %2968 = vmatpush.bf16.msra.mxu0 %v2955
        %2969 = vmatpush.bf16.msra.mxu0 %v2954
        %2970 = vmatpush.bf16.msra.mxu0 %v2953
        %2971 = vmatpush.bf16.msra.mxu0 %v2952
        %2972 = vmatmul.bf16.gmra.mxu0 %v2962
        %v2973 = vpop.f32.mrf.mxu0
        %v2974 = vadd.f32 %v2934, %v2973
        %v2975 = vpop.f32.mrf.mxu0
        %2976 = vdwg.mxu0
        %v2977 = vadd.f32 %v2884, %v2974
        %v2978 = vld [vmem:[%s1325] sm:$0xff]
        %v2979 = vld [vmem:[%s1329] sm:$0xff]
        %v2980 = vsel %vm1430, %v2977, 0.0
        %2981 = vadd.xlane.f32.xlu0 %v2980
        %v2982 = vpop.xlane.xlu0 %2981
        %v2983 = vrot.slane %v2982, 4
        %v2984 = vadd.f32 %v2982, %v2983
        %v2985 = vrot.slane %v2984, 2
        %v2986 = vadd.f32 %v2984, %v2985
        %v2987 = vrot.slane %v2986, 1
        %v2988 = vadd.f32 %v2986, %v2987
        %s2989 = vtos %v2988
        %v2990 = vrcp.pop 256.0
        %v2991 = vmul.f32 256.0, %v2990
        %v2992 = vsub.f32 1.0, %v2991
        %v2993 = vmul.f32 %v2990, %v2992
        %v2994 = vadd.f32 %v2990, %v2993
        %vm2995 = vweird.f32 %v2990
        %v2996 = vsel %vm2995, %v2990, %v2994
        %s2997 = vtos %v2996
        %s2998 = smul.f32 %s2989, %s2997
        %v2999 = vstv %s2998
        %v3000 = vsub.f32 %v2977, %v2999
        %v3001 = vmul.f32 %v3000, %v3000
        %v3002 = vsel %vm1430, %v3001, 0.0
        %3003 = vadd.xlane.f32.xlu0 %v3002
        %v3004 = vpop.xlane.xlu0 %3003
        %v3005 = vrot.slane %v3004, 4
        %v3006 = vadd.f32 %v3004, %v3005
        %v3007 = vrot.slane %v3006, 2
        %v3008 = vadd.f32 %v3006, %v3007
        %v3009 = vrot.slane %v3008, 1
        %v3010 = vadd.f32 %v3008, %v3009
        %s3011 = vtos %v3010
        %v3012 = vrcp.pop 256.0
        %v3013 = vmul.f32 256.0, %v3012
        %v3014 = vsub.f32 1.0, %v3013
        %v3015 = vmul.f32 %v3012, %v3014
        %v3016 = vadd.f32 %v3012, %v3015
        %vm3017 = vweird.f32 %v3012
        %v3018 = vsel %vm3017, %v3012, %v3016
        %s3019 = vtos %v3018
        %s3020 = smul.f32 %s3011, %s3019
        %s3021 = sadd.f32 %s3020, 1e-06
        %v3022 = vstv %s3021
        %v3023 = vrsqrt.pop %v3022
        %v3024 = vmul.f32 %v3023, %v3022
        %v3025 = vmul.f32 %v3024, %v3023
        %v3026 = vmul.f32 0.5, %v3025
        %v3027 = vsub.f32 1.5, %v3026
        %v3028 = vmul.f32 %v3023, %v3027
        %vm3029 = vweird.f32 %v3022
        %vm3030 = vweird.f32 %v3023
        %vm3031 = vmor %vm3029, %vm3030
        %v3032 = vsel %vm3031, %v3023, %v3028
        %s3033 = vtos %v3032
        %v3034 = vstv %s3033
        %v3035 = vmul.f32 %v3000, %v3034
        %v3036 = vmul.f32 %v3035, %v2978
        %v3037 = vadd.f32 %v3036, %v2979
        %3038 = vst.msk [vmem:[%s1211] sm:$0xff] %vm1430, %v3037
        %s3039 = sand.u32 %s790, 1
        %s3040 = scalar_lea.sflag [#allocation3], %s3039
        %s3041 = sand.u32 %s790, 1
        %s3042 = smul.addr %s3041, 8
        %s3043 = scalar_lea.vmem [#allocation2], %s3042
        // Predicated region
        $region137: #{tpu_custom_call.1} parent=131 // pred_check
          %p3044 = pneg %p800
        $region138: #{tpu_custom_call.1} parent=131 // pred_check_branch
          %3046 = sbr.rel (%p3044) target = $region140
        $region139: #{tpu_custom_call.1} parent=131 // pred_region
          %3048 = vsyncadd %s3040, 0
          %s3049 = smul.addr %s46, 8
          %s3050 = scalar_lea.hbm %s28, %s3049
          %s3052 = sshll.u32 %s3043, 4
          %s3053 = int_to_ptr.vmem [resolvable:$true] %s3052
          %s3054 = sshll.u32 %s3050, 4
          %s3055 = int_to_ptr.hbm [resolvable:$true] %s3054
          %3057 = dma.vmem_to_hbm [thread:$0]  %s3053, 128, %s3055, %s3040
        $region140: #{tpu_custom_call.1} parent=131 // pred_fallthru
          _
      $region132: #{tpu_custom_call.1} parent=5 // pred_fallthru
        _
      %p3058 = scmp.le.s32.totalorder 2, %s37
      // Predicated region
      $region141: #{tpu_custom_call.1} parent=5 // pred_check
        %p3059 = pneg %p3058
      $region142: #{tpu_custom_call.1} parent=5 // pred_check_branch
        %3061 = sbr.rel (%p3059) target = $region144
      $region143: #{tpu_custom_call.1} parent=5 // pred_region
        %s3062 = ssub.s32 %s37, 2
        // Predicated region
        $region145: #{tpu_custom_call.1} parent=143 // pred_check
          %p3063 = pneg %p806
        $region146: #{tpu_custom_call.1} parent=143 // pred_check_branch
          %3065 = sbr.rel (%p3063) target = $region148
        $region147: #{tpu_custom_call.1} parent=143 // pred_region
          %s3066 = sand.u32 %s791, 1
          %s3067 = scalar_lea.sflag [#allocation3], %s3066
          %s3068 = sand.u32 %s791, 1
          %s3069 = smul.addr %s3068, 8
          %s3070 = scalar_lea.vmem [#allocation2], %s3069
          %3072 = dma.done %s3067, 128
        $region148: #{tpu_custom_call.1} parent=143 // pred_fallthru
          _
      $region144: #{tpu_custom_call.1} parent=5 // pred_fallthru
        _
    $region6: #{tpu_custom_call.1} parent=1 // loop_footer
      %s41 = sadd.s32 1, %s37
    $region7: #{tpu_custom_call.1} parent=1 // loop_footer_branch
      %36 = sbr.rel target = $region3
    $region8: #{tpu_custom_call.1} parent=1 // loop_exit
      _
    %3073 = vsyncpa [#allocation3], 1
    %s3074 = scalar_lea.sflag [#allocation3], 1
    %3075 = vsyncpa %s3074, 1

</llo_original>
